<compile_context>
chip_gen: v6e
topology: v6e:2x2x1
jax: 0.10.0
libtpu: 0.0.40
codegen_flags: <defaults>
</compile_context>

<pallas_src>
import math

import jax
import jax.numpy as jnp
from jax.experimental import pallas as pl
from jax.experimental.pallas import tpu as pltpu

TRAN_DIM = 768                      # fixed by the module (tran_dim = 768)
_INV_SQRT2 = 1.0 / math.sqrt(2.0)


def _fused_head_kernel(x_ref, w1_ref, b1_ref, w2_ref, b2_ref, o_ref):
    """One (head, token-tile) grid step: Linear -> exact GELU -> Linear."""
    # x arrives f32 from HBM; one cheap VPU cast to bf16 feeds the MXU.
    x = x_ref[...].astype(jnp.bfloat16)                    # (tm, 2D) bf16
    b1 = b1_ref[...]                                       # (1, D) f32
    b2 = b2_ref[...]                                       # (1, D) f32

    # First linear: bf16 x bf16 MXU matmul, f32 accumulation.
    h = jnp.dot(x, w1_ref[...], preferred_element_type=jnp.float32) + b1

    # ActivateFun('gelu'): x * 0.5 * (1 + erf(x / sqrt(2)))  — exact erf form,
    # matching the PyTorch reference (EUP handles erf; VPU does the rest).
    h = h * 0.5 * (1.0 + jax.lax.erf(h * _INV_SQRT2))

    # Second linear.
    y = jnp.dot(h.astype(jnp.bfloat16), w2_ref[...],
                preferred_element_type=jnp.float32) + b2

    o_ref[...] = y.astype(o_ref.dtype)


def fused_linear_change(x, w1, b1, w2, b2, *, tm=256,
                        vmem_limit_bytes=48 << 20):
    """Run both projection heads in a single Pallas call.

    x  : (M, 2*D) float32
    w1 : (H, 2*D, D) bfloat16,  b1 : (H, 1, D) float32
    w2 : (H, D, D)   bfloat16,  b2 : (H, 1, D) float32
    returns (H, M, D) float32
    """
    M, twoD = x.shape
    D = twoD // 2
    H = w1.shape[0]

    # Adaptive token tile: minimal sublane padding for small batches, big
    # MXU-filling tiles for large ones.
    Mp = ((M + 7) // 8) * 8
    if Mp <= tm:
        tm = Mp
    else:
        Mp = ((M + tm - 1) // tm) * tm
    if Mp != M:
        x = jnp.pad(x, ((0, Mp - M), (0, 0)))

    grid = (H, Mp // tm)   # head axis outer -> per-head weights DMA'd once per
                           # head; the parallel head axis maps onto 2 TCs (v7x).

    out = pl.pallas_call(
        _fused_head_kernel,
        out_shape=jax.ShapeDtypeStruct((H, Mp, D), jnp.float32),
        grid_spec=pltpu.PrefetchScalarGridSpec(
            num_scalar_prefetch=0,
            grid=grid,
            in_specs=[
                # x tile: shared across heads, streamed over token tiles.
                pl.BlockSpec((tm, twoD), lambda h, i: (i, 0)),
                # Per-head weights/biases (head dim squeezed out in-kernel).
                pl.BlockSpec((None, twoD, D), lambda h, i: (h, 0, 0)),
                pl.BlockSpec((None, 1, D), lambda h, i: (h, 0, 0)),
                pl.BlockSpec((None, D, D), lambda h, i: (h, 0, 0)),
                pl.BlockSpec((None, 1, D), lambda h, i: (h, 0, 0)),
            ],
            out_specs=pl.BlockSpec((None, tm, D), lambda h, i: (h, i, 0)),
        ),
        compiler_params=pltpu.CompilerParams(
            dimension_semantics=("parallel", "parallel"),
            vmem_limit_bytes=vmem_limit_bytes,
        ),
    )(x, w1, b1, w2, b2)

    return out[:, :M, :]


class FuseModelPallas:
    """JAX/Pallas port of the defined parts of FuseModel.

    Holds deterministic synthetic parameters for orgin_linear_change and
    augment_linear_change and evaluates both heads with one fused Pallas call.
    """

    def __init__(self, key):
        self.temperature = 0.07
        D = TRAN_DIM
        ks = jax.random.split(key, 8)

        def init_linear(kw, kb, fan_in, fan_out):
            # PyTorch nn.Linear default init: U(-1/sqrt(fan_in), 1/sqrt(fan_in))
            bound = 1.0 / math.sqrt(fan_in)
            w = jax.random.uniform(kw, (fan_in, fan_out), jnp.float32,
                                   -bound, bound)
            b = jax.random.uniform(kb, (1, fan_out), jnp.float32,
                                   -bound, bound)
            return w, b

        # Head 0: orgin_linear_change, Head 1: augment_linear_change.
        o_w1, o_b1 = init_linear(ks[0], ks[1], 2 * D, D)
        o_w2, o_b2 = init_linear(ks[2], ks[3], D, D)
        a_w1, a_b1 = init_linear(ks[4], ks[5], 2 * D, D)
        a_w2, a_b2 = init_linear(ks[6], ks[7], D, D)

        # Weights in bf16 (MXU-native, halves HBM/VMEM traffic); biases f32.
        self.w1 = jnp.stack([o_w1, a_w1]).astype(jnp.bfloat16)   # (2, 2D, D)
        self.b1 = jnp.stack([o_b1, a_b1])                        # (2, 1, D)
        self.w2 = jnp.stack([o_w2, a_w2]).astype(jnp.bfloat16)   # (2, D, D)
        self.b2 = jnp.stack([o_b2, a_b2])                        # (2, 1, D)

        # TODO(synk): MMI_Model(self.config_mmi, ...) — the backbone producing
        # emotion_logits in forward() (BertConfig, wav2vec2 CTC head, etc.) is
        # an external undefined dependency and cannot be translated.

    def linear_changes(self, x):
        """Returns (orgin_linear_change(x), augment_linear_change(x)) from one
        fused Pallas call."""
        both = fused_linear_change(x, self.w1, self.b1, self.w2, self.b2)
        return both[0], both[1]

    # Individual accessors (each still runs the fused kernel; prefer
    # linear_changes() when both outputs are needed).
    def orgin_linear_change(self, x):
        return self.linear_changes(x)[0]

    def augment_linear_change(self, x):
        return self.linear_changes(x)[1]


def _reference_linear_change(x, w1, b1, w2, b2):
    w1 = w1.astype(jnp.float32)
    w2 = w2.astype(jnp.float32)
    h = x @ w1 + b1
    h = h * 0.5 * (1.0 + jax.lax.erf(h / math.sqrt(2.0)))
    return h @ w2 + b2


if __name__ == "__main__":
    key = jax.random.PRNGKey(0)
    k_model, k_x = jax.random.split(key)

    model = FuseModelPallas(k_model)

    # Fused (text || audio) representation: batch of 8 pooled feature vectors,
    # each of size 2 * tran_dim = 1536 (concatenated modalities).
    batch = 8
    x = jax.random.normal(k_x, (batch, 2 * TRAN_DIM), jnp.float32)

    out_origin, out_augment = model.linear_changes(x)
    jax.block_until_ready((out_origin, out_augment))

    # Sanity-check against a pure-JAX reference (same bf16 weights, f32 math).
    ref_o = _reference_linear_change(x, model.w1[0], model.b1[0],
                                     model.w2[0], model.b2[0])
    ref_a = _reference_linear_change(x, model.w1[1], model.b1[1],
                                     model.w2[1], model.b2[1])

    assert out_origin.shape == (batch, TRAN_DIM)
    assert out_augment.shape == (batch, TRAN_DIM)
    assert jnp.allclose(out_origin, ref_o, atol=1e-2, rtol=1e-2), \
        float(jnp.max(jnp.abs(out_origin - ref_o)))
    assert jnp.allclose(out_augment, ref_a, atol=1e-2, rtol=1e-2), \
        float(jnp.max(jnp.abs(out_augment - ref_a)))

    print("KERNEL_OK")
</pallas_src>

<mosaic_0001>
module attributes {stable_mosaic.version = 11 : i64} {
  func.func @_fused_head_kernel(%arg0: i32, %arg1: i32, %arg2: memref<8x1536xf32, #tpu.memory_space<vmem>>, %arg3: memref<1x1536x768xbf16, #tpu.memory_space<vmem>>, %arg4: memref<1x1x768xf32, #tpu.memory_space<vmem>>, %arg5: memref<1x768x768xbf16, #tpu.memory_space<vmem>>, %arg6: memref<1x1x768xf32, #tpu.memory_space<vmem>>, %arg7: memref<1x8x768xf32, #tpu.memory_space<vmem>>) attributes {dimension_semantics = [#tpu.dimension_semantics<parallel>, #tpu.dimension_semantics<parallel>], iteration_bounds = array<i64: 2, 1>, scalar_prefetch = 0 : i64, scratch_operands = 0 : i64, tpu.core_type = #tpu.core_type<tc>, window_params = [{transform_indices = @transform_0, window_bounds = array<i64: 8, 1536>}, {transform_indices = @transform_1, window_bounds = array<i64: 1, 1536, 768>}, {transform_indices = @transform_2, window_bounds = array<i64: 1, 1, 768>}, {transform_indices = @transform_3, window_bounds = array<i64: 1, 768, 768>}, {transform_indices = @transform_4, window_bounds = array<i64: 1, 1, 768>}, {transform_indices = @transform_5, window_bounds = array<i64: 1, 8, 768>}]} {
    %c0 = arith.constant 0 : index
    %c0_0 = arith.constant 0 : index
    %0 = vector.load %arg2[%c0, %c0_0] : memref<8x1536xf32, #tpu.memory_space<vmem>>, vector<8x1536xf32>
    %1 = arith.truncf %0 : vector<8x1536xf32> to vector<8x1536xbf16>
    %c0_1 = arith.constant 0 : index
    %c0_2 = arith.constant 0 : index
    %c0_3 = arith.constant 0 : index
    %2 = vector.load %arg4[%c0_1, %c0_2, %c0_3] : memref<1x1x768xf32, #tpu.memory_space<vmem>>, vector<1x1x768xf32>
    %3 = vector.shape_cast %2 : vector<1x1x768xf32> to vector<1x768xf32>
    %c0_4 = arith.constant 0 : index
    %c0_5 = arith.constant 0 : index
    %c0_6 = arith.constant 0 : index
    %4 = vector.load %arg6[%c0_4, %c0_5, %c0_6] : memref<1x1x768xf32, #tpu.memory_space<vmem>>, vector<1x1x768xf32>
    %5 = vector.shape_cast %4 : vector<1x1x768xf32> to vector<1x768xf32>
    %c0_7 = arith.constant 0 : index
    %c0_8 = arith.constant 0 : index
    %c0_9 = arith.constant 0 : index
    %6 = vector.load %arg3[%c0_7, %c0_8, %c0_9] : memref<1x1536x768xbf16, #tpu.memory_space<vmem>>, vector<1x1536x768xbf16>
    %7 = vector.shape_cast %6 : vector<1x1536x768xbf16> to vector<1536x768xbf16>
    %cst = arith.constant dense<0.000000e+00> : vector<8x768xf32>
    %8 = tpu.matmul %1, %7, %cst {dimension_numbers = #tpu.dot_dimension_numbers<[1], [0], [0], [1], [0, 0, 1, 1], [], []>} : vector<8x1536xbf16>, vector<1536x768xbf16>, vector<8x768xf32> -> vector<8x768xf32>
    %9 = vector.broadcast %3 : vector<1x768xf32> to vector<8x768xf32>
    %10 = arith.addf %8, %9 : vector<8x768xf32>
    %cst_10 = arith.constant 5.000000e-01 : f32
    %11 = vector.broadcast %cst_10 : f32 to vector<8x768xf32>
    %12 = arith.mulf %10, %11 : vector<8x768xf32>
    %cst_11 = arith.constant 0.707106769 : f32
    %13 = vector.broadcast %cst_11 : f32 to vector<8x768xf32>
    %14 = arith.mulf %10, %13 : vector<8x768xf32>
    %15 = math.erf %14 : vector<8x768xf32>
    %cst_12 = arith.constant 1.000000e+00 : f32
    %16 = vector.broadcast %cst_12 : f32 to vector<8x768xf32>
    %17 = arith.addf %16, %15 : vector<8x768xf32>
    %18 = arith.mulf %12, %17 : vector<8x768xf32>
    %19 = arith.truncf %18 : vector<8x768xf32> to vector<8x768xbf16>
    %c0_13 = arith.constant 0 : index
    %c0_14 = arith.constant 0 : index
    %c0_15 = arith.constant 0 : index
    %20 = vector.load %arg5[%c0_13, %c0_14, %c0_15] : memref<1x768x768xbf16, #tpu.memory_space<vmem>>, vector<1x768x768xbf16>
    %21 = vector.shape_cast %20 : vector<1x768x768xbf16> to vector<768x768xbf16>
    %cst_16 = arith.constant dense<0.000000e+00> : vector<8x768xf32>
    %22 = tpu.matmul %19, %21, %cst_16 {dimension_numbers = #tpu.dot_dimension_numbers<[1], [0], [0], [1], [0, 0, 1, 1], [], []>} : vector<8x768xbf16>, vector<768x768xbf16>, vector<8x768xf32> -> vector<8x768xf32>
    %23 = vector.broadcast %5 : vector<1x768xf32> to vector<8x768xf32>
    %24 = arith.addf %22, %23 : vector<8x768xf32>
    %c0_17 = arith.constant 0 : index
    %c0_18 = arith.constant 0 : index
    %c0_19 = arith.constant 0 : index
    %25 = vector.load %arg7[%c0_17, %c0_18, %c0_19] : memref<1x8x768xf32, #tpu.memory_space<vmem>>, vector<1x8x768xf32>
    %26 = vector.shape_cast %25 : vector<1x8x768xf32> to vector<8x768xf32>
    %27 = vector.shape_cast %24 : vector<8x768xf32> to vector<1x8x768xf32>
    tpu.vector_store %arg7[%c0_17, %c0_18, %c0_19], %27 {strides = array<i32>} : memref<1x8x768xf32, #tpu.memory_space<vmem>>, vector<1x8x768xf32>,
    return
  }
  func.func @transform_0(%arg0: i32, %arg1: i32) -> (i32, i32) {
    %c0_i32 = arith.constant 0 : i32
    %c0_i32_0 = arith.constant 0 : i32
    return %arg1, %c0_i32 : i32, i32
  }
  func.func @transform_1(%arg0: i32, %arg1: i32) -> (i32, i32, i32) {
    %c0_i32 = arith.constant 0 : i32
    %c0_i32_0 = arith.constant 0 : i32
    %c0_i32_1 = arith.constant 0 : i32
    return %arg0, %c0_i32, %c0_i32_0 : i32, i32, i32
  }
  func.func @transform_2(%arg0: i32, %arg1: i32) -> (i32, i32, i32) {
    %c0_i32 = arith.constant 0 : i32
    %c0_i32_0 = arith.constant 0 : i32
    %c0_i32_1 = arith.constant 0 : i32
    return %arg0, %c0_i32, %c0_i32_0 : i32, i32, i32
  }
  func.func @transform_3(%arg0: i32, %arg1: i32) -> (i32, i32, i32) {
    %c0_i32 = arith.constant 0 : i32
    %c0_i32_0 = arith.constant 0 : i32
    %c0_i32_1 = arith.constant 0 : i32
    return %arg0, %c0_i32, %c0_i32_0 : i32, i32, i32
  }
  func.func @transform_4(%arg0: i32, %arg1: i32) -> (i32, i32, i32) {
    %c0_i32 = arith.constant 0 : i32
    %c0_i32_0 = arith.constant 0 : i32
    %c0_i32_1 = arith.constant 0 : i32
    return %arg0, %c0_i32, %c0_i32_0 : i32, i32, i32
  }
  func.func @transform_5(%arg0: i32, %arg1: i32) -> (i32, i32, i32) {
    %c0_i32 = arith.constant 0 : i32
    %c0_i32_0 = arith.constant 0 : i32
    return %arg0, %arg1, %c0_i32 : i32, i32, i32
  }
}

</mosaic_0001>

<llo_original>
// kernel: tpu_custom_call.1
$region0: #{tpu_custom_call.1}
  #allocation0 [shape = 'u32[]', space=smem, size = 0x4, offset = 0x4, fixed_abs, tag = 'smem constant byte address 0x4 - core index']
  #allocation1 [shape = 'u32[144,128]{1,0:T(1,128)}', space=vmem, size = 0x12000, scoped, tag = 'internal scratch']
  %s0 = inlined_call_operand.hbm [shape: f32[8,1536], index: 0, kind: input, shape index: {}]
  %s1 = inlined_call_operand.hbm [shape: bf16[2,1536,768], index: 1, kind: input, shape index: {}]
  %s2 = inlined_call_operand.hbm [shape: f32[2,1,768], index: 2, kind: input, shape index: {}]
  %s3 = inlined_call_operand.hbm [shape: bf16[2,768,768], index: 3, kind: input, shape index: {}]
  %s4 = inlined_call_operand.hbm [shape: f32[2,1,768], index: 4, kind: input, shape index: {}]
  %s5 = inlined_call_operand.hbm [shape: f32[2,8,768], index: 5, kind: output, shape index: {}]
  %s6 = sld [smem:[#allocation0]]
  $region73: #{tpu_custom_call.1} parent=0
    _
  %s8 = ssub.s32 1, %s6
  %s9 = scalar_select 0, %s8, %s6
  $region1: #{tpu_custom_call.1} parent=0
    #allocation2 [shape = 'u8[49152]{0}', space=vmem, size = 0xc000, scoped, tag = 'input window, operand 0, single buffered']
    #allocation3 [shape = 's32[2]{0}', space=sflag, size = 0x8, scoped, tag = 'scoped memory for tpu_custom_call.1']
    #allocation4 [shape = 's32[2]{0}', space=sflag, size = 0x8, scoped, tag = 'scoped memory for tpu_custom_call.1']
    #allocation5 [shape = 'u8[4718592]{0}', space=vmem, size = 0x480000, scoped, tag = 'input window, operand 1']
    #allocation6 [shape = 's32[2]{0}', space=sflag, size = 0x8, scoped, tag = 'scoped memory for tpu_custom_call.1']
    #allocation7 [shape = 'u8[6144]{0}', space=vmem, size = 0x1800, scoped, tag = 'input window, operand 2']
    #allocation8 [shape = 'u8[2359296]{0}', space=vmem, size = 0x240000, scoped, tag = 'input window, operand 3']
    #allocation9 [shape = 's32[2]{0}', space=sflag, size = 0x8, scoped, tag = 'scoped memory for tpu_custom_call.1']
    #allocation10 [shape = 'u8[6144]{0}', space=vmem, size = 0x1800, scoped, tag = 'input window, operand 4']
    #allocation11 [shape = 'u8[49152]{0}', space=vmem, size = 0xc000, scoped, tag = 'output window, operand 0']
    %10 = vsyncpa [#allocation3], 0
    %11 = vsyncpa [#allocation6], 0
    %s12 = scalar_lea.sflag [#allocation6], 1
    %13 = vsyncpa %s12, 0
    %14 = vsyncpa [#allocation9], 0
    %s15 = scalar_lea.sflag [#allocation9], 1
    %16 = vsyncpa %s15, 0
    %17 = vsyncpa [#allocation4], 0
    %s18 = scalar_lea.sflag [#allocation4], 1
    %19 = vsyncpa %s18, 0
    loop: start=0, step=1, limit=4
    $region2: #{tpu_custom_call.1} parent=1 // loop_pre_header
      _
    $region3: #{tpu_custom_call.1} parent=1 // loop_header
      %s21 = sphi 0, %s25
      %p22 = scmp.ge.s32.totalorder %s21, 4
      %s28 = sphi 0, %s40
      %s29 = sphi 0, %s36
      %s30 = sphi 0, %s28
      %s31 = sphi 0, %s29
      %s32 = sphi 0, %s30
      %s33 = sphi 0, %s31
      %s43 = sphi 0, %s45
      %s46 = sphi 0, %s43
      %s47 = sphi 0, %s46
      %s63 = sphi 0, %s47
      %s69 = sphi 0, %s71
      %s72 = sphi 0, %s69
      %s73 = sphi 0, %s72
      %s89 = sphi 0, %s73
      %s95 = sphi 0, %s97
      %s98 = sphi 0, %s95
      %s99 = sphi 0, %s98
      %s115 = sphi 0, %s99
      %s121 = sphi 0, %s123
      %s124 = sphi 0, %s121
      %s125 = sphi 0, %s124
      %s141 = sphi 0, %s125
      %s147 = sphi 0, %s149
      %s150 = sphi 0, %s147
      %s151 = sphi 0, %s150
      %s167 = sphi 0, %s151
      %s175 = sphi 0, %s177
      %s178 = sphi 0, %s175
      %s179 = sphi 0, %s178
      %s195 = sphi 0, %s179
    $region4: #{tpu_custom_call.1} parent=1 // loop_header_branch
      %24 = sbr.rel (%p22) target = $region8
    $region5: #{tpu_custom_call.1} parent=1 // loop_body
      %s26 = ssub.s32 %s21, 1
      %s27 = ssub.s32 %s21, 2
      %s34 = sadd.s32 1, %s29
      %p35 = scmp.ge.s32.totalorder %s34, 1
      %s36 = scalar_select %p35, 0, %s34
      %s37 = sadd.s32 1, %s28
      %s38 = scalar_select %p35, %s37, %s28
      %p39 = scmp.ge.s32.totalorder %s38, 2
      %s40 = scalar_select %p39, 0, %s38
      %s41 = ssub.s32 %s29, %s36
      %p42 = scmp.eq.s32.totalorder %s41, 0
      %s44 = sadd.s32 %s43, 1
      %s45 = scalar_select %p42, %s43, %s44
      %p48 = pneg %p42
      %p49 = scmp.eq.s32.totalorder %s21, 1
      %p50 = por %p48, %p49
      %p51 = scmp.ne.s32.totalorder %s43, %s46
      %p52 = scmp.eq.s32.totalorder %s21, 0
      %p53 = por %p51, %p52
      %p54 = scmp.ne.s32.totalorder %s43, %s46
      %p55 = scmp.eq.s32.totalorder %s26, 1
      %p56 = por %p54, %p55
      %p57 = scmp.ne.s32.totalorder %s46, %s47
      %p58 = scmp.eq.s32.totalorder %s26, 0
      %p59 = por %p57, %p58
      %p60 = scmp.ne.s32.totalorder %s46, %s47
      %p61 = scmp.eq.s32.totalorder %s27, 1
      %p62 = por %p60, %p61
      %p64 = scmp.ne.s32.totalorder %s47, %s63
      %p65 = scmp.eq.s32.totalorder %s27, 0
      %p66 = por %p64, %p65
      %s67 = ssub.s32 %s28, %s40
      %p68 = scmp.eq.s32.totalorder %s67, 0
      %s70 = sadd.s32 %s69, 1
      %s71 = scalar_select %p68, %s69, %s70
      %p74 = pneg %p68
      %p75 = scmp.eq.s32.totalorder %s21, 1
      %p76 = por %p74, %p75
      %p77 = scmp.ne.s32.totalorder %s69, %s72
      %p78 = scmp.eq.s32.totalorder %s21, 0
      %p79 = por %p77, %p78
      %p80 = scmp.ne.s32.totalorder %s69, %s72
      %p81 = scmp.eq.s32.totalorder %s26, 1
      %p82 = por %p80, %p81
      %p83 = scmp.ne.s32.totalorder %s72, %s73
      %p84 = scmp.eq.s32.totalorder %s26, 0
      %p85 = por %p83, %p84
      %p86 = scmp.ne.s32.totalorder %s72, %s73
      %p87 = scmp.eq.s32.totalorder %s27, 1
      %p88 = por %p86, %p87
      %p90 = scmp.ne.s32.totalorder %s73, %s89
      %p91 = scmp.eq.s32.totalorder %s27, 0
      %p92 = por %p90, %p91
      %s93 = ssub.s32 %s28, %s40
      %p94 = scmp.eq.s32.totalorder %s93, 0
      %s96 = sadd.s32 %s95, 1
      %s97 = scalar_select %p94, %s95, %s96
      %p100 = pneg %p94
      %p101 = scmp.eq.s32.totalorder %s21, 1
      %p102 = por %p100, %p101
      %p103 = scmp.ne.s32.totalorder %s95, %s98
      %p104 = scmp.eq.s32.totalorder %s21, 0
      %p105 = por %p103, %p104
      %p106 = scmp.ne.s32.totalorder %s95, %s98
      %p107 = scmp.eq.s32.totalorder %s26, 1
      %p108 = por %p106, %p107
      %p109 = scmp.ne.s32.totalorder %s98, %s99
      %p110 = scmp.eq.s32.totalorder %s26, 0
      %p111 = por %p109, %p110
      %p112 = scmp.ne.s32.totalorder %s98, %s99
      %p113 = scmp.eq.s32.totalorder %s27, 1
      %p114 = por %p112, %p113
      %p116 = scmp.ne.s32.totalorder %s99, %s115
      %p117 = scmp.eq.s32.totalorder %s27, 0
      %p118 = por %p116, %p117
      %s119 = ssub.s32 %s28, %s40
      %p120 = scmp.eq.s32.totalorder %s119, 0
      %s122 = sadd.s32 %s121, 1
      %s123 = scalar_select %p120, %s121, %s122
      %p126 = pneg %p120
      %p127 = scmp.eq.s32.totalorder %s21, 1
      %p128 = por %p126, %p127
      %p129 = scmp.ne.s32.totalorder %s121, %s124
      %p130 = scmp.eq.s32.totalorder %s21, 0
      %p131 = por %p129, %p130
      %p132 = scmp.ne.s32.totalorder %s121, %s124
      %p133 = scmp.eq.s32.totalorder %s26, 1
      %p134 = por %p132, %p133
      %p135 = scmp.ne.s32.totalorder %s124, %s125
      %p136 = scmp.eq.s32.totalorder %s26, 0
      %p137 = por %p135, %p136
      %p138 = scmp.ne.s32.totalorder %s124, %s125
      %p139 = scmp.eq.s32.totalorder %s27, 1
      %p140 = por %p138, %p139
      %p142 = scmp.ne.s32.totalorder %s125, %s141
      %p143 = scmp.eq.s32.totalorder %s27, 0
      %p144 = por %p142, %p143
      %s145 = ssub.s32 %s28, %s40
      %p146 = scmp.eq.s32.totalorder %s145, 0
      %s148 = sadd.s32 %s147, 1
      %s149 = scalar_select %p146, %s147, %s148
      %p152 = pneg %p146
      %p153 = scmp.eq.s32.totalorder %s21, 1
      %p154 = por %p152, %p153
      %p155 = scmp.ne.s32.totalorder %s147, %s150
      %p156 = scmp.eq.s32.totalorder %s21, 0
      %p157 = por %p155, %p156
      %p158 = scmp.ne.s32.totalorder %s147, %s150
      %p159 = scmp.eq.s32.totalorder %s26, 1
      %p160 = por %p158, %p159
      %p161 = scmp.ne.s32.totalorder %s150, %s151
      %p162 = scmp.eq.s32.totalorder %s26, 0
      %p163 = por %p161, %p162
      %p164 = scmp.ne.s32.totalorder %s150, %s151
      %p165 = scmp.eq.s32.totalorder %s27, 1
      %p166 = por %p164, %p165
      %p168 = scmp.ne.s32.totalorder %s151, %s167
      %p169 = scmp.eq.s32.totalorder %s27, 0
      %p170 = por %p168, %p169
      %s171 = ssub.s32 %s28, %s40
      %s172 = ssub.s32 %s29, %s36
      %s173 = sor.u32 %s171, %s172
      %p174 = scmp.eq.s32.totalorder %s173, 0
      %s176 = sadd.s32 %s175, 1
      %s177 = scalar_select %p174, %s175, %s176
      %p180 = pneg %p174
      %p181 = scmp.eq.s32.totalorder %s21, 1
      %p182 = por %p180, %p181
      %p183 = scmp.ne.s32.totalorder %s175, %s178
      %p184 = scmp.eq.s32.totalorder %s21, 0
      %p185 = por %p183, %p184
      %p186 = scmp.ne.s32.totalorder %s175, %s178
      %p187 = scmp.eq.s32.totalorder %s26, 1
      %p188 = por %p186, %p187
      %p189 = scmp.ne.s32.totalorder %s178, %s179
      %p190 = scmp.eq.s32.totalorder %s26, 0
      %p191 = por %p189, %p190
      %p192 = scmp.ne.s32.totalorder %s178, %s179
      %p193 = scmp.eq.s32.totalorder %s27, 1
      %p194 = por %p192, %p193
      %p196 = scmp.ne.s32.totalorder %s179, %s195
      %p197 = scmp.eq.s32.totalorder %s27, 0
      %p198 = por %p196, %p197
      %p199 = scmp.le.s32.totalorder 1, %s21
      %p200 = scmp.lt.s32.totalorder %s21, 3
      %p201 = pnand %p199, %p200
      %p202 = pneg %p201
      // Predicated region
      $region9: #{tpu_custom_call.1} parent=5 // pred_check
        _
      $region10: #{tpu_custom_call.1} parent=5 // pred_check_branch
        %204 = sbr.rel (%p201) target = $region12
      $region11: #{tpu_custom_call.1} parent=5 // pred_region
        %s205 = ssub.s32 %s21, 1
        // Predicated region
        $region13: #{tpu_custom_call.1} parent=11 // pred_check
          %p206 = pneg %p59
        $region14: #{tpu_custom_call.1} parent=11 // pred_check_branch
          %208 = sbr.rel (%p206) target = $region16
        $region15: #{tpu_custom_call.1} parent=11 // pred_region
          %s210 = ssub.s32 1536, 1536
          %211 = vsyncadd [#allocation3], %s210
          %s212 = smul.addr %s31, 12
          %s213 = smul.addr %s212, 128
          %s214 = scalar_lea.hbm %s0, %s213
          %s216 = sshll.u32 [#allocation2], 4
          %s217 = int_to_ptr.vmem [resolvable:$true] %s216
          %219 = dma.hbm_to_vmem [thread:$0]  %s214, 1536, %s217, [#allocation3]
        $region16: #{tpu_custom_call.1} parent=11 // pred_fallthru
          _
      $region12: #{tpu_custom_call.1} parent=5 // pred_fallthru
        _
      %p220 = scmp.lt.s32.totalorder %s21, 2
      // Predicated region
      $region17: #{tpu_custom_call.1} parent=5 // pred_check
        %p221 = pneg %p220
      $region18: #{tpu_custom_call.1} parent=5 // pred_check_branch
        %223 = sbr.rel (%p221) target = $region20
      $region19: #{tpu_custom_call.1} parent=5 // pred_region
        // Predicated region
        $region21: #{tpu_custom_call.1} parent=19 // pred_check
          %p224 = pneg %p79
        $region22: #{tpu_custom_call.1} parent=19 // pred_check_branch
          %226 = sbr.rel (%p224) target = $region24
        $region23: #{tpu_custom_call.1} parent=19 // pred_region
          %s227 = sand.u32 %s21, 1
          %s228 = scalar_lea.sflag [#allocation6], %s227
          %s229 = sand.u32 %s69, 1
          %s230 = smul.addr %s229, 4608
          %s231 = scalar_lea.vmem [#allocation5], %s230
          %s233 = ssub.s32 73728, 73728
          %234 = vsyncadd %s228, %s233
          %s235 = smul.addr %s28, 1152
          %s236 = smul.addr %s235, 64
          %s237 = scalar_lea.hbm %s1, %s236
          %s238 = sshll.u32 %s231, 4
          %s239 = int_to_ptr.vmem [resolvable:$true] %s238
          %244 = dma.hbm_to_vmem [thread:$0]  %s237, 73728, %s239, %s228, 384, 384, 24
        $region24: #{tpu_custom_call.1} parent=19 // pred_fallthru
          _
        // Predicated region
        $region25: #{tpu_custom_call.1} parent=19 // pred_check
          %p245 = pneg %p105
        $region26: #{tpu_custom_call.1} parent=19 // pred_check_branch
          %247 = sbr.rel (%p245) target = $region28
        $region27: #{tpu_custom_call.1} parent=19 // pred_region
          %s248 = sand.u32 %s21, 1
          %s249 = scalar_lea.sflag [#allocation6], %s248
          %s250 = sand.u32 %s95, 1
          %s251 = smul.addr %s250, 6
          %s252 = scalar_lea.vmem [#allocation7], %s251
          %s254 = ssub.s32 96, 96
          %255 = vsyncadd %s249, %s254
          %s256 = smul.addr %s28, 6
          %s257 = smul.addr %s256, 16
          %s258 = scalar_lea.hbm %s2, %s257
          %s260 = sshll.u32 %s252, 4
          %s261 = int_to_ptr.vmem [resolvable:$true] %s260
          %263 = dma.hbm_to_vmem [thread:$0]  %s258, 96, %s261, %s249
        $region28: #{tpu_custom_call.1} parent=19 // pred_fallthru
          _
        // Predicated region
        $region29: #{tpu_custom_call.1} parent=19 // pred_check
          %p264 = pneg %p131
        $region30: #{tpu_custom_call.1} parent=19 // pred_check_branch
          %266 = sbr.rel (%p264) target = $region32
        $region31: #{tpu_custom_call.1} parent=19 // pred_region
          %s267 = sand.u32 %s21, 1
          %s268 = scalar_lea.sflag [#allocation9], %s267
          %s269 = sand.u32 %s121, 1
          %s270 = smul.addr %s269, 2304
          %s271 = scalar_lea.vmem [#allocation8], %s270
          %s273 = ssub.s32 36864, 36864
          %274 = vsyncadd %s268, %s273
          %s275 = smul.addr %s28, 576
          %s276 = smul.addr %s275, 64
          %s277 = scalar_lea.hbm %s3, %s276
          %s278 = sshll.u32 %s271, 4
          %s279 = int_to_ptr.vmem [resolvable:$true] %s278
          %284 = dma.hbm_to_vmem [thread:$0]  %s277, 36864, %s279, %s268, 384, 384, 24
        $region32: #{tpu_custom_call.1} parent=19 // pred_fallthru
          _
        // Predicated region
        $region33: #{tpu_custom_call.1} parent=19 // pred_check
          %p285 = pneg %p157
        $region34: #{tpu_custom_call.1} parent=19 // pred_check_branch
          %287 = sbr.rel (%p285) target = $region36
        $region35: #{tpu_custom_call.1} parent=19 // pred_region
          %s288 = sand.u32 %s21, 1
          %s289 = scalar_lea.sflag [#allocation9], %s288
          %s290 = sand.u32 %s147, 1
          %s291 = smul.addr %s290, 6
          %s292 = scalar_lea.vmem [#allocation10], %s291
          %s294 = ssub.s32 96, 96
          %295 = vsyncadd %s289, %s294
          %s296 = smul.addr %s28, 6
          %s297 = smul.addr %s296, 16
          %s298 = scalar_lea.hbm %s4, %s297
          %s300 = sshll.u32 %s292, 4
          %s301 = int_to_ptr.vmem [resolvable:$true] %s300
          %303 = dma.hbm_to_vmem [thread:$0]  %s298, 96, %s301, %s289
        $region36: #{tpu_custom_call.1} parent=19 // pred_fallthru
          _
      $region20: #{tpu_custom_call.1} parent=5 // pred_fallthru
        _
      %p304 = scmp.le.s32.totalorder 1, %s21
      %p305 = scmp.lt.s32.totalorder %s21, 3
      %p306 = pnand %p304, %p305
      %p307 = pneg %p306
      // Predicated region
      $region37: #{tpu_custom_call.1} parent=5 // pred_check
        _
      $region38: #{tpu_custom_call.1} parent=5 // pred_check_branch
        %309 = sbr.rel (%p306) target = $region40
      $region39: #{tpu_custom_call.1} parent=5 // pred_region
        %s310 = ssub.s32 %s21, 1
        // Predicated region
        $region41: #{tpu_custom_call.1} parent=39 // pred_check
          %p311 = pneg %p59
        $region42: #{tpu_custom_call.1} parent=39 // pred_check_branch
          %313 = sbr.rel (%p311) target = $region44
        $region43: #{tpu_custom_call.1} parent=39 // pred_region
          %314 = dma.done [#allocation3], 1536
        $region44: #{tpu_custom_call.1} parent=39 // pred_fallthru
          _
        %s315 = sand.u32 %s26, 1
        %s316 = scalar_lea.sflag [#allocation6], %s315
        %s317 = sand.u32 %s72, 1
        %s318 = smul.addr %s317, 4608
        %s319 = scalar_lea.vmem [#allocation5], %s318
        // Predicated region
        $region45: #{tpu_custom_call.1} parent=39 // pred_check
          %p320 = pneg %p85
        $region46: #{tpu_custom_call.1} parent=39 // pred_check_branch
          %322 = sbr.rel (%p320) target = $region48
        $region47: #{tpu_custom_call.1} parent=39 // pred_region
          %323 = dma.done %s316, 73728
        $region48: #{tpu_custom_call.1} parent=39 // pred_fallthru
          _
        %s324 = sand.u32 %s26, 1
        %s325 = scalar_lea.sflag [#allocation6], %s324
        %s326 = sand.u32 %s98, 1
        %s327 = smul.addr %s326, 6
        %s328 = scalar_lea.vmem [#allocation7], %s327
        // Predicated region
        $region49: #{tpu_custom_call.1} parent=39 // pred_check
          %p329 = pneg %p111
        $region50: #{tpu_custom_call.1} parent=39 // pred_check_branch
          %331 = sbr.rel (%p329) target = $region52
        $region51: #{tpu_custom_call.1} parent=39 // pred_region
          %332 = dma.done %s325, 96
        $region52: #{tpu_custom_call.1} parent=39 // pred_fallthru
          _
        %s333 = sand.u32 %s26, 1
        %s334 = scalar_lea.sflag [#allocation9], %s333
        %s335 = sand.u32 %s124, 1
        %s336 = smul.addr %s335, 2304
        %s337 = scalar_lea.vmem [#allocation8], %s336
        // Predicated region
        $region53: #{tpu_custom_call.1} parent=39 // pred_check
          %p338 = pneg %p137
        $region54: #{tpu_custom_call.1} parent=39 // pred_check_branch
          %340 = sbr.rel (%p338) target = $region56
        $region55: #{tpu_custom_call.1} parent=39 // pred_region
          %341 = dma.done %s334, 36864
        $region56: #{tpu_custom_call.1} parent=39 // pred_fallthru
          _
        %s342 = sand.u32 %s26, 1
        %s343 = scalar_lea.sflag [#allocation9], %s342
        %s344 = sand.u32 %s150, 1
        %s345 = smul.addr %s344, 6
        %s346 = scalar_lea.vmem [#allocation10], %s345
        // Predicated region
        $region57: #{tpu_custom_call.1} parent=39 // pred_check
          %p347 = pneg %p163
        $region58: #{tpu_custom_call.1} parent=39 // pred_check_branch
          %349 = sbr.rel (%p347) target = $region60
        $region59: #{tpu_custom_call.1} parent=39 // pred_region
          %350 = dma.done %s343, 96
        $region60: #{tpu_custom_call.1} parent=39 // pred_fallthru
          _
        %p351 = pneg %p59
        %p352 = pneg %p56
        %s353 = sand.u32 %s26, 1
        %s354 = scalar_lea.sflag [#allocation6], %s353
        %s355 = sand.u32 %s72, 1
        %s356 = smul.addr %s355, 4608
        %s357 = scalar_lea.vmem [#allocation5], %s356
        %p358 = pneg %p85
        %p359 = pneg %p82
        %s360 = sand.u32 %s26, 1
        %s361 = scalar_lea.sflag [#allocation6], %s360
        %s362 = sand.u32 %s98, 1
        %s363 = smul.addr %s362, 6
        %s364 = scalar_lea.vmem [#allocation7], %s363
        %p365 = pneg %p111
        %p366 = pneg %p108
        %s367 = sand.u32 %s26, 1
        %s368 = scalar_lea.sflag [#allocation9], %s367
        %s369 = sand.u32 %s124, 1
        %s370 = smul.addr %s369, 2304
        %s371 = scalar_lea.vmem [#allocation8], %s370
        %p372 = pneg %p137
        %p373 = pneg %p134
        %s374 = sand.u32 %s26, 1
        %s375 = scalar_lea.sflag [#allocation9], %s374
        %s376 = sand.u32 %s150, 1
        %s377 = smul.addr %s376, 6
        %s378 = scalar_lea.vmem [#allocation10], %s377
        %p379 = pneg %p163
        %p380 = pneg %p160
        %p381 = pneg %p191
        %p382 = pneg %p188
        %s383 = sand.u32 %s178, 1
        %s384 = scalar_lea.sflag [#allocation4], %s383
        %s385 = sand.u32 %s178, 1
        %s386 = smul.addr %s385, 48
        %s387 = scalar_lea.vmem [#allocation11], %s386
        %v388 = vld [vmem:[#allocation2] sm:$0xff]
        %v389 = vld [vmem:[#allocation2 + $0x8] sm:$0xff]
        %v390 = vld [vmem:[#allocation2 + $0x10] sm:$0xff]
        %v391 = vld [vmem:[#allocation2 + $0x18] sm:$0xff]
        %v392 = vld [vmem:[#allocation2 + $0x20] sm:$0xff]
        %v393 = vld [vmem:[#allocation2 + $0x28] sm:$0xff]
        %v394 = vld [vmem:[#allocation2 + $0x30] sm:$0xff]
        %v395 = vld [vmem:[#allocation2 + $0x38] sm:$0xff]
        %v396 = vld [vmem:[#allocation2 + $0x40] sm:$0xff]
        %v397 = vld [vmem:[#allocation2 + $0x48] sm:$0xff]
        %v398 = vld [vmem:[#allocation2 + $0x50] sm:$0xff]
        %v399 = vld [vmem:[#allocation2 + $0x58] sm:$0xff]
        %v400 = vpack.c.bf16 %v388, %v388
        %v401 = vpack.c.bf16 %v389, %v389
        %v402 = vpack.c.bf16 %v390, %v390
        %v403 = vpack.c.bf16 %v391, %v391
        %v404 = vpack.c.bf16 %v392, %v392
        %v405 = vpack.c.bf16 %v393, %v393
        %v406 = vpack.c.bf16 %v394, %v394
        %v407 = vpack.c.bf16 %v395, %v395
        %v408 = vpack.c.bf16 %v396, %v396
        %v409 = vpack.c.bf16 %v397, %v397
        %v410 = vpack.c.bf16 %v398, %v398
        %v411 = vpack.c.bf16 %v399, %v399
        %v412 = vld [vmem:[%s328] sm:$0x3f]
        %v413 = vld [vmem:[%s346] sm:$0x3f]
        %v414 = vld [vmem:[%s319] sm:$0xff]
        %v415 = vld [vmem:[%s319 + $0x8] sm:$0xff]
        %v416 = vld [vmem:[%s319 + $0x10] sm:$0xff]
        %v417 = vld [vmem:[%s319 + $0x18] sm:$0xff]
        %v418 = vld [vmem:[%s319 + $0x20] sm:$0xff]
        %v419 = vld [vmem:[%s319 + $0x28] sm:$0xff]
        %v420 = vld [vmem:[%s319 + $0x30] sm:$0xff]
        %v421 = vld [vmem:[%s319 + $0x38] sm:$0xff]
        %v422 = vld [vmem:[%s319 + $0x40] sm:$0xff]
        %v423 = vld [vmem:[%s319 + $0x48] sm:$0xff]
        %v424 = vld [vmem:[%s319 + $0x50] sm:$0xff]
        %v425 = vld [vmem:[%s319 + $0x58] sm:$0xff]
        %v426 = vld [vmem:[%s319 + $0x60] sm:$0xff]
        %v427 = vld [vmem:[%s319 + $0x68] sm:$0xff]
        %v428 = vld [vmem:[%s319 + $0x70] sm:$0xff]
        %v429 = vld [vmem:[%s319 + $0x78] sm:$0xff]
        %v430 = vld [vmem:[%s319 + $0x80] sm:$0xff]
        %v431 = vld [vmem:[%s319 + $0x88] sm:$0xff]
        %v432 = vld [vmem:[%s319 + $0x90] sm:$0xff]
        %v433 = vld [vmem:[%s319 + $0x98] sm:$0xff]
        %v434 = vld [vmem:[%s319 + $0xa0] sm:$0xff]
        %v435 = vld [vmem:[%s319 + $0xa8] sm:$0xff]
        %v436 = vld [vmem:[%s319 + $0xb0] sm:$0xff]
        %v437 = vld [vmem:[%s319 + $0xb8] sm:$0xff]
        %v438 = vld [vmem:[%s319 + $0xc0] sm:$0xff]
        %v439 = vld [vmem:[%s319 + $0xc8] sm:$0xff]
        %v440 = vld [vmem:[%s319 + $0xd0] sm:$0xff]
        %v441 = vld [vmem:[%s319 + $0xd8] sm:$0xff]
        %v442 = vld [vmem:[%s319 + $0xe0] sm:$0xff]
        %v443 = vld [vmem:[%s319 + $0xe8] sm:$0xff]
        %v444 = vld [vmem:[%s319 + $0xf0] sm:$0xff]
        %v445 = vld [vmem:[%s319 + $0xf8] sm:$0xff]
        %v446 = vld [vmem:[%s319 + $0x100] sm:$0xff]
        %v447 = vld [vmem:[%s319 + $0x108] sm:$0xff]
        %v448 = vld [vmem:[%s319 + $0x110] sm:$0xff]
        %v449 = vld [vmem:[%s319 + $0x118] sm:$0xff]
        %v450 = vld [vmem:[%s319 + $0x120] sm:$0xff]
        %v451 = vld [vmem:[%s319 + $0x128] sm:$0xff]
        %v452 = vld [vmem:[%s319 + $0x130] sm:$0xff]
        %v453 = vld [vmem:[%s319 + $0x138] sm:$0xff]
        %v454 = vld [vmem:[%s319 + $0x140] sm:$0xff]
        %v455 = vld [vmem:[%s319 + $0x148] sm:$0xff]
        %v456 = vld [vmem:[%s319 + $0x150] sm:$0xff]
        %v457 = vld [vmem:[%s319 + $0x158] sm:$0xff]
        %v458 = vld [vmem:[%s319 + $0x160] sm:$0xff]
        %v459 = vld [vmem:[%s319 + $0x168] sm:$0xff]
        %v460 = vld [vmem:[%s319 + $0x170] sm:$0xff]
        %v461 = vld [vmem:[%s319 + $0x178] sm:$0xff]
        %v462 = vld [vmem:[%s319 + $0x180] sm:$0xff]
        %v463 = vld [vmem:[%s319 + $0x188] sm:$0xff]
        %v464 = vld [vmem:[%s319 + $0x190] sm:$0xff]
        %v465 = vld [vmem:[%s319 + $0x198] sm:$0xff]
        %v466 = vld [vmem:[%s319 + $0x1a0] sm:$0xff]
        %v467 = vld [vmem:[%s319 + $0x1a8] sm:$0xff]
        %v468 = vld [vmem:[%s319 + $0x1b0] sm:$0xff]
        %v469 = vld [vmem:[%s319 + $0x1b8] sm:$0xff]
        %v470 = vld [vmem:[%s319 + $0x1c0] sm:$0xff]
        %v471 = vld [vmem:[%s319 + $0x1c8] sm:$0xff]
        %v472 = vld [vmem:[%s319 + $0x1d0] sm:$0xff]
        %v473 = vld [vmem:[%s319 + $0x1d8] sm:$0xff]
        %v474 = vld [vmem:[%s319 + $0x1e0] sm:$0xff]
        %v475 = vld [vmem:[%s319 + $0x1e8] sm:$0xff]
        %v476 = vld [vmem:[%s319 + $0x1f0] sm:$0xff]
        %v477 = vld [vmem:[%s319 + $0x1f8] sm:$0xff]
        %v478 = vld [vmem:[%s319 + $0x200] sm:$0xff]
        %v479 = vld [vmem:[%s319 + $0x208] sm:$0xff]
        %v480 = vld [vmem:[%s319 + $0x210] sm:$0xff]
        %v481 = vld [vmem:[%s319 + $0x218] sm:$0xff]
        %v482 = vld [vmem:[%s319 + $0x220] sm:$0xff]
        %v483 = vld [vmem:[%s319 + $0x228] sm:$0xff]
        %v484 = vld [vmem:[%s319 + $0x230] sm:$0xff]
        %v485 = vld [vmem:[%s319 + $0x238] sm:$0xff]
        %v486 = vld [vmem:[%s319 + $0x240] sm:$0xff]
        %v487 = vld [vmem:[%s319 + $0x248] sm:$0xff]
        %v488 = vld [vmem:[%s319 + $0x250] sm:$0xff]
        %v489 = vld [vmem:[%s319 + $0x258] sm:$0xff]
        %v490 = vld [vmem:[%s319 + $0x260] sm:$0xff]
        %v491 = vld [vmem:[%s319 + $0x268] sm:$0xff]
        %v492 = vld [vmem:[%s319 + $0x270] sm:$0xff]
        %v493 = vld [vmem:[%s319 + $0x278] sm:$0xff]
        %v494 = vld [vmem:[%s319 + $0x280] sm:$0xff]
        %v495 = vld [vmem:[%s319 + $0x288] sm:$0xff]
        %v496 = vld [vmem:[%s319 + $0x290] sm:$0xff]
        %v497 = vld [vmem:[%s319 + $0x298] sm:$0xff]
        %v498 = vld [vmem:[%s319 + $0x2a0] sm:$0xff]
        %v499 = vld [vmem:[%s319 + $0x2a8] sm:$0xff]
        %v500 = vld [vmem:[%s319 + $0x2b0] sm:$0xff]
        %v501 = vld [vmem:[%s319 + $0x2b8] sm:$0xff]
        %v502 = vld [vmem:[%s319 + $0x2c0] sm:$0xff]
        %v503 = vld [vmem:[%s319 + $0x2c8] sm:$0xff]
        %v504 = vld [vmem:[%s319 + $0x2d0] sm:$0xff]
        %v505 = vld [vmem:[%s319 + $0x2d8] sm:$0xff]
        %v506 = vld [vmem:[%s319 + $0x2e0] sm:$0xff]
        %v507 = vld [vmem:[%s319 + $0x2e8] sm:$0xff]
        %v508 = vld [vmem:[%s319 + $0x2f0] sm:$0xff]
        %v509 = vld [vmem:[%s319 + $0x2f8] sm:$0xff]
        %v510 = vld [vmem:[%s319 + $0x300] sm:$0xff]
        %v511 = vld [vmem:[%s319 + $0x308] sm:$0xff]
        %v512 = vld [vmem:[%s319 + $0x310] sm:$0xff]
        %v513 = vld [vmem:[%s319 + $0x318] sm:$0xff]
        %v514 = vld [vmem:[%s319 + $0x320] sm:$0xff]
        %v515 = vld [vmem:[%s319 + $0x328] sm:$0xff]
        %v516 = vld [vmem:[%s319 + $0x330] sm:$0xff]
        %v517 = vld [vmem:[%s319 + $0x338] sm:$0xff]
        %v518 = vld [vmem:[%s319 + $0x340] sm:$0xff]
        %v519 = vld [vmem:[%s319 + $0x348] sm:$0xff]
        %v520 = vld [vmem:[%s319 + $0x350] sm:$0xff]
        %v521 = vld [vmem:[%s319 + $0x358] sm:$0xff]
        %v522 = vld [vmem:[%s319 + $0x360] sm:$0xff]
        %v523 = vld [vmem:[%s319 + $0x368] sm:$0xff]
        %v524 = vld [vmem:[%s319 + $0x370] sm:$0xff]
        %v525 = vld [vmem:[%s319 + $0x378] sm:$0xff]
        %v526 = vld [vmem:[%s319 + $0x380] sm:$0xff]
        %v527 = vld [vmem:[%s319 + $0x388] sm:$0xff]
        %v528 = vld [vmem:[%s319 + $0x390] sm:$0xff]
        %v529 = vld [vmem:[%s319 + $0x398] sm:$0xff]
        %v530 = vld [vmem:[%s319 + $0x3a0] sm:$0xff]
        %v531 = vld [vmem:[%s319 + $0x3a8] sm:$0xff]
        %v532 = vld [vmem:[%s319 + $0x3b0] sm:$0xff]
        %v533 = vld [vmem:[%s319 + $0x3b8] sm:$0xff]
        %v534 = vld [vmem:[%s319 + $0x3c0] sm:$0xff]
        %v535 = vld [vmem:[%s319 + $0x3c8] sm:$0xff]
        %v536 = vld [vmem:[%s319 + $0x3d0] sm:$0xff]
        %v537 = vld [vmem:[%s319 + $0x3d8] sm:$0xff]
        %v538 = vld [vmem:[%s319 + $0x3e0] sm:$0xff]
        %v539 = vld [vmem:[%s319 + $0x3e8] sm:$0xff]
        %v540 = vld [vmem:[%s319 + $0x3f0] sm:$0xff]
        %v541 = vld [vmem:[%s319 + $0x3f8] sm:$0xff]
        %v542 = vld [vmem:[%s319 + $0x400] sm:$0xff]
        %v543 = vld [vmem:[%s319 + $0x408] sm:$0xff]
        %v544 = vld [vmem:[%s319 + $0x410] sm:$0xff]
        %v545 = vld [vmem:[%s319 + $0x418] sm:$0xff]
        %v546 = vld [vmem:[%s319 + $0x420] sm:$0xff]
        %v547 = vld [vmem:[%s319 + $0x428] sm:$0xff]
        %v548 = vld [vmem:[%s319 + $0x430] sm:$0xff]
        %v549 = vld [vmem:[%s319 + $0x438] sm:$0xff]
        %v550 = vld [vmem:[%s319 + $0x440] sm:$0xff]
        %v551 = vld [vmem:[%s319 + $0x448] sm:$0xff]
        %v552 = vld [vmem:[%s319 + $0x450] sm:$0xff]
        %v553 = vld [vmem:[%s319 + $0x458] sm:$0xff]
        %v554 = vld [vmem:[%s319 + $0x460] sm:$0xff]
        %v555 = vld [vmem:[%s319 + $0x468] sm:$0xff]
        %v556 = vld [vmem:[%s319 + $0x470] sm:$0xff]
        %v557 = vld [vmem:[%s319 + $0x478] sm:$0xff]
        %v558 = vld [vmem:[%s319 + $0x480] sm:$0xff]
        %v559 = vld [vmem:[%s319 + $0x488] sm:$0xff]
        %v560 = vld [vmem:[%s319 + $0x490] sm:$0xff]
        %v561 = vld [vmem:[%s319 + $0x498] sm:$0xff]
        %v562 = vld [vmem:[%s319 + $0x4a0] sm:$0xff]
        %v563 = vld [vmem:[%s319 + $0x4a8] sm:$0xff]
        %v564 = vld [vmem:[%s319 + $0x4b0] sm:$0xff]
        %v565 = vld [vmem:[%s319 + $0x4b8] sm:$0xff]
        %v566 = vld [vmem:[%s319 + $0x4c0] sm:$0xff]
        %v567 = vld [vmem:[%s319 + $0x4c8] sm:$0xff]
        %v568 = vld [vmem:[%s319 + $0x4d0] sm:$0xff]
        %v569 = vld [vmem:[%s319 + $0x4d8] sm:$0xff]
        %v570 = vld [vmem:[%s319 + $0x4e0] sm:$0xff]
        %v571 = vld [vmem:[%s319 + $0x4e8] sm:$0xff]
        %v572 = vld [vmem:[%s319 + $0x4f0] sm:$0xff]
        %v573 = vld [vmem:[%s319 + $0x4f8] sm:$0xff]
        %v574 = vld [vmem:[%s319 + $0x500] sm:$0xff]
        %v575 = vld [vmem:[%s319 + $0x508] sm:$0xff]
        %v576 = vld [vmem:[%s319 + $0x510] sm:$0xff]
        %v577 = vld [vmem:[%s319 + $0x518] sm:$0xff]
        %v578 = vld [vmem:[%s319 + $0x520] sm:$0xff]
        %v579 = vld [vmem:[%s319 + $0x528] sm:$0xff]
        %v580 = vld [vmem:[%s319 + $0x530] sm:$0xff]
        %v581 = vld [vmem:[%s319 + $0x538] sm:$0xff]
        %v582 = vld [vmem:[%s319 + $0x540] sm:$0xff]
        %v583 = vld [vmem:[%s319 + $0x548] sm:$0xff]
        %v584 = vld [vmem:[%s319 + $0x550] sm:$0xff]
        %v585 = vld [vmem:[%s319 + $0x558] sm:$0xff]
        %v586 = vld [vmem:[%s319 + $0x560] sm:$0xff]
        %v587 = vld [vmem:[%s319 + $0x568] sm:$0xff]
        %v588 = vld [vmem:[%s319 + $0x570] sm:$0xff]
        %v589 = vld [vmem:[%s319 + $0x578] sm:$0xff]
        %v590 = vld [vmem:[%s319 + $0x580] sm:$0xff]
        %v591 = vld [vmem:[%s319 + $0x588] sm:$0xff]
        %v592 = vld [vmem:[%s319 + $0x590] sm:$0xff]
        %v593 = vld [vmem:[%s319 + $0x598] sm:$0xff]
        %v594 = vld [vmem:[%s319 + $0x5a0] sm:$0xff]
        %v595 = vld [vmem:[%s319 + $0x5a8] sm:$0xff]
        %v596 = vld [vmem:[%s319 + $0x5b0] sm:$0xff]
        %v597 = vld [vmem:[%s319 + $0x5b8] sm:$0xff]
        %v598 = vld [vmem:[%s319 + $0x5c0] sm:$0xff]
        %v599 = vld [vmem:[%s319 + $0x5c8] sm:$0xff]
        %v600 = vld [vmem:[%s319 + $0x5d0] sm:$0xff]
        %v601 = vld [vmem:[%s319 + $0x5d8] sm:$0xff]
        %v602 = vld [vmem:[%s319 + $0x5e0] sm:$0xff]
        %v603 = vld [vmem:[%s319 + $0x5e8] sm:$0xff]
        %v604 = vld [vmem:[%s319 + $0x5f0] sm:$0xff]
        %v605 = vld [vmem:[%s319 + $0x5f8] sm:$0xff]
        %v606 = vld [vmem:[%s319 + $0x600] sm:$0xff]
        %v607 = vld [vmem:[%s319 + $0x608] sm:$0xff]
        %v608 = vld [vmem:[%s319 + $0x610] sm:$0xff]
        %v609 = vld [vmem:[%s319 + $0x618] sm:$0xff]
        %v610 = vld [vmem:[%s319 + $0x620] sm:$0xff]
        %v611 = vld [vmem:[%s319 + $0x628] sm:$0xff]
        %v612 = vld [vmem:[%s319 + $0x630] sm:$0xff]
        %v613 = vld [vmem:[%s319 + $0x638] sm:$0xff]
        %v614 = vld [vmem:[%s319 + $0x640] sm:$0xff]
        %v615 = vld [vmem:[%s319 + $0x648] sm:$0xff]
        %v616 = vld [vmem:[%s319 + $0x650] sm:$0xff]
        %v617 = vld [vmem:[%s319 + $0x658] sm:$0xff]
        %v618 = vld [vmem:[%s319 + $0x660] sm:$0xff]
        %v619 = vld [vmem:[%s319 + $0x668] sm:$0xff]
        %v620 = vld [vmem:[%s319 + $0x670] sm:$0xff]
        %v621 = vld [vmem:[%s319 + $0x678] sm:$0xff]
        %v622 = vld [vmem:[%s319 + $0x680] sm:$0xff]
        %v623 = vld [vmem:[%s319 + $0x688] sm:$0xff]
        %v624 = vld [vmem:[%s319 + $0x690] sm:$0xff]
        %v625 = vld [vmem:[%s319 + $0x698] sm:$0xff]
        %v626 = vld [vmem:[%s319 + $0x6a0] sm:$0xff]
        %v627 = vld [vmem:[%s319 + $0x6a8] sm:$0xff]
        %v628 = vld [vmem:[%s319 + $0x6b0] sm:$0xff]
        %v629 = vld [vmem:[%s319 + $0x6b8] sm:$0xff]
        %v630 = vld [vmem:[%s319 + $0x6c0] sm:$0xff]
        %v631 = vld [vmem:[%s319 + $0x6c8] sm:$0xff]
        %v632 = vld [vmem:[%s319 + $0x6d0] sm:$0xff]
        %v633 = vld [vmem:[%s319 + $0x6d8] sm:$0xff]
        %v634 = vld [vmem:[%s319 + $0x6e0] sm:$0xff]
        %v635 = vld [vmem:[%s319 + $0x6e8] sm:$0xff]
        %v636 = vld [vmem:[%s319 + $0x6f0] sm:$0xff]
        %v637 = vld [vmem:[%s319 + $0x6f8] sm:$0xff]
        %v638 = vld [vmem:[%s319 + $0x700] sm:$0xff]
        %v639 = vld [vmem:[%s319 + $0x708] sm:$0xff]
        %v640 = vld [vmem:[%s319 + $0x710] sm:$0xff]
        %v641 = vld [vmem:[%s319 + $0x718] sm:$0xff]
        %v642 = vld [vmem:[%s319 + $0x720] sm:$0xff]
        %v643 = vld [vmem:[%s319 + $0x728] sm:$0xff]
        %v644 = vld [vmem:[%s319 + $0x730] sm:$0xff]
        %v645 = vld [vmem:[%s319 + $0x738] sm:$0xff]
        %v646 = vld [vmem:[%s319 + $0x740] sm:$0xff]
        %v647 = vld [vmem:[%s319 + $0x748] sm:$0xff]
        %v648 = vld [vmem:[%s319 + $0x750] sm:$0xff]
        %v649 = vld [vmem:[%s319 + $0x758] sm:$0xff]
        %v650 = vld [vmem:[%s319 + $0x760] sm:$0xff]
        %v651 = vld [vmem:[%s319 + $0x768] sm:$0xff]
        %v652 = vld [vmem:[%s319 + $0x770] sm:$0xff]
        %v653 = vld [vmem:[%s319 + $0x778] sm:$0xff]
        %v654 = vld [vmem:[%s319 + $0x780] sm:$0xff]
        %v655 = vld [vmem:[%s319 + $0x788] sm:$0xff]
        %v656 = vld [vmem:[%s319 + $0x790] sm:$0xff]
        %v657 = vld [vmem:[%s319 + $0x798] sm:$0xff]
        %v658 = vld [vmem:[%s319 + $0x7a0] sm:$0xff]
        %v659 = vld [vmem:[%s319 + $0x7a8] sm:$0xff]
        %v660 = vld [vmem:[%s319 + $0x7b0] sm:$0xff]
        %v661 = vld [vmem:[%s319 + $0x7b8] sm:$0xff]
        %v662 = vld [vmem:[%s319 + $0x7c0] sm:$0xff]
        %v663 = vld [vmem:[%s319 + $0x7c8] sm:$0xff]
        %v664 = vld [vmem:[%s319 + $0x7d0] sm:$0xff]
        %v665 = vld [vmem:[%s319 + $0x7d8] sm:$0xff]
        %v666 = vld [vmem:[%s319 + $0x7e0] sm:$0xff]
        %v667 = vld [vmem:[%s319 + $0x7e8] sm:$0xff]
        %v668 = vld [vmem:[%s319 + $0x7f0] sm:$0xff]
        %v669 = vld [vmem:[%s319 + $0x7f8] sm:$0xff]
        %v670 = vld [vmem:[%s319 + $0x800] sm:$0xff]
        %v671 = vld [vmem:[%s319 + $0x808] sm:$0xff]
        %v672 = vld [vmem:[%s319 + $0x810] sm:$0xff]
        %v673 = vld [vmem:[%s319 + $0x818] sm:$0xff]
        %v674 = vld [vmem:[%s319 + $0x820] sm:$0xff]
        %v675 = vld [vmem:[%s319 + $0x828] sm:$0xff]
        %v676 = vld [vmem:[%s319 + $0x830] sm:$0xff]
        %v677 = vld [vmem:[%s319 + $0x838] sm:$0xff]
        %v678 = vld [vmem:[%s319 + $0x840] sm:$0xff]
        %v679 = vld [vmem:[%s319 + $0x848] sm:$0xff]
        %v680 = vld [vmem:[%s319 + $0x850] sm:$0xff]
        %v681 = vld [vmem:[%s319 + $0x858] sm:$0xff]
        %v682 = vld [vmem:[%s319 + $0x860] sm:$0xff]
        %v683 = vld [vmem:[%s319 + $0x868] sm:$0xff]
        %v684 = vld [vmem:[%s319 + $0x870] sm:$0xff]
        %v685 = vld [vmem:[%s319 + $0x878] sm:$0xff]
        %v686 = vld [vmem:[%s319 + $0x880] sm:$0xff]
        %v687 = vld [vmem:[%s319 + $0x888] sm:$0xff]
        %v688 = vld [vmem:[%s319 + $0x890] sm:$0xff]
        %v689 = vld [vmem:[%s319 + $0x898] sm:$0xff]
        %v690 = vld [vmem:[%s319 + $0x8a0] sm:$0xff]
        %v691 = vld [vmem:[%s319 + $0x8a8] sm:$0xff]
        %v692 = vld [vmem:[%s319 + $0x8b0] sm:$0xff]
        %v693 = vld [vmem:[%s319 + $0x8b8] sm:$0xff]
        %v694 = vld [vmem:[%s319 + $0x8c0] sm:$0xff]
        %v695 = vld [vmem:[%s319 + $0x8c8] sm:$0xff]
        %v696 = vld [vmem:[%s319 + $0x8d0] sm:$0xff]
        %v697 = vld [vmem:[%s319 + $0x8d8] sm:$0xff]
        %v698 = vld [vmem:[%s319 + $0x8e0] sm:$0xff]
        %v699 = vld [vmem:[%s319 + $0x8e8] sm:$0xff]
        %v700 = vld [vmem:[%s319 + $0x8f0] sm:$0xff]
        %v701 = vld [vmem:[%s319 + $0x8f8] sm:$0xff]
        %v702 = vld [vmem:[%s319 + $0x900] sm:$0xff]
        %v703 = vld [vmem:[%s319 + $0x908] sm:$0xff]
        %v704 = vld [vmem:[%s319 + $0x910] sm:$0xff]
        %v705 = vld [vmem:[%s319 + $0x918] sm:$0xff]
        %v706 = vld [vmem:[%s319 + $0x920] sm:$0xff]
        %v707 = vld [vmem:[%s319 + $0x928] sm:$0xff]
        %v708 = vld [vmem:[%s319 + $0x930] sm:$0xff]
        %v709 = vld [vmem:[%s319 + $0x938] sm:$0xff]
        %v710 = vld [vmem:[%s319 + $0x940] sm:$0xff]
        %v711 = vld [vmem:[%s319 + $0x948] sm:$0xff]
        %v712 = vld [vmem:[%s319 + $0x950] sm:$0xff]
        %v713 = vld [vmem:[%s319 + $0x958] sm:$0xff]
        %v714 = vld [vmem:[%s319 + $0x960] sm:$0xff]
        %v715 = vld [vmem:[%s319 + $0x968] sm:$0xff]
        %v716 = vld [vmem:[%s319 + $0x970] sm:$0xff]
        %v717 = vld [vmem:[%s319 + $0x978] sm:$0xff]
        %v718 = vld [vmem:[%s319 + $0x980] sm:$0xff]
        %v719 = vld [vmem:[%s319 + $0x988] sm:$0xff]
        %v720 = vld [vmem:[%s319 + $0x990] sm:$0xff]
        %v721 = vld [vmem:[%s319 + $0x998] sm:$0xff]
        %v722 = vld [vmem:[%s319 + $0x9a0] sm:$0xff]
        %v723 = vld [vmem:[%s319 + $0x9a8] sm:$0xff]
        %v724 = vld [vmem:[%s319 + $0x9b0] sm:$0xff]
        %v725 = vld [vmem:[%s319 + $0x9b8] sm:$0xff]
        %v726 = vld [vmem:[%s319 + $0x9c0] sm:$0xff]
        %v727 = vld [vmem:[%s319 + $0x9c8] sm:$0xff]
        %v728 = vld [vmem:[%s319 + $0x9d0] sm:$0xff]
        %v729 = vld [vmem:[%s319 + $0x9d8] sm:$0xff]
        %v730 = vld [vmem:[%s319 + $0x9e0] sm:$0xff]
        %v731 = vld [vmem:[%s319 + $0x9e8] sm:$0xff]
        %v732 = vld [vmem:[%s319 + $0x9f0] sm:$0xff]
        %v733 = vld [vmem:[%s319 + $0x9f8] sm:$0xff]
        %v734 = vld [vmem:[%s319 + $0xa00] sm:$0xff]
        %v735 = vld [vmem:[%s319 + $0xa08] sm:$0xff]
        %v736 = vld [vmem:[%s319 + $0xa10] sm:$0xff]
        %v737 = vld [vmem:[%s319 + $0xa18] sm:$0xff]
        %v738 = vld [vmem:[%s319 + $0xa20] sm:$0xff]
        %v739 = vld [vmem:[%s319 + $0xa28] sm:$0xff]
        %v740 = vld [vmem:[%s319 + $0xa30] sm:$0xff]
        %v741 = vld [vmem:[%s319 + $0xa38] sm:$0xff]
        %v742 = vld [vmem:[%s319 + $0xa40] sm:$0xff]
        %v743 = vld [vmem:[%s319 + $0xa48] sm:$0xff]
        %v744 = vld [vmem:[%s319 + $0xa50] sm:$0xff]
        %v745 = vld [vmem:[%s319 + $0xa58] sm:$0xff]
        %v746 = vld [vmem:[%s319 + $0xa60] sm:$0xff]
        %v747 = vld [vmem:[%s319 + $0xa68] sm:$0xff]
        %v748 = vld [vmem:[%s319 + $0xa70] sm:$0xff]
        %v749 = vld [vmem:[%s319 + $0xa78] sm:$0xff]
        %v750 = vld [vmem:[%s319 + $0xa80] sm:$0xff]
        %v751 = vld [vmem:[%s319 + $0xa88] sm:$0xff]
        %v752 = vld [vmem:[%s319 + $0xa90] sm:$0xff]
        %v753 = vld [vmem:[%s319 + $0xa98] sm:$0xff]
        %v754 = vld [vmem:[%s319 + $0xaa0] sm:$0xff]
        %v755 = vld [vmem:[%s319 + $0xaa8] sm:$0xff]
        %v756 = vld [vmem:[%s319 + $0xab0] sm:$0xff]
        %v757 = vld [vmem:[%s319 + $0xab8] sm:$0xff]
        %v758 = vld [vmem:[%s319 + $0xac0] sm:$0xff]
        %v759 = vld [vmem:[%s319 + $0xac8] sm:$0xff]
        %v760 = vld [vmem:[%s319 + $0xad0] sm:$0xff]
        %v761 = vld [vmem:[%s319 + $0xad8] sm:$0xff]
        %v762 = vld [vmem:[%s319 + $0xae0] sm:$0xff]
        %v763 = vld [vmem:[%s319 + $0xae8] sm:$0xff]
        %v764 = vld [vmem:[%s319 + $0xaf0] sm:$0xff]
        %v765 = vld [vmem:[%s319 + $0xaf8] sm:$0xff]
        %v766 = vld [vmem:[%s319 + $0xb00] sm:$0xff]
        %v767 = vld [vmem:[%s319 + $0xb08] sm:$0xff]
        %v768 = vld [vmem:[%s319 + $0xb10] sm:$0xff]
        %v769 = vld [vmem:[%s319 + $0xb18] sm:$0xff]
        %v770 = vld [vmem:[%s319 + $0xb20] sm:$0xff]
        %v771 = vld [vmem:[%s319 + $0xb28] sm:$0xff]
        %v772 = vld [vmem:[%s319 + $0xb30] sm:$0xff]
        %v773 = vld [vmem:[%s319 + $0xb38] sm:$0xff]
        %v774 = vld [vmem:[%s319 + $0xb40] sm:$0xff]
        %v775 = vld [vmem:[%s319 + $0xb48] sm:$0xff]
        %v776 = vld [vmem:[%s319 + $0xb50] sm:$0xff]
        %v777 = vld [vmem:[%s319 + $0xb58] sm:$0xff]
        %v778 = vld [vmem:[%s319 + $0xb60] sm:$0xff]
        %v779 = vld [vmem:[%s319 + $0xb68] sm:$0xff]
        %v780 = vld [vmem:[%s319 + $0xb70] sm:$0xff]
        %v781 = vld [vmem:[%s319 + $0xb78] sm:$0xff]
        %v782 = vld [vmem:[%s319 + $0xb80] sm:$0xff]
        %v783 = vld [vmem:[%s319 + $0xb88] sm:$0xff]
        %v784 = vld [vmem:[%s319 + $0xb90] sm:$0xff]
        %v785 = vld [vmem:[%s319 + $0xb98] sm:$0xff]
        %v786 = vld [vmem:[%s319 + $0xba0] sm:$0xff]
        %v787 = vld [vmem:[%s319 + $0xba8] sm:$0xff]
        %v788 = vld [vmem:[%s319 + $0xbb0] sm:$0xff]
        %v789 = vld [vmem:[%s319 + $0xbb8] sm:$0xff]
        %v790 = vld [vmem:[%s319 + $0xbc0] sm:$0xff]
        %v791 = vld [vmem:[%s319 + $0xbc8] sm:$0xff]
        %v792 = vld [vmem:[%s319 + $0xbd0] sm:$0xff]
        %v793 = vld [vmem:[%s319 + $0xbd8] sm:$0xff]
        %v794 = vld [vmem:[%s319 + $0xbe0] sm:$0xff]
        %v795 = vld [vmem:[%s319 + $0xbe8] sm:$0xff]
        %v796 = vld [vmem:[%s319 + $0xbf0] sm:$0xff]
        %v797 = vld [vmem:[%s319 + $0xbf8] sm:$0xff]
        %v798 = vld [vmem:[%s319 + $0xc00] sm:$0xff]
        %v799 = vld [vmem:[%s319 + $0xc08] sm:$0xff]
        %v800 = vld [vmem:[%s319 + $0xc10] sm:$0xff]
        %v801 = vld [vmem:[%s319 + $0xc18] sm:$0xff]
        %v802 = vld [vmem:[%s319 + $0xc20] sm:$0xff]
        %v803 = vld [vmem:[%s319 + $0xc28] sm:$0xff]
        %v804 = vld [vmem:[%s319 + $0xc30] sm:$0xff]
        %v805 = vld [vmem:[%s319 + $0xc38] sm:$0xff]
        %v806 = vld [vmem:[%s319 + $0xc40] sm:$0xff]
        %v807 = vld [vmem:[%s319 + $0xc48] sm:$0xff]
        %v808 = vld [vmem:[%s319 + $0xc50] sm:$0xff]
        %v809 = vld [vmem:[%s319 + $0xc58] sm:$0xff]
        %v810 = vld [vmem:[%s319 + $0xc60] sm:$0xff]
        %v811 = vld [vmem:[%s319 + $0xc68] sm:$0xff]
        %v812 = vld [vmem:[%s319 + $0xc70] sm:$0xff]
        %v813 = vld [vmem:[%s319 + $0xc78] sm:$0xff]
        %v814 = vld [vmem:[%s319 + $0xc80] sm:$0xff]
        %v815 = vld [vmem:[%s319 + $0xc88] sm:$0xff]
        %v816 = vld [vmem:[%s319 + $0xc90] sm:$0xff]
        %v817 = vld [vmem:[%s319 + $0xc98] sm:$0xff]
        %v818 = vld [vmem:[%s319 + $0xca0] sm:$0xff]
        %v819 = vld [vmem:[%s319 + $0xca8] sm:$0xff]
        %v820 = vld [vmem:[%s319 + $0xcb0] sm:$0xff]
        %v821 = vld [vmem:[%s319 + $0xcb8] sm:$0xff]
        %v822 = vld [vmem:[%s319 + $0xcc0] sm:$0xff]
        %v823 = vld [vmem:[%s319 + $0xcc8] sm:$0xff]
        %v824 = vld [vmem:[%s319 + $0xcd0] sm:$0xff]
        %v825 = vld [vmem:[%s319 + $0xcd8] sm:$0xff]
        %v826 = vld [vmem:[%s319 + $0xce0] sm:$0xff]
        %v827 = vld [vmem:[%s319 + $0xce8] sm:$0xff]
        %v828 = vld [vmem:[%s319 + $0xcf0] sm:$0xff]
        %v829 = vld [vmem:[%s319 + $0xcf8] sm:$0xff]
        %v830 = vld [vmem:[%s319 + $0xd00] sm:$0xff]
        %v831 = vld [vmem:[%s319 + $0xd08] sm:$0xff]
        %v832 = vld [vmem:[%s319 + $0xd10] sm:$0xff]
        %v833 = vld [vmem:[%s319 + $0xd18] sm:$0xff]
        %v834 = vld [vmem:[%s319 + $0xd20] sm:$0xff]
        %v835 = vld [vmem:[%s319 + $0xd28] sm:$0xff]
        %v836 = vld [vmem:[%s319 + $0xd30] sm:$0xff]
        %v837 = vld [vmem:[%s319 + $0xd38] sm:$0xff]
        %v838 = vld [vmem:[%s319 + $0xd40] sm:$0xff]
        %v839 = vld [vmem:[%s319 + $0xd48] sm:$0xff]
        %v840 = vld [vmem:[%s319 + $0xd50] sm:$0xff]
        %v841 = vld [vmem:[%s319 + $0xd58] sm:$0xff]
        %v842 = vld [vmem:[%s319 + $0xd60] sm:$0xff]
        %v843 = vld [vmem:[%s319 + $0xd68] sm:$0xff]
        %v844 = vld [vmem:[%s319 + $0xd70] sm:$0xff]
        %v845 = vld [vmem:[%s319 + $0xd78] sm:$0xff]
        %v846 = vld [vmem:[%s319 + $0xd80] sm:$0xff]
        %v847 = vld [vmem:[%s319 + $0xd88] sm:$0xff]
        %v848 = vld [vmem:[%s319 + $0xd90] sm:$0xff]
        %v849 = vld [vmem:[%s319 + $0xd98] sm:$0xff]
        %v850 = vld [vmem:[%s319 + $0xda0] sm:$0xff]
        %v851 = vld [vmem:[%s319 + $0xda8] sm:$0xff]
        %v852 = vld [vmem:[%s319 + $0xdb0] sm:$0xff]
        %v853 = vld [vmem:[%s319 + $0xdb8] sm:$0xff]
        %v854 = vld [vmem:[%s319 + $0xdc0] sm:$0xff]
        %v855 = vld [vmem:[%s319 + $0xdc8] sm:$0xff]
        %v856 = vld [vmem:[%s319 + $0xdd0] sm:$0xff]
        %v857 = vld [vmem:[%s319 + $0xdd8] sm:$0xff]
        %v858 = vld [vmem:[%s319 + $0xde0] sm:$0xff]
        %v859 = vld [vmem:[%s319 + $0xde8] sm:$0xff]
        %v860 = vld [vmem:[%s319 + $0xdf0] sm:$0xff]
        %v861 = vld [vmem:[%s319 + $0xdf8] sm:$0xff]
        %v862 = vld [vmem:[%s319 + $0xe00] sm:$0xff]
        %v863 = vld [vmem:[%s319 + $0xe08] sm:$0xff]
        %v864 = vld [vmem:[%s319 + $0xe10] sm:$0xff]
        %v865 = vld [vmem:[%s319 + $0xe18] sm:$0xff]
        %v866 = vld [vmem:[%s319 + $0xe20] sm:$0xff]
        %v867 = vld [vmem:[%s319 + $0xe28] sm:$0xff]
        %v868 = vld [vmem:[%s319 + $0xe30] sm:$0xff]
        %v869 = vld [vmem:[%s319 + $0xe38] sm:$0xff]
        %v870 = vld [vmem:[%s319 + $0xe40] sm:$0xff]
        %v871 = vld [vmem:[%s319 + $0xe48] sm:$0xff]
        %v872 = vld [vmem:[%s319 + $0xe50] sm:$0xff]
        %v873 = vld [vmem:[%s319 + $0xe58] sm:$0xff]
        %v874 = vld [vmem:[%s319 + $0xe60] sm:$0xff]
        %v875 = vld [vmem:[%s319 + $0xe68] sm:$0xff]
        %v876 = vld [vmem:[%s319 + $0xe70] sm:$0xff]
        %v877 = vld [vmem:[%s319 + $0xe78] sm:$0xff]
        %v878 = vld [vmem:[%s319 + $0xe80] sm:$0xff]
        %v879 = vld [vmem:[%s319 + $0xe88] sm:$0xff]
        %v880 = vld [vmem:[%s319 + $0xe90] sm:$0xff]
        %v881 = vld [vmem:[%s319 + $0xe98] sm:$0xff]
        %v882 = vld [vmem:[%s319 + $0xea0] sm:$0xff]
        %v883 = vld [vmem:[%s319 + $0xea8] sm:$0xff]
        %v884 = vld [vmem:[%s319 + $0xeb0] sm:$0xff]
        %v885 = vld [vmem:[%s319 + $0xeb8] sm:$0xff]
        %v886 = vld [vmem:[%s319 + $0xec0] sm:$0xff]
        %v887 = vld [vmem:[%s319 + $0xec8] sm:$0xff]
        %v888 = vld [vmem:[%s319 + $0xed0] sm:$0xff]
        %v889 = vld [vmem:[%s319 + $0xed8] sm:$0xff]
        %v890 = vld [vmem:[%s319 + $0xee0] sm:$0xff]
        %v891 = vld [vmem:[%s319 + $0xee8] sm:$0xff]
        %v892 = vld [vmem:[%s319 + $0xef0] sm:$0xff]
        %v893 = vld [vmem:[%s319 + $0xef8] sm:$0xff]
        %v894 = vld [vmem:[%s319 + $0xf00] sm:$0xff]
        %v895 = vld [vmem:[%s319 + $0xf08] sm:$0xff]
        %v896 = vld [vmem:[%s319 + $0xf10] sm:$0xff]
        %v897 = vld [vmem:[%s319 + $0xf18] sm:$0xff]
        %v898 = vld [vmem:[%s319 + $0xf20] sm:$0xff]
        %v899 = vld [vmem:[%s319 + $0xf28] sm:$0xff]
        %v900 = vld [vmem:[%s319 + $0xf30] sm:$0xff]
        %v901 = vld [vmem:[%s319 + $0xf38] sm:$0xff]
        %v902 = vld [vmem:[%s319 + $0xf40] sm:$0xff]
        %v903 = vld [vmem:[%s319 + $0xf48] sm:$0xff]
        %v904 = vld [vmem:[%s319 + $0xf50] sm:$0xff]
        %v905 = vld [vmem:[%s319 + $0xf58] sm:$0xff]
        %v906 = vld [vmem:[%s319 + $0xf60] sm:$0xff]
        %v907 = vld [vmem:[%s319 + $0xf68] sm:$0xff]
        %v908 = vld [vmem:[%s319 + $0xf70] sm:$0xff]
        %v909 = vld [vmem:[%s319 + $0xf78] sm:$0xff]
        %v910 = vld [vmem:[%s319 + $0xf80] sm:$0xff]
        %v911 = vld [vmem:[%s319 + $0xf88] sm:$0xff]
        %v912 = vld [vmem:[%s319 + $0xf90] sm:$0xff]
        %v913 = vld [vmem:[%s319 + $0xf98] sm:$0xff]
        %v914 = vld [vmem:[%s319 + $0xfa0] sm:$0xff]
        %v915 = vld [vmem:[%s319 + $0xfa8] sm:$0xff]
        %v916 = vld [vmem:[%s319 + $0xfb0] sm:$0xff]
        %v917 = vld [vmem:[%s319 + $0xfb8] sm:$0xff]
        %v918 = vld [vmem:[%s319 + $0xfc0] sm:$0xff]
        %v919 = vld [vmem:[%s319 + $0xfc8] sm:$0xff]
        %v920 = vld [vmem:[%s319 + $0xfd0] sm:$0xff]
        %v921 = vld [vmem:[%s319 + $0xfd8] sm:$0xff]
        %v922 = vld [vmem:[%s319 + $0xfe0] sm:$0xff]
        %v923 = vld [vmem:[%s319 + $0xfe8] sm:$0xff]
        %v924 = vld [vmem:[%s319 + $0xff0] sm:$0xff]
        %v925 = vld [vmem:[%s319 + $0xff8] sm:$0xff]
        %v926 = vld [vmem:[%s319 + $0x1000] sm:$0xff]
        %v927 = vld [vmem:[%s319 + $0x1008] sm:$0xff]
        %v928 = vld [vmem:[%s319 + $0x1010] sm:$0xff]
        %v929 = vld [vmem:[%s319 + $0x1018] sm:$0xff]
        %v930 = vld [vmem:[%s319 + $0x1020] sm:$0xff]
        %v931 = vld [vmem:[%s319 + $0x1028] sm:$0xff]
        %v932 = vld [vmem:[%s319 + $0x1030] sm:$0xff]
        %v933 = vld [vmem:[%s319 + $0x1038] sm:$0xff]
        %v934 = vld [vmem:[%s319 + $0x1040] sm:$0xff]
        %v935 = vld [vmem:[%s319 + $0x1048] sm:$0xff]
        %v936 = vld [vmem:[%s319 + $0x1050] sm:$0xff]
        %v937 = vld [vmem:[%s319 + $0x1058] sm:$0xff]
        %v938 = vld [vmem:[%s319 + $0x1060] sm:$0xff]
        %v939 = vld [vmem:[%s319 + $0x1068] sm:$0xff]
        %v940 = vld [vmem:[%s319 + $0x1070] sm:$0xff]
        %v941 = vld [vmem:[%s319 + $0x1078] sm:$0xff]
        %v942 = vld [vmem:[%s319 + $0x1080] sm:$0xff]
        %v943 = vld [vmem:[%s319 + $0x1088] sm:$0xff]
        %v944 = vld [vmem:[%s319 + $0x1090] sm:$0xff]
        %v945 = vld [vmem:[%s319 + $0x1098] sm:$0xff]
        %v946 = vld [vmem:[%s319 + $0x10a0] sm:$0xff]
        %v947 = vld [vmem:[%s319 + $0x10a8] sm:$0xff]
        %v948 = vld [vmem:[%s319 + $0x10b0] sm:$0xff]
        %v949 = vld [vmem:[%s319 + $0x10b8] sm:$0xff]
        %v950 = vld [vmem:[%s319 + $0x10c0] sm:$0xff]
        %v951 = vld [vmem:[%s319 + $0x10c8] sm:$0xff]
        %v952 = vld [vmem:[%s319 + $0x10d0] sm:$0xff]
        %v953 = vld [vmem:[%s319 + $0x10d8] sm:$0xff]
        %v954 = vld [vmem:[%s319 + $0x10e0] sm:$0xff]
        %v955 = vld [vmem:[%s319 + $0x10e8] sm:$0xff]
        %v956 = vld [vmem:[%s319 + $0x10f0] sm:$0xff]
        %v957 = vld [vmem:[%s319 + $0x10f8] sm:$0xff]
        %v958 = vld [vmem:[%s319 + $0x1100] sm:$0xff]
        %v959 = vld [vmem:[%s319 + $0x1108] sm:$0xff]
        %v960 = vld [vmem:[%s319 + $0x1110] sm:$0xff]
        %v961 = vld [vmem:[%s319 + $0x1118] sm:$0xff]
        %v962 = vld [vmem:[%s319 + $0x1120] sm:$0xff]
        %v963 = vld [vmem:[%s319 + $0x1128] sm:$0xff]
        %v964 = vld [vmem:[%s319 + $0x1130] sm:$0xff]
        %v965 = vld [vmem:[%s319 + $0x1138] sm:$0xff]
        %v966 = vld [vmem:[%s319 + $0x1140] sm:$0xff]
        %v967 = vld [vmem:[%s319 + $0x1148] sm:$0xff]
        %v968 = vld [vmem:[%s319 + $0x1150] sm:$0xff]
        %v969 = vld [vmem:[%s319 + $0x1158] sm:$0xff]
        %v970 = vld [vmem:[%s319 + $0x1160] sm:$0xff]
        %v971 = vld [vmem:[%s319 + $0x1168] sm:$0xff]
        %v972 = vld [vmem:[%s319 + $0x1170] sm:$0xff]
        %v973 = vld [vmem:[%s319 + $0x1178] sm:$0xff]
        %v974 = vld [vmem:[%s319 + $0x1180] sm:$0xff]
        %v975 = vld [vmem:[%s319 + $0x1188] sm:$0xff]
        %v976 = vld [vmem:[%s319 + $0x1190] sm:$0xff]
        %v977 = vld [vmem:[%s319 + $0x1198] sm:$0xff]
        %v978 = vld [vmem:[%s319 + $0x11a0] sm:$0xff]
        %v979 = vld [vmem:[%s319 + $0x11a8] sm:$0xff]
        %v980 = vld [vmem:[%s319 + $0x11b0] sm:$0xff]
        %v981 = vld [vmem:[%s319 + $0x11b8] sm:$0xff]
        %v982 = vld [vmem:[%s319 + $0x11c0] sm:$0xff]
        %v983 = vld [vmem:[%s319 + $0x11c8] sm:$0xff]
        %v984 = vld [vmem:[%s319 + $0x11d0] sm:$0xff]
        %v985 = vld [vmem:[%s319 + $0x11d8] sm:$0xff]
        %v986 = vld [vmem:[%s319 + $0x11e0] sm:$0xff]
        %v987 = vld [vmem:[%s319 + $0x11e8] sm:$0xff]
        %v988 = vld [vmem:[%s319 + $0x11f0] sm:$0xff]
        %v989 = vld [vmem:[%s319 + $0x11f8] sm:$0xff]
        %v991 = vlaneseq
        %v992 = vshrl.u32 %v991, 7
        %v993 = vsub.s32 0, %v992
        %v994 = vrot.slane %v412, %v993
        %v995 = vlaneseq
        %v996 = vshrl.u32 %v995, 7
        %v997 = vsub.s32 1, %v996
        %v998 = vrot.slane %v412, %v997
        %v999 = vlaneseq
        %v1000 = vshrl.u32 %v999, 7
        %v1001 = vsub.s32 2, %v1000
        %v1002 = vrot.slane %v412, %v1001
        %v1003 = vlaneseq
        %v1004 = vshrl.u32 %v1003, 7
        %v1005 = vsub.s32 3, %v1004
        %v1006 = vrot.slane %v412, %v1005
        %v1007 = vlaneseq
        %v1008 = vshrl.u32 %v1007, 7
        %v1009 = vsub.s32 4, %v1008
        %v1010 = vrot.slane %v412, %v1009
        %v1011 = vlaneseq
        %v1012 = vshrl.u32 %v1011, 7
        %v1013 = vsub.s32 5, %v1012
        %v1014 = vrot.slane %v412, %v1013
        %v1597 = vunpack.c.l.b16 %v414
        %v1598 = vunpack.c.h.b16 %v414
        %v1599 = vunpack.c.l.b16 %v415
        %v1600 = vunpack.c.h.b16 %v415
        %v1601 = vunpack.c.l.b16 %v416
        %v1602 = vunpack.c.h.b16 %v416
        %v1603 = vunpack.c.l.b16 %v417
        %v1604 = vunpack.c.h.b16 %v417
        %v1605 = vunpack.c.l.b16 %v418
        %v1606 = vunpack.c.h.b16 %v418
        %v1607 = vunpack.c.l.b16 %v419
        %v1608 = vunpack.c.h.b16 %v419
        %v1609 = vunpack.c.l.b16 %v420
        %v1610 = vunpack.c.h.b16 %v420
        %v1611 = vunpack.c.l.b16 %v421
        %v1612 = vunpack.c.h.b16 %v421
        %v1613 = vunpack.c.l.b16 %v422
        %v1614 = vunpack.c.h.b16 %v422
        %v1615 = vunpack.c.l.b16 %v423
        %v1616 = vunpack.c.h.b16 %v423
        %v1617 = vunpack.c.l.b16 %v424
        %v1618 = vunpack.c.h.b16 %v424
        %v1619 = vunpack.c.l.b16 %v425
        %v1620 = vunpack.c.h.b16 %v425
        %v1621 = vunpack.c.l.b16 %v426
        %v1622 = vunpack.c.h.b16 %v426
        %v1623 = vunpack.c.l.b16 %v427
        %v1624 = vunpack.c.h.b16 %v427
        %v1625 = vunpack.c.l.b16 %v428
        %v1626 = vunpack.c.h.b16 %v428
        %v1627 = vunpack.c.l.b16 %v429
        %v1628 = vunpack.c.h.b16 %v429
        %v1629 = vunpack.c.l.b16 %v430
        %v1630 = vunpack.c.h.b16 %v430
        %v1631 = vunpack.c.l.b16 %v431
        %v1632 = vunpack.c.h.b16 %v431
        %v1633 = vunpack.c.l.b16 %v432
        %v1634 = vunpack.c.h.b16 %v432
        %v1635 = vunpack.c.l.b16 %v433
        %v1636 = vunpack.c.h.b16 %v433
        %v1637 = vunpack.c.l.b16 %v434
        %v1638 = vunpack.c.h.b16 %v434
        %v1639 = vunpack.c.l.b16 %v435
        %v1640 = vunpack.c.h.b16 %v435
        %v1641 = vunpack.c.l.b16 %v436
        %v1642 = vunpack.c.h.b16 %v436
        %v1643 = vunpack.c.l.b16 %v437
        %v1644 = vunpack.c.h.b16 %v437
        %v1645 = vunpack.c.l.b16 %v438
        %v1646 = vunpack.c.h.b16 %v438
        %v1647 = vunpack.c.l.b16 %v439
        %v1648 = vunpack.c.h.b16 %v439
        %v1649 = vunpack.c.l.b16 %v440
        %v1650 = vunpack.c.h.b16 %v440
        %v1651 = vunpack.c.l.b16 %v441
        %v1652 = vunpack.c.h.b16 %v441
        %v1653 = vunpack.c.l.b16 %v442
        %v1654 = vunpack.c.h.b16 %v442
        %v1655 = vunpack.c.l.b16 %v443
        %v1656 = vunpack.c.h.b16 %v443
        %v1657 = vunpack.c.l.b16 %v444
        %v1658 = vunpack.c.h.b16 %v444
        %v1659 = vunpack.c.l.b16 %v445
        %v1660 = vunpack.c.h.b16 %v445
        %v1661 = vunpack.c.l.b16 %v446
        %v1662 = vunpack.c.h.b16 %v446
        %v1663 = vunpack.c.l.b16 %v447
        %v1664 = vunpack.c.h.b16 %v447
        %v1665 = vunpack.c.l.b16 %v448
        %v1666 = vunpack.c.h.b16 %v448
        %v1667 = vunpack.c.l.b16 %v449
        %v1668 = vunpack.c.h.b16 %v449
        %v1669 = vunpack.c.l.b16 %v450
        %v1670 = vunpack.c.h.b16 %v450
        %v1671 = vunpack.c.l.b16 %v451
        %v1672 = vunpack.c.h.b16 %v451
        %v1673 = vunpack.c.l.b16 %v452
        %v1674 = vunpack.c.h.b16 %v452
        %v1675 = vunpack.c.l.b16 %v453
        %v1676 = vunpack.c.h.b16 %v453
        %v1677 = vunpack.c.l.b16 %v454
        %v1678 = vunpack.c.h.b16 %v454
        %v1679 = vunpack.c.l.b16 %v455
        %v1680 = vunpack.c.h.b16 %v455
        %v1681 = vunpack.c.l.b16 %v456
        %v1682 = vunpack.c.h.b16 %v456
        %v1683 = vunpack.c.l.b16 %v457
        %v1684 = vunpack.c.h.b16 %v457
        %v1685 = vunpack.c.l.b16 %v458
        %v1686 = vunpack.c.h.b16 %v458
        %v1687 = vunpack.c.l.b16 %v459
        %v1688 = vunpack.c.h.b16 %v459
        %v1689 = vunpack.c.l.b16 %v460
        %v1690 = vunpack.c.h.b16 %v460
        %v1691 = vunpack.c.l.b16 %v461
        %v1692 = vunpack.c.h.b16 %v461
        %v1693 = vunpack.c.l.b16 %v462
        %v1694 = vunpack.c.h.b16 %v462
        %v1695 = vunpack.c.l.b16 %v463
        %v1696 = vunpack.c.h.b16 %v463
        %v1697 = vunpack.c.l.b16 %v464
        %v1698 = vunpack.c.h.b16 %v464
        %v1699 = vunpack.c.l.b16 %v465
        %v1700 = vunpack.c.h.b16 %v465
        %v1701 = vunpack.c.l.b16 %v466
        %v1702 = vunpack.c.h.b16 %v466
        %v1703 = vunpack.c.l.b16 %v467
        %v1704 = vunpack.c.h.b16 %v467
        %v1705 = vunpack.c.l.b16 %v468
        %v1706 = vunpack.c.h.b16 %v468
        %v1707 = vunpack.c.l.b16 %v469
        %v1708 = vunpack.c.h.b16 %v469
        %v1709 = vunpack.c.l.b16 %v470
        %v1710 = vunpack.c.h.b16 %v470
        %v1711 = vunpack.c.l.b16 %v471
        %v1712 = vunpack.c.h.b16 %v471
        %v1713 = vunpack.c.l.b16 %v472
        %v1714 = vunpack.c.h.b16 %v472
        %v1715 = vunpack.c.l.b16 %v473
        %v1716 = vunpack.c.h.b16 %v473
        %v1717 = vunpack.c.l.b16 %v474
        %v1718 = vunpack.c.h.b16 %v474
        %v1719 = vunpack.c.l.b16 %v475
        %v1720 = vunpack.c.h.b16 %v475
        %v1721 = vunpack.c.l.b16 %v476
        %v1722 = vunpack.c.h.b16 %v476
        %v1723 = vunpack.c.l.b16 %v477
        %v1724 = vunpack.c.h.b16 %v477
        %v1725 = vunpack.c.l.b16 %v478
        %v1726 = vunpack.c.h.b16 %v478
        %v1727 = vunpack.c.l.b16 %v479
        %v1728 = vunpack.c.h.b16 %v479
        %v1729 = vunpack.c.l.b16 %v480
        %v1730 = vunpack.c.h.b16 %v480
        %v1731 = vunpack.c.l.b16 %v481
        %v1732 = vunpack.c.h.b16 %v481
        %v1733 = vunpack.c.l.b16 %v482
        %v1734 = vunpack.c.h.b16 %v482
        %v1735 = vunpack.c.l.b16 %v483
        %v1736 = vunpack.c.h.b16 %v483
        %v1737 = vunpack.c.l.b16 %v484
        %v1738 = vunpack.c.h.b16 %v484
        %v1739 = vunpack.c.l.b16 %v485
        %v1740 = vunpack.c.h.b16 %v485
        %v1741 = vunpack.c.l.b16 %v486
        %v1742 = vunpack.c.h.b16 %v486
        %v1743 = vunpack.c.l.b16 %v487
        %v1744 = vunpack.c.h.b16 %v487
        %v1745 = vunpack.c.l.b16 %v488
        %v1746 = vunpack.c.h.b16 %v488
        %v1747 = vunpack.c.l.b16 %v489
        %v1748 = vunpack.c.h.b16 %v489
        %v1749 = vunpack.c.l.b16 %v490
        %v1750 = vunpack.c.h.b16 %v490
        %v1751 = vunpack.c.l.b16 %v491
        %v1752 = vunpack.c.h.b16 %v491
        %v1753 = vunpack.c.l.b16 %v492
        %v1754 = vunpack.c.h.b16 %v492
        %v1755 = vunpack.c.l.b16 %v493
        %v1756 = vunpack.c.h.b16 %v493
        %v1757 = vunpack.c.l.b16 %v494
        %v1758 = vunpack.c.h.b16 %v494
        %v1759 = vunpack.c.l.b16 %v495
        %v1760 = vunpack.c.h.b16 %v495
        %v1761 = vunpack.c.l.b16 %v496
        %v1762 = vunpack.c.h.b16 %v496
        %v1763 = vunpack.c.l.b16 %v497
        %v1764 = vunpack.c.h.b16 %v497
        %v1765 = vunpack.c.l.b16 %v498
        %v1766 = vunpack.c.h.b16 %v498
        %v1767 = vunpack.c.l.b16 %v499
        %v1768 = vunpack.c.h.b16 %v499
        %v1769 = vunpack.c.l.b16 %v500
        %v1770 = vunpack.c.h.b16 %v500
        %v1771 = vunpack.c.l.b16 %v501
        %v1772 = vunpack.c.h.b16 %v501
        %v1773 = vunpack.c.l.b16 %v502
        %v1774 = vunpack.c.h.b16 %v502
        %v1775 = vunpack.c.l.b16 %v503
        %v1776 = vunpack.c.h.b16 %v503
        %v1777 = vunpack.c.l.b16 %v504
        %v1778 = vunpack.c.h.b16 %v504
        %v1779 = vunpack.c.l.b16 %v505
        %v1780 = vunpack.c.h.b16 %v505
        %v1781 = vunpack.c.l.b16 %v506
        %v1782 = vunpack.c.h.b16 %v506
        %v1783 = vunpack.c.l.b16 %v507
        %v1784 = vunpack.c.h.b16 %v507
        %v1785 = vunpack.c.l.b16 %v508
        %v1786 = vunpack.c.h.b16 %v508
        %v1787 = vunpack.c.l.b16 %v509
        %v1788 = vunpack.c.h.b16 %v509
        %v1789 = vunpack.c.l.b16 %v510
        %v1790 = vunpack.c.h.b16 %v510
        %v1791 = vunpack.c.l.b16 %v511
        %v1792 = vunpack.c.h.b16 %v511
        %v1793 = vunpack.c.l.b16 %v512
        %v1794 = vunpack.c.h.b16 %v512
        %v1795 = vunpack.c.l.b16 %v513
        %v1796 = vunpack.c.h.b16 %v513
        %v1797 = vunpack.c.l.b16 %v514
        %v1798 = vunpack.c.h.b16 %v514
        %v1799 = vunpack.c.l.b16 %v515
        %v1800 = vunpack.c.h.b16 %v515
        %v1801 = vunpack.c.l.b16 %v516
        %v1802 = vunpack.c.h.b16 %v516
        %v1803 = vunpack.c.l.b16 %v517
        %v1804 = vunpack.c.h.b16 %v517
        %v1805 = vunpack.c.l.b16 %v518
        %v1806 = vunpack.c.h.b16 %v518
        %v1807 = vunpack.c.l.b16 %v519
        %v1808 = vunpack.c.h.b16 %v519
        %v1809 = vunpack.c.l.b16 %v520
        %v1810 = vunpack.c.h.b16 %v520
        %v1811 = vunpack.c.l.b16 %v521
        %v1812 = vunpack.c.h.b16 %v521
        %v1813 = vunpack.c.l.b16 %v522
        %v1814 = vunpack.c.h.b16 %v522
        %v1815 = vunpack.c.l.b16 %v523
        %v1816 = vunpack.c.h.b16 %v523
        %v1817 = vunpack.c.l.b16 %v524
        %v1818 = vunpack.c.h.b16 %v524
        %v1819 = vunpack.c.l.b16 %v525
        %v1820 = vunpack.c.h.b16 %v525
        %v1821 = vunpack.c.l.b16 %v526
        %v1822 = vunpack.c.h.b16 %v526
        %v1823 = vunpack.c.l.b16 %v527
        %v1824 = vunpack.c.h.b16 %v527
        %v1825 = vunpack.c.l.b16 %v528
        %v1826 = vunpack.c.h.b16 %v528
        %v1827 = vunpack.c.l.b16 %v529
        %v1828 = vunpack.c.h.b16 %v529
        %v1829 = vunpack.c.l.b16 %v530
        %v1830 = vunpack.c.h.b16 %v530
        %v1831 = vunpack.c.l.b16 %v531
        %v1832 = vunpack.c.h.b16 %v531
        %v1833 = vunpack.c.l.b16 %v532
        %v1834 = vunpack.c.h.b16 %v532
        %v1835 = vunpack.c.l.b16 %v533
        %v1836 = vunpack.c.h.b16 %v533
        %v1837 = vunpack.c.l.b16 %v534
        %v1838 = vunpack.c.h.b16 %v534
        %v1839 = vunpack.c.l.b16 %v535
        %v1840 = vunpack.c.h.b16 %v535
        %v1841 = vunpack.c.l.b16 %v536
        %v1842 = vunpack.c.h.b16 %v536
        %v1843 = vunpack.c.l.b16 %v537
        %v1844 = vunpack.c.h.b16 %v537
        %v1845 = vunpack.c.l.b16 %v538
        %v1846 = vunpack.c.h.b16 %v538
        %v1847 = vunpack.c.l.b16 %v539
        %v1848 = vunpack.c.h.b16 %v539
        %v1849 = vunpack.c.l.b16 %v540
        %v1850 = vunpack.c.h.b16 %v540
        %v1851 = vunpack.c.l.b16 %v541
        %v1852 = vunpack.c.h.b16 %v541
        %v1853 = vunpack.c.l.b16 %v542
        %v1854 = vunpack.c.h.b16 %v542
        %v1855 = vunpack.c.l.b16 %v543
        %v1856 = vunpack.c.h.b16 %v543
        %v1857 = vunpack.c.l.b16 %v544
        %v1858 = vunpack.c.h.b16 %v544
        %v1859 = vunpack.c.l.b16 %v545
        %v1860 = vunpack.c.h.b16 %v545
        %v1861 = vunpack.c.l.b16 %v546
        %v1862 = vunpack.c.h.b16 %v546
        %v1863 = vunpack.c.l.b16 %v547
        %v1864 = vunpack.c.h.b16 %v547
        %v1865 = vunpack.c.l.b16 %v548
        %v1866 = vunpack.c.h.b16 %v548
        %v1867 = vunpack.c.l.b16 %v549
        %v1868 = vunpack.c.h.b16 %v549
        %v1869 = vunpack.c.l.b16 %v550
        %v1870 = vunpack.c.h.b16 %v550
        %v1871 = vunpack.c.l.b16 %v551
        %v1872 = vunpack.c.h.b16 %v551
        %v1873 = vunpack.c.l.b16 %v552
        %v1874 = vunpack.c.h.b16 %v552
        %v1875 = vunpack.c.l.b16 %v553
        %v1876 = vunpack.c.h.b16 %v553
        %v1877 = vunpack.c.l.b16 %v554
        %v1878 = vunpack.c.h.b16 %v554
        %v1879 = vunpack.c.l.b16 %v555
        %v1880 = vunpack.c.h.b16 %v555
        %v1881 = vunpack.c.l.b16 %v556
        %v1882 = vunpack.c.h.b16 %v556
        %v1883 = vunpack.c.l.b16 %v557
        %v1884 = vunpack.c.h.b16 %v557
        %v1885 = vunpack.c.l.b16 %v558
        %v1886 = vunpack.c.h.b16 %v558
        %v1887 = vunpack.c.l.b16 %v559
        %v1888 = vunpack.c.h.b16 %v559
        %v1889 = vunpack.c.l.b16 %v560
        %v1890 = vunpack.c.h.b16 %v560
        %v1891 = vunpack.c.l.b16 %v561
        %v1892 = vunpack.c.h.b16 %v561
        %v1893 = vunpack.c.l.b16 %v562
        %v1894 = vunpack.c.h.b16 %v562
        %v1895 = vunpack.c.l.b16 %v563
        %v1896 = vunpack.c.h.b16 %v563
        %v1897 = vunpack.c.l.b16 %v564
        %v1898 = vunpack.c.h.b16 %v564
        %v1899 = vunpack.c.l.b16 %v565
        %v1900 = vunpack.c.h.b16 %v565
        %v1901 = vunpack.c.l.b16 %v566
        %v1902 = vunpack.c.h.b16 %v566
        %v1903 = vunpack.c.l.b16 %v567
        %v1904 = vunpack.c.h.b16 %v567
        %v1905 = vunpack.c.l.b16 %v568
        %v1906 = vunpack.c.h.b16 %v568
        %v1907 = vunpack.c.l.b16 %v569
        %v1908 = vunpack.c.h.b16 %v569
        %v1909 = vunpack.c.l.b16 %v570
        %v1910 = vunpack.c.h.b16 %v570
        %v1911 = vunpack.c.l.b16 %v571
        %v1912 = vunpack.c.h.b16 %v571
        %v1913 = vunpack.c.l.b16 %v572
        %v1914 = vunpack.c.h.b16 %v572
        %v1915 = vunpack.c.l.b16 %v573
        %v1916 = vunpack.c.h.b16 %v573
        %v1917 = vunpack.c.l.b16 %v574
        %v1918 = vunpack.c.h.b16 %v574
        %v1919 = vunpack.c.l.b16 %v575
        %v1920 = vunpack.c.h.b16 %v575
        %v1921 = vunpack.c.l.b16 %v576
        %v1922 = vunpack.c.h.b16 %v576
        %v1923 = vunpack.c.l.b16 %v577
        %v1924 = vunpack.c.h.b16 %v577
        %v1925 = vunpack.c.l.b16 %v578
        %v1926 = vunpack.c.h.b16 %v578
        %v1927 = vunpack.c.l.b16 %v579
        %v1928 = vunpack.c.h.b16 %v579
        %v1929 = vunpack.c.l.b16 %v580
        %v1930 = vunpack.c.h.b16 %v580
        %v1931 = vunpack.c.l.b16 %v581
        %v1932 = vunpack.c.h.b16 %v581
        %v1933 = vunpack.c.l.b16 %v582
        %v1934 = vunpack.c.h.b16 %v582
        %v1935 = vunpack.c.l.b16 %v583
        %v1936 = vunpack.c.h.b16 %v583
        %v1937 = vunpack.c.l.b16 %v584
        %v1938 = vunpack.c.h.b16 %v584
        %v1939 = vunpack.c.l.b16 %v585
        %v1940 = vunpack.c.h.b16 %v585
        %v1941 = vunpack.c.l.b16 %v586
        %v1942 = vunpack.c.h.b16 %v586
        %v1943 = vunpack.c.l.b16 %v587
        %v1944 = vunpack.c.h.b16 %v587
        %v1945 = vunpack.c.l.b16 %v588
        %v1946 = vunpack.c.h.b16 %v588
        %v1947 = vunpack.c.l.b16 %v589
        %v1948 = vunpack.c.h.b16 %v589
        %v1949 = vunpack.c.l.b16 %v590
        %v1950 = vunpack.c.h.b16 %v590
        %v1951 = vunpack.c.l.b16 %v591
        %v1952 = vunpack.c.h.b16 %v591
        %v1953 = vunpack.c.l.b16 %v592
        %v1954 = vunpack.c.h.b16 %v592
        %v1955 = vunpack.c.l.b16 %v593
        %v1956 = vunpack.c.h.b16 %v593
        %v1957 = vunpack.c.l.b16 %v594
        %v1958 = vunpack.c.h.b16 %v594
        %v1959 = vunpack.c.l.b16 %v595
        %v1960 = vunpack.c.h.b16 %v595
        %v1961 = vunpack.c.l.b16 %v596
        %v1962 = vunpack.c.h.b16 %v596
        %v1963 = vunpack.c.l.b16 %v597
        %v1964 = vunpack.c.h.b16 %v597
        %v1965 = vunpack.c.l.b16 %v598
        %v1966 = vunpack.c.h.b16 %v598
        %v1967 = vunpack.c.l.b16 %v599
        %v1968 = vunpack.c.h.b16 %v599
        %v1969 = vunpack.c.l.b16 %v600
        %v1970 = vunpack.c.h.b16 %v600
        %v1971 = vunpack.c.l.b16 %v601
        %v1972 = vunpack.c.h.b16 %v601
        %v1973 = vunpack.c.l.b16 %v602
        %v1974 = vunpack.c.h.b16 %v602
        %v1975 = vunpack.c.l.b16 %v603
        %v1976 = vunpack.c.h.b16 %v603
        %v1977 = vunpack.c.l.b16 %v604
        %v1978 = vunpack.c.h.b16 %v604
        %v1979 = vunpack.c.l.b16 %v605
        %v1980 = vunpack.c.h.b16 %v605
        %v1981 = vunpack.c.l.b16 %v606
        %v1982 = vunpack.c.h.b16 %v606
        %v1983 = vunpack.c.l.b16 %v607
        %v1984 = vunpack.c.h.b16 %v607
        %v1985 = vunpack.c.l.b16 %v608
        %v1986 = vunpack.c.h.b16 %v608
        %v1987 = vunpack.c.l.b16 %v609
        %v1988 = vunpack.c.h.b16 %v609
        %v1989 = vunpack.c.l.b16 %v610
        %v1990 = vunpack.c.h.b16 %v610
        %v1991 = vunpack.c.l.b16 %v611
        %v1992 = vunpack.c.h.b16 %v611
        %v1993 = vunpack.c.l.b16 %v612
        %v1994 = vunpack.c.h.b16 %v612
        %v1995 = vunpack.c.l.b16 %v613
        %v1996 = vunpack.c.h.b16 %v613
        %v1997 = vunpack.c.l.b16 %v614
        %v1998 = vunpack.c.h.b16 %v614
        %v1999 = vunpack.c.l.b16 %v615
        %v2000 = vunpack.c.h.b16 %v615
        %v2001 = vunpack.c.l.b16 %v616
        %v2002 = vunpack.c.h.b16 %v616
        %v2003 = vunpack.c.l.b16 %v617
        %v2004 = vunpack.c.h.b16 %v617
        %v2005 = vunpack.c.l.b16 %v618
        %v2006 = vunpack.c.h.b16 %v618
        %v2007 = vunpack.c.l.b16 %v619
        %v2008 = vunpack.c.h.b16 %v619
        %v2009 = vunpack.c.l.b16 %v620
        %v2010 = vunpack.c.h.b16 %v620
        %v2011 = vunpack.c.l.b16 %v621
        %v2012 = vunpack.c.h.b16 %v621
        %v2013 = vunpack.c.l.b16 %v622
        %v2014 = vunpack.c.h.b16 %v622
        %v2015 = vunpack.c.l.b16 %v623
        %v2016 = vunpack.c.h.b16 %v623
        %v2017 = vunpack.c.l.b16 %v624
        %v2018 = vunpack.c.h.b16 %v624
        %v2019 = vunpack.c.l.b16 %v625
        %v2020 = vunpack.c.h.b16 %v625
        %v2021 = vunpack.c.l.b16 %v626
        %v2022 = vunpack.c.h.b16 %v626
        %v2023 = vunpack.c.l.b16 %v627
        %v2024 = vunpack.c.h.b16 %v627
        %v2025 = vunpack.c.l.b16 %v628
        %v2026 = vunpack.c.h.b16 %v628
        %v2027 = vunpack.c.l.b16 %v629
        %v2028 = vunpack.c.h.b16 %v629
        %v2029 = vunpack.c.l.b16 %v630
        %v2030 = vunpack.c.h.b16 %v630
        %v2031 = vunpack.c.l.b16 %v631
        %v2032 = vunpack.c.h.b16 %v631
        %v2033 = vunpack.c.l.b16 %v632
        %v2034 = vunpack.c.h.b16 %v632
        %v2035 = vunpack.c.l.b16 %v633
        %v2036 = vunpack.c.h.b16 %v633
        %v2037 = vunpack.c.l.b16 %v634
        %v2038 = vunpack.c.h.b16 %v634
        %v2039 = vunpack.c.l.b16 %v635
        %v2040 = vunpack.c.h.b16 %v635
        %v2041 = vunpack.c.l.b16 %v636
        %v2042 = vunpack.c.h.b16 %v636
        %v2043 = vunpack.c.l.b16 %v637
        %v2044 = vunpack.c.h.b16 %v637
        %v2045 = vunpack.c.l.b16 %v638
        %v2046 = vunpack.c.h.b16 %v638
        %v2047 = vunpack.c.l.b16 %v639
        %v2048 = vunpack.c.h.b16 %v639
        %v2049 = vunpack.c.l.b16 %v640
        %v2050 = vunpack.c.h.b16 %v640
        %v2051 = vunpack.c.l.b16 %v641
        %v2052 = vunpack.c.h.b16 %v641
        %v2053 = vunpack.c.l.b16 %v642
        %v2054 = vunpack.c.h.b16 %v642
        %v2055 = vunpack.c.l.b16 %v643
        %v2056 = vunpack.c.h.b16 %v643
        %v2057 = vunpack.c.l.b16 %v644
        %v2058 = vunpack.c.h.b16 %v644
        %v2059 = vunpack.c.l.b16 %v645
        %v2060 = vunpack.c.h.b16 %v645
        %v2061 = vunpack.c.l.b16 %v646
        %v2062 = vunpack.c.h.b16 %v646
        %v2063 = vunpack.c.l.b16 %v647
        %v2064 = vunpack.c.h.b16 %v647
        %v2065 = vunpack.c.l.b16 %v648
        %v2066 = vunpack.c.h.b16 %v648
        %v2067 = vunpack.c.l.b16 %v649
        %v2068 = vunpack.c.h.b16 %v649
        %v2069 = vunpack.c.l.b16 %v650
        %v2070 = vunpack.c.h.b16 %v650
        %v2071 = vunpack.c.l.b16 %v651
        %v2072 = vunpack.c.h.b16 %v651
        %v2073 = vunpack.c.l.b16 %v652
        %v2074 = vunpack.c.h.b16 %v652
        %v2075 = vunpack.c.l.b16 %v653
        %v2076 = vunpack.c.h.b16 %v653
        %v2077 = vunpack.c.l.b16 %v654
        %v2078 = vunpack.c.h.b16 %v654
        %v2079 = vunpack.c.l.b16 %v655
        %v2080 = vunpack.c.h.b16 %v655
        %v2081 = vunpack.c.l.b16 %v656
        %v2082 = vunpack.c.h.b16 %v656
        %v2083 = vunpack.c.l.b16 %v657
        %v2084 = vunpack.c.h.b16 %v657
        %v2085 = vunpack.c.l.b16 %v658
        %v2086 = vunpack.c.h.b16 %v658
        %v2087 = vunpack.c.l.b16 %v659
        %v2088 = vunpack.c.h.b16 %v659
        %v2089 = vunpack.c.l.b16 %v660
        %v2090 = vunpack.c.h.b16 %v660
        %v2091 = vunpack.c.l.b16 %v661
        %v2092 = vunpack.c.h.b16 %v661
        %v2093 = vunpack.c.l.b16 %v662
        %v2094 = vunpack.c.h.b16 %v662
        %v2095 = vunpack.c.l.b16 %v663
        %v2096 = vunpack.c.h.b16 %v663
        %v2097 = vunpack.c.l.b16 %v664
        %v2098 = vunpack.c.h.b16 %v664
        %v2099 = vunpack.c.l.b16 %v665
        %v2100 = vunpack.c.h.b16 %v665
        %v2101 = vunpack.c.l.b16 %v666
        %v2102 = vunpack.c.h.b16 %v666
        %v2103 = vunpack.c.l.b16 %v667
        %v2104 = vunpack.c.h.b16 %v667
        %v2105 = vunpack.c.l.b16 %v668
        %v2106 = vunpack.c.h.b16 %v668
        %v2107 = vunpack.c.l.b16 %v669
        %v2108 = vunpack.c.h.b16 %v669
        %v2109 = vunpack.c.l.b16 %v670
        %v2110 = vunpack.c.h.b16 %v670
        %v2111 = vunpack.c.l.b16 %v671
        %v2112 = vunpack.c.h.b16 %v671
        %v2113 = vunpack.c.l.b16 %v672
        %v2114 = vunpack.c.h.b16 %v672
        %v2115 = vunpack.c.l.b16 %v673
        %v2116 = vunpack.c.h.b16 %v673
        %v2117 = vunpack.c.l.b16 %v674
        %v2118 = vunpack.c.h.b16 %v674
        %v2119 = vunpack.c.l.b16 %v675
        %v2120 = vunpack.c.h.b16 %v675
        %v2121 = vunpack.c.l.b16 %v676
        %v2122 = vunpack.c.h.b16 %v676
        %v2123 = vunpack.c.l.b16 %v677
        %v2124 = vunpack.c.h.b16 %v677
        %v2125 = vunpack.c.l.b16 %v678
        %v2126 = vunpack.c.h.b16 %v678
        %v2127 = vunpack.c.l.b16 %v679
        %v2128 = vunpack.c.h.b16 %v679
        %v2129 = vunpack.c.l.b16 %v680
        %v2130 = vunpack.c.h.b16 %v680
        %v2131 = vunpack.c.l.b16 %v681
        %v2132 = vunpack.c.h.b16 %v681
        %v2133 = vunpack.c.l.b16 %v682
        %v2134 = vunpack.c.h.b16 %v682
        %v2135 = vunpack.c.l.b16 %v683
        %v2136 = vunpack.c.h.b16 %v683
        %v2137 = vunpack.c.l.b16 %v684
        %v2138 = vunpack.c.h.b16 %v684
        %v2139 = vunpack.c.l.b16 %v685
        %v2140 = vunpack.c.h.b16 %v685
        %v2141 = vunpack.c.l.b16 %v686
        %v2142 = vunpack.c.h.b16 %v686
        %v2143 = vunpack.c.l.b16 %v687
        %v2144 = vunpack.c.h.b16 %v687
        %v2145 = vunpack.c.l.b16 %v688
        %v2146 = vunpack.c.h.b16 %v688
        %v2147 = vunpack.c.l.b16 %v689
        %v2148 = vunpack.c.h.b16 %v689
        %v2149 = vunpack.c.l.b16 %v690
        %v2150 = vunpack.c.h.b16 %v690
        %v2151 = vunpack.c.l.b16 %v691
        %v2152 = vunpack.c.h.b16 %v691
        %v2153 = vunpack.c.l.b16 %v692
        %v2154 = vunpack.c.h.b16 %v692
        %v2155 = vunpack.c.l.b16 %v693
        %v2156 = vunpack.c.h.b16 %v693
        %v2157 = vunpack.c.l.b16 %v694
        %v2158 = vunpack.c.h.b16 %v694
        %v2159 = vunpack.c.l.b16 %v695
        %v2160 = vunpack.c.h.b16 %v695
        %v2161 = vunpack.c.l.b16 %v696
        %v2162 = vunpack.c.h.b16 %v696
        %v2163 = vunpack.c.l.b16 %v697
        %v2164 = vunpack.c.h.b16 %v697
        %v2165 = vunpack.c.l.b16 %v698
        %v2166 = vunpack.c.h.b16 %v698
        %v2167 = vunpack.c.l.b16 %v699
        %v2168 = vunpack.c.h.b16 %v699
        %v2169 = vunpack.c.l.b16 %v700
        %v2170 = vunpack.c.h.b16 %v700
        %v2171 = vunpack.c.l.b16 %v701
        %v2172 = vunpack.c.h.b16 %v701
        %v2173 = vunpack.c.l.b16 %v702
        %v2174 = vunpack.c.h.b16 %v702
        %v2175 = vunpack.c.l.b16 %v703
        %v2176 = vunpack.c.h.b16 %v703
        %v2177 = vunpack.c.l.b16 %v704
        %v2178 = vunpack.c.h.b16 %v704
        %v2179 = vunpack.c.l.b16 %v705
        %v2180 = vunpack.c.h.b16 %v705
        %v2181 = vunpack.c.l.b16 %v706
        %v2182 = vunpack.c.h.b16 %v706
        %v2183 = vunpack.c.l.b16 %v707
        %v2184 = vunpack.c.h.b16 %v707
        %v2185 = vunpack.c.l.b16 %v708
        %v2186 = vunpack.c.h.b16 %v708
        %v2187 = vunpack.c.l.b16 %v709
        %v2188 = vunpack.c.h.b16 %v709
        %v2189 = vunpack.c.l.b16 %v710
        %v2190 = vunpack.c.h.b16 %v710
        %v2191 = vunpack.c.l.b16 %v711
        %v2192 = vunpack.c.h.b16 %v711
        %v2193 = vunpack.c.l.b16 %v712
        %v2194 = vunpack.c.h.b16 %v712
        %v2195 = vunpack.c.l.b16 %v713
        %v2196 = vunpack.c.h.b16 %v713
        %v2197 = vunpack.c.l.b16 %v714
        %v2198 = vunpack.c.h.b16 %v714
        %v2199 = vunpack.c.l.b16 %v715
        %v2200 = vunpack.c.h.b16 %v715
        %v2201 = vunpack.c.l.b16 %v716
        %v2202 = vunpack.c.h.b16 %v716
        %v2203 = vunpack.c.l.b16 %v717
        %v2204 = vunpack.c.h.b16 %v717
        %v2205 = vunpack.c.l.b16 %v718
        %v2206 = vunpack.c.h.b16 %v718
        %v2207 = vunpack.c.l.b16 %v719
        %v2208 = vunpack.c.h.b16 %v719
        %v2209 = vunpack.c.l.b16 %v720
        %v2210 = vunpack.c.h.b16 %v720
        %v2211 = vunpack.c.l.b16 %v721
        %v2212 = vunpack.c.h.b16 %v721
        %v2213 = vunpack.c.l.b16 %v722
        %v2214 = vunpack.c.h.b16 %v722
        %v2215 = vunpack.c.l.b16 %v723
        %v2216 = vunpack.c.h.b16 %v723
        %v2217 = vunpack.c.l.b16 %v724
        %v2218 = vunpack.c.h.b16 %v724
        %v2219 = vunpack.c.l.b16 %v725
        %v2220 = vunpack.c.h.b16 %v725
        %v2221 = vunpack.c.l.b16 %v726
        %v2222 = vunpack.c.h.b16 %v726
        %v2223 = vunpack.c.l.b16 %v727
        %v2224 = vunpack.c.h.b16 %v727
        %v2225 = vunpack.c.l.b16 %v728
        %v2226 = vunpack.c.h.b16 %v728
        %v2227 = vunpack.c.l.b16 %v729
        %v2228 = vunpack.c.h.b16 %v729
        %v2229 = vunpack.c.l.b16 %v730
        %v2230 = vunpack.c.h.b16 %v730
        %v2231 = vunpack.c.l.b16 %v731
        %v2232 = vunpack.c.h.b16 %v731
        %v2233 = vunpack.c.l.b16 %v732
        %v2234 = vunpack.c.h.b16 %v732
        %v2235 = vunpack.c.l.b16 %v733
        %v2236 = vunpack.c.h.b16 %v733
        %v2237 = vunpack.c.l.b16 %v734
        %v2238 = vunpack.c.h.b16 %v734
        %v2239 = vunpack.c.l.b16 %v735
        %v2240 = vunpack.c.h.b16 %v735
        %v2241 = vunpack.c.l.b16 %v736
        %v2242 = vunpack.c.h.b16 %v736
        %v2243 = vunpack.c.l.b16 %v737
        %v2244 = vunpack.c.h.b16 %v737
        %v2245 = vunpack.c.l.b16 %v738
        %v2246 = vunpack.c.h.b16 %v738
        %v2247 = vunpack.c.l.b16 %v739
        %v2248 = vunpack.c.h.b16 %v739
        %v2249 = vunpack.c.l.b16 %v740
        %v2250 = vunpack.c.h.b16 %v740
        %v2251 = vunpack.c.l.b16 %v741
        %v2252 = vunpack.c.h.b16 %v741
        %v2253 = vunpack.c.l.b16 %v742
        %v2254 = vunpack.c.h.b16 %v742
        %v2255 = vunpack.c.l.b16 %v743
        %v2256 = vunpack.c.h.b16 %v743
        %v2257 = vunpack.c.l.b16 %v744
        %v2258 = vunpack.c.h.b16 %v744
        %v2259 = vunpack.c.l.b16 %v745
        %v2260 = vunpack.c.h.b16 %v745
        %v2261 = vunpack.c.l.b16 %v746
        %v2262 = vunpack.c.h.b16 %v746
        %v2263 = vunpack.c.l.b16 %v747
        %v2264 = vunpack.c.h.b16 %v747
        %v2265 = vunpack.c.l.b16 %v748
        %v2266 = vunpack.c.h.b16 %v748
        %v2267 = vunpack.c.l.b16 %v749
        %v2268 = vunpack.c.h.b16 %v749
        %v2269 = vunpack.c.l.b16 %v750
        %v2270 = vunpack.c.h.b16 %v750
        %v2271 = vunpack.c.l.b16 %v751
        %v2272 = vunpack.c.h.b16 %v751
        %v2273 = vunpack.c.l.b16 %v752
        %v2274 = vunpack.c.h.b16 %v752
        %v2275 = vunpack.c.l.b16 %v753
        %v2276 = vunpack.c.h.b16 %v753
        %v2277 = vunpack.c.l.b16 %v754
        %v2278 = vunpack.c.h.b16 %v754
        %v2279 = vunpack.c.l.b16 %v755
        %v2280 = vunpack.c.h.b16 %v755
        %v2281 = vunpack.c.l.b16 %v756
        %v2282 = vunpack.c.h.b16 %v756
        %v2283 = vunpack.c.l.b16 %v757
        %v2284 = vunpack.c.h.b16 %v757
        %v2285 = vunpack.c.l.b16 %v758
        %v2286 = vunpack.c.h.b16 %v758
        %v2287 = vunpack.c.l.b16 %v759
        %v2288 = vunpack.c.h.b16 %v759
        %v2289 = vunpack.c.l.b16 %v760
        %v2290 = vunpack.c.h.b16 %v760
        %v2291 = vunpack.c.l.b16 %v761
        %v2292 = vunpack.c.h.b16 %v761
        %v2293 = vunpack.c.l.b16 %v762
        %v2294 = vunpack.c.h.b16 %v762
        %v2295 = vunpack.c.l.b16 %v763
        %v2296 = vunpack.c.h.b16 %v763
        %v2297 = vunpack.c.l.b16 %v764
        %v2298 = vunpack.c.h.b16 %v764
        %v2299 = vunpack.c.l.b16 %v765
        %v2300 = vunpack.c.h.b16 %v765
        %v2301 = vunpack.c.l.b16 %v766
        %v2302 = vunpack.c.h.b16 %v766
        %v2303 = vunpack.c.l.b16 %v767
        %v2304 = vunpack.c.h.b16 %v767
        %v2305 = vunpack.c.l.b16 %v768
        %v2306 = vunpack.c.h.b16 %v768
        %v2307 = vunpack.c.l.b16 %v769
        %v2308 = vunpack.c.h.b16 %v769
        %v2309 = vunpack.c.l.b16 %v770
        %v2310 = vunpack.c.h.b16 %v770
        %v2311 = vunpack.c.l.b16 %v771
        %v2312 = vunpack.c.h.b16 %v771
        %v2313 = vunpack.c.l.b16 %v772
        %v2314 = vunpack.c.h.b16 %v772
        %v2315 = vunpack.c.l.b16 %v773
        %v2316 = vunpack.c.h.b16 %v773
        %v2317 = vunpack.c.l.b16 %v774
        %v2318 = vunpack.c.h.b16 %v774
        %v2319 = vunpack.c.l.b16 %v775
        %v2320 = vunpack.c.h.b16 %v775
        %v2321 = vunpack.c.l.b16 %v776
        %v2322 = vunpack.c.h.b16 %v776
        %v2323 = vunpack.c.l.b16 %v777
        %v2324 = vunpack.c.h.b16 %v777
        %v2325 = vunpack.c.l.b16 %v778
        %v2326 = vunpack.c.h.b16 %v778
        %v2327 = vunpack.c.l.b16 %v779
        %v2328 = vunpack.c.h.b16 %v779
        %v2329 = vunpack.c.l.b16 %v780
        %v2330 = vunpack.c.h.b16 %v780
        %v2331 = vunpack.c.l.b16 %v781
        %v2332 = vunpack.c.h.b16 %v781
        %v2333 = vunpack.c.l.b16 %v782
        %v2334 = vunpack.c.h.b16 %v782
        %v2335 = vunpack.c.l.b16 %v783
        %v2336 = vunpack.c.h.b16 %v783
        %v2337 = vunpack.c.l.b16 %v784
        %v2338 = vunpack.c.h.b16 %v784
        %v2339 = vunpack.c.l.b16 %v785
        %v2340 = vunpack.c.h.b16 %v785
        %v2341 = vunpack.c.l.b16 %v786
        %v2342 = vunpack.c.h.b16 %v786
        %v2343 = vunpack.c.l.b16 %v787
        %v2344 = vunpack.c.h.b16 %v787
        %v2345 = vunpack.c.l.b16 %v788
        %v2346 = vunpack.c.h.b16 %v788
        %v2347 = vunpack.c.l.b16 %v789
        %v2348 = vunpack.c.h.b16 %v789
        %v2349 = vunpack.c.l.b16 %v790
        %v2350 = vunpack.c.h.b16 %v790
        %v2351 = vunpack.c.l.b16 %v791
        %v2352 = vunpack.c.h.b16 %v791
        %v2353 = vunpack.c.l.b16 %v792
        %v2354 = vunpack.c.h.b16 %v792
        %v2355 = vunpack.c.l.b16 %v793
        %v2356 = vunpack.c.h.b16 %v793
        %v2357 = vunpack.c.l.b16 %v794
        %v2358 = vunpack.c.h.b16 %v794
        %v2359 = vunpack.c.l.b16 %v795
        %v2360 = vunpack.c.h.b16 %v795
        %v2361 = vunpack.c.l.b16 %v796
        %v2362 = vunpack.c.h.b16 %v796
        %v2363 = vunpack.c.l.b16 %v797
        %v2364 = vunpack.c.h.b16 %v797
        %v2365 = vunpack.c.l.b16 %v798
        %v2366 = vunpack.c.h.b16 %v798
        %v2367 = vunpack.c.l.b16 %v799
        %v2368 = vunpack.c.h.b16 %v799
        %v2369 = vunpack.c.l.b16 %v800
        %v2370 = vunpack.c.h.b16 %v800
        %v2371 = vunpack.c.l.b16 %v801
        %v2372 = vunpack.c.h.b16 %v801
        %v2373 = vunpack.c.l.b16 %v802
        %v2374 = vunpack.c.h.b16 %v802
        %v2375 = vunpack.c.l.b16 %v803
        %v2376 = vunpack.c.h.b16 %v803
        %v2377 = vunpack.c.l.b16 %v804
        %v2378 = vunpack.c.h.b16 %v804
        %v2379 = vunpack.c.l.b16 %v805
        %v2380 = vunpack.c.h.b16 %v805
        %v2381 = vunpack.c.l.b16 %v806
        %v2382 = vunpack.c.h.b16 %v806
        %v2383 = vunpack.c.l.b16 %v807
        %v2384 = vunpack.c.h.b16 %v807
        %v2385 = vunpack.c.l.b16 %v808
        %v2386 = vunpack.c.h.b16 %v808
        %v2387 = vunpack.c.l.b16 %v809
        %v2388 = vunpack.c.h.b16 %v809
        %v2389 = vunpack.c.l.b16 %v810
        %v2390 = vunpack.c.h.b16 %v810
        %v2391 = vunpack.c.l.b16 %v811
        %v2392 = vunpack.c.h.b16 %v811
        %v2393 = vunpack.c.l.b16 %v812
        %v2394 = vunpack.c.h.b16 %v812
        %v2395 = vunpack.c.l.b16 %v813
        %v2396 = vunpack.c.h.b16 %v813
        %v2397 = vunpack.c.l.b16 %v814
        %v2398 = vunpack.c.h.b16 %v814
        %v2399 = vunpack.c.l.b16 %v815
        %v2400 = vunpack.c.h.b16 %v815
        %v2401 = vunpack.c.l.b16 %v816
        %v2402 = vunpack.c.h.b16 %v816
        %v2403 = vunpack.c.l.b16 %v817
        %v2404 = vunpack.c.h.b16 %v817
        %v2405 = vunpack.c.l.b16 %v818
        %v2406 = vunpack.c.h.b16 %v818
        %v2407 = vunpack.c.l.b16 %v819
        %v2408 = vunpack.c.h.b16 %v819
        %v2409 = vunpack.c.l.b16 %v820
        %v2410 = vunpack.c.h.b16 %v820
        %v2411 = vunpack.c.l.b16 %v821
        %v2412 = vunpack.c.h.b16 %v821
        %v2413 = vunpack.c.l.b16 %v822
        %v2414 = vunpack.c.h.b16 %v822
        %v2415 = vunpack.c.l.b16 %v823
        %v2416 = vunpack.c.h.b16 %v823
        %v2417 = vunpack.c.l.b16 %v824
        %v2418 = vunpack.c.h.b16 %v824
        %v2419 = vunpack.c.l.b16 %v825
        %v2420 = vunpack.c.h.b16 %v825
        %v2421 = vunpack.c.l.b16 %v826
        %v2422 = vunpack.c.h.b16 %v826
        %v2423 = vunpack.c.l.b16 %v827
        %v2424 = vunpack.c.h.b16 %v827
        %v2425 = vunpack.c.l.b16 %v828
        %v2426 = vunpack.c.h.b16 %v828
        %v2427 = vunpack.c.l.b16 %v829
        %v2428 = vunpack.c.h.b16 %v829
        %v2429 = vunpack.c.l.b16 %v830
        %v2430 = vunpack.c.h.b16 %v830
        %v2431 = vunpack.c.l.b16 %v831
        %v2432 = vunpack.c.h.b16 %v831
        %v2433 = vunpack.c.l.b16 %v832
        %v2434 = vunpack.c.h.b16 %v832
        %v2435 = vunpack.c.l.b16 %v833
        %v2436 = vunpack.c.h.b16 %v833
        %v2437 = vunpack.c.l.b16 %v834
        %v2438 = vunpack.c.h.b16 %v834
        %v2439 = vunpack.c.l.b16 %v835
        %v2440 = vunpack.c.h.b16 %v835
        %v2441 = vunpack.c.l.b16 %v836
        %v2442 = vunpack.c.h.b16 %v836
        %v2443 = vunpack.c.l.b16 %v837
        %v2444 = vunpack.c.h.b16 %v837
        %v2445 = vunpack.c.l.b16 %v838
        %v2446 = vunpack.c.h.b16 %v838
        %v2447 = vunpack.c.l.b16 %v839
        %v2448 = vunpack.c.h.b16 %v839
        %v2449 = vunpack.c.l.b16 %v840
        %v2450 = vunpack.c.h.b16 %v840
        %v2451 = vunpack.c.l.b16 %v841
        %v2452 = vunpack.c.h.b16 %v841
        %v2453 = vunpack.c.l.b16 %v842
        %v2454 = vunpack.c.h.b16 %v842
        %v2455 = vunpack.c.l.b16 %v843
        %v2456 = vunpack.c.h.b16 %v843
        %v2457 = vunpack.c.l.b16 %v844
        %v2458 = vunpack.c.h.b16 %v844
        %v2459 = vunpack.c.l.b16 %v845
        %v2460 = vunpack.c.h.b16 %v845
        %v2461 = vunpack.c.l.b16 %v846
        %v2462 = vunpack.c.h.b16 %v846
        %v2463 = vunpack.c.l.b16 %v847
        %v2464 = vunpack.c.h.b16 %v847
        %v2465 = vunpack.c.l.b16 %v848
        %v2466 = vunpack.c.h.b16 %v848
        %v2467 = vunpack.c.l.b16 %v849
        %v2468 = vunpack.c.h.b16 %v849
        %v2469 = vunpack.c.l.b16 %v850
        %v2470 = vunpack.c.h.b16 %v850
        %v2471 = vunpack.c.l.b16 %v851
        %v2472 = vunpack.c.h.b16 %v851
        %v2473 = vunpack.c.l.b16 %v852
        %v2474 = vunpack.c.h.b16 %v852
        %v2475 = vunpack.c.l.b16 %v853
        %v2476 = vunpack.c.h.b16 %v853
        %v2477 = vunpack.c.l.b16 %v854
        %v2478 = vunpack.c.h.b16 %v854
        %v2479 = vunpack.c.l.b16 %v855
        %v2480 = vunpack.c.h.b16 %v855
        %v2481 = vunpack.c.l.b16 %v856
        %v2482 = vunpack.c.h.b16 %v856
        %v2483 = vunpack.c.l.b16 %v857
        %v2484 = vunpack.c.h.b16 %v857
        %v2485 = vunpack.c.l.b16 %v858
        %v2486 = vunpack.c.h.b16 %v858
        %v2487 = vunpack.c.l.b16 %v859
        %v2488 = vunpack.c.h.b16 %v859
        %v2489 = vunpack.c.l.b16 %v860
        %v2490 = vunpack.c.h.b16 %v860
        %v2491 = vunpack.c.l.b16 %v861
        %v2492 = vunpack.c.h.b16 %v861
        %v2493 = vunpack.c.l.b16 %v862
        %v2494 = vunpack.c.h.b16 %v862
        %v2495 = vunpack.c.l.b16 %v863
        %v2496 = vunpack.c.h.b16 %v863
        %v2497 = vunpack.c.l.b16 %v864
        %v2498 = vunpack.c.h.b16 %v864
        %v2499 = vunpack.c.l.b16 %v865
        %v2500 = vunpack.c.h.b16 %v865
        %v2501 = vunpack.c.l.b16 %v866
        %v2502 = vunpack.c.h.b16 %v866
        %v2503 = vunpack.c.l.b16 %v867
        %v2504 = vunpack.c.h.b16 %v867
        %v2505 = vunpack.c.l.b16 %v868
        %v2506 = vunpack.c.h.b16 %v868
        %v2507 = vunpack.c.l.b16 %v869
        %v2508 = vunpack.c.h.b16 %v869
        %v2509 = vunpack.c.l.b16 %v870
        %v2510 = vunpack.c.h.b16 %v870
        %v2511 = vunpack.c.l.b16 %v871
        %v2512 = vunpack.c.h.b16 %v871
        %v2513 = vunpack.c.l.b16 %v872
        %v2514 = vunpack.c.h.b16 %v872
        %v2515 = vunpack.c.l.b16 %v873
        %v2516 = vunpack.c.h.b16 %v873
        %v2517 = vunpack.c.l.b16 %v874
        %v2518 = vunpack.c.h.b16 %v874
        %v2519 = vunpack.c.l.b16 %v875
        %v2520 = vunpack.c.h.b16 %v875
        %v2521 = vunpack.c.l.b16 %v876
        %v2522 = vunpack.c.h.b16 %v876
        %v2523 = vunpack.c.l.b16 %v877
        %v2524 = vunpack.c.h.b16 %v877
        %v2525 = vunpack.c.l.b16 %v878
        %v2526 = vunpack.c.h.b16 %v878
        %v2527 = vunpack.c.l.b16 %v879
        %v2528 = vunpack.c.h.b16 %v879
        %v2529 = vunpack.c.l.b16 %v880
        %v2530 = vunpack.c.h.b16 %v880
        %v2531 = vunpack.c.l.b16 %v881
        %v2532 = vunpack.c.h.b16 %v881
        %v2533 = vunpack.c.l.b16 %v882
        %v2534 = vunpack.c.h.b16 %v882
        %v2535 = vunpack.c.l.b16 %v883
        %v2536 = vunpack.c.h.b16 %v883
        %v2537 = vunpack.c.l.b16 %v884
        %v2538 = vunpack.c.h.b16 %v884
        %v2539 = vunpack.c.l.b16 %v885
        %v2540 = vunpack.c.h.b16 %v885
        %v2541 = vunpack.c.l.b16 %v886
        %v2542 = vunpack.c.h.b16 %v886
        %v2543 = vunpack.c.l.b16 %v887
        %v2544 = vunpack.c.h.b16 %v887
        %v2545 = vunpack.c.l.b16 %v888
        %v2546 = vunpack.c.h.b16 %v888
        %v2547 = vunpack.c.l.b16 %v889
        %v2548 = vunpack.c.h.b16 %v889
        %v2549 = vunpack.c.l.b16 %v890
        %v2550 = vunpack.c.h.b16 %v890
        %v2551 = vunpack.c.l.b16 %v891
        %v2552 = vunpack.c.h.b16 %v891
        %v2553 = vunpack.c.l.b16 %v892
        %v2554 = vunpack.c.h.b16 %v892
        %v2555 = vunpack.c.l.b16 %v893
        %v2556 = vunpack.c.h.b16 %v893
        %v2557 = vunpack.c.l.b16 %v894
        %v2558 = vunpack.c.h.b16 %v894
        %v2559 = vunpack.c.l.b16 %v895
        %v2560 = vunpack.c.h.b16 %v895
        %v2561 = vunpack.c.l.b16 %v896
        %v2562 = vunpack.c.h.b16 %v896
        %v2563 = vunpack.c.l.b16 %v897
        %v2564 = vunpack.c.h.b16 %v897
        %v2565 = vunpack.c.l.b16 %v898
        %v2566 = vunpack.c.h.b16 %v898
        %v2567 = vunpack.c.l.b16 %v899
        %v2568 = vunpack.c.h.b16 %v899
        %v2569 = vunpack.c.l.b16 %v900
        %v2570 = vunpack.c.h.b16 %v900
        %v2571 = vunpack.c.l.b16 %v901
        %v2572 = vunpack.c.h.b16 %v901
        %v2573 = vunpack.c.l.b16 %v902
        %v2574 = vunpack.c.h.b16 %v902
        %v2575 = vunpack.c.l.b16 %v903
        %v2576 = vunpack.c.h.b16 %v903
        %v2577 = vunpack.c.l.b16 %v904
        %v2578 = vunpack.c.h.b16 %v904
        %v2579 = vunpack.c.l.b16 %v905
        %v2580 = vunpack.c.h.b16 %v905
        %v2581 = vunpack.c.l.b16 %v906
        %v2582 = vunpack.c.h.b16 %v906
        %v2583 = vunpack.c.l.b16 %v907
        %v2584 = vunpack.c.h.b16 %v907
        %v2585 = vunpack.c.l.b16 %v908
        %v2586 = vunpack.c.h.b16 %v908
        %v2587 = vunpack.c.l.b16 %v909
        %v2588 = vunpack.c.h.b16 %v909
        %v2589 = vunpack.c.l.b16 %v910
        %v2590 = vunpack.c.h.b16 %v910
        %v2591 = vunpack.c.l.b16 %v911
        %v2592 = vunpack.c.h.b16 %v911
        %v2593 = vunpack.c.l.b16 %v912
        %v2594 = vunpack.c.h.b16 %v912
        %v2595 = vunpack.c.l.b16 %v913
        %v2596 = vunpack.c.h.b16 %v913
        %v2597 = vunpack.c.l.b16 %v914
        %v2598 = vunpack.c.h.b16 %v914
        %v2599 = vunpack.c.l.b16 %v915
        %v2600 = vunpack.c.h.b16 %v915
        %v2601 = vunpack.c.l.b16 %v916
        %v2602 = vunpack.c.h.b16 %v916
        %v2603 = vunpack.c.l.b16 %v917
        %v2604 = vunpack.c.h.b16 %v917
        %v2605 = vunpack.c.l.b16 %v918
        %v2606 = vunpack.c.h.b16 %v918
        %v2607 = vunpack.c.l.b16 %v919
        %v2608 = vunpack.c.h.b16 %v919
        %v2609 = vunpack.c.l.b16 %v920
        %v2610 = vunpack.c.h.b16 %v920
        %v2611 = vunpack.c.l.b16 %v921
        %v2612 = vunpack.c.h.b16 %v921
        %v2613 = vunpack.c.l.b16 %v922
        %v2614 = vunpack.c.h.b16 %v922
        %v2615 = vunpack.c.l.b16 %v923
        %v2616 = vunpack.c.h.b16 %v923
        %v2617 = vunpack.c.l.b16 %v924
        %v2618 = vunpack.c.h.b16 %v924
        %v2619 = vunpack.c.l.b16 %v925
        %v2620 = vunpack.c.h.b16 %v925
        %v2621 = vunpack.c.l.b16 %v926
        %v2622 = vunpack.c.h.b16 %v926
        %v2623 = vunpack.c.l.b16 %v927
        %v2624 = vunpack.c.h.b16 %v927
        %v2625 = vunpack.c.l.b16 %v928
        %v2626 = vunpack.c.h.b16 %v928
        %v2627 = vunpack.c.l.b16 %v929
        %v2628 = vunpack.c.h.b16 %v929
        %v2629 = vunpack.c.l.b16 %v930
        %v2630 = vunpack.c.h.b16 %v930
        %v2631 = vunpack.c.l.b16 %v931
        %v2632 = vunpack.c.h.b16 %v931
        %v2633 = vunpack.c.l.b16 %v932
        %v2634 = vunpack.c.h.b16 %v932
        %v2635 = vunpack.c.l.b16 %v933
        %v2636 = vunpack.c.h.b16 %v933
        %v2637 = vunpack.c.l.b16 %v934
        %v2638 = vunpack.c.h.b16 %v934
        %v2639 = vunpack.c.l.b16 %v935
        %v2640 = vunpack.c.h.b16 %v935
        %v2641 = vunpack.c.l.b16 %v936
        %v2642 = vunpack.c.h.b16 %v936
        %v2643 = vunpack.c.l.b16 %v937
        %v2644 = vunpack.c.h.b16 %v937
        %v2645 = vunpack.c.l.b16 %v938
        %v2646 = vunpack.c.h.b16 %v938
        %v2647 = vunpack.c.l.b16 %v939
        %v2648 = vunpack.c.h.b16 %v939
        %v2649 = vunpack.c.l.b16 %v940
        %v2650 = vunpack.c.h.b16 %v940
        %v2651 = vunpack.c.l.b16 %v941
        %v2652 = vunpack.c.h.b16 %v941
        %v2653 = vunpack.c.l.b16 %v942
        %v2654 = vunpack.c.h.b16 %v942
        %v2655 = vunpack.c.l.b16 %v943
        %v2656 = vunpack.c.h.b16 %v943
        %v2657 = vunpack.c.l.b16 %v944
        %v2658 = vunpack.c.h.b16 %v944
        %v2659 = vunpack.c.l.b16 %v945
        %v2660 = vunpack.c.h.b16 %v945
        %v2661 = vunpack.c.l.b16 %v946
        %v2662 = vunpack.c.h.b16 %v946
        %v2663 = vunpack.c.l.b16 %v947
        %v2664 = vunpack.c.h.b16 %v947
        %v2665 = vunpack.c.l.b16 %v948
        %v2666 = vunpack.c.h.b16 %v948
        %v2667 = vunpack.c.l.b16 %v949
        %v2668 = vunpack.c.h.b16 %v949
        %v2669 = vunpack.c.l.b16 %v950
        %v2670 = vunpack.c.h.b16 %v950
        %v2671 = vunpack.c.l.b16 %v951
        %v2672 = vunpack.c.h.b16 %v951
        %v2673 = vunpack.c.l.b16 %v952
        %v2674 = vunpack.c.h.b16 %v952
        %v2675 = vunpack.c.l.b16 %v953
        %v2676 = vunpack.c.h.b16 %v953
        %v2677 = vunpack.c.l.b16 %v954
        %v2678 = vunpack.c.h.b16 %v954
        %v2679 = vunpack.c.l.b16 %v955
        %v2680 = vunpack.c.h.b16 %v955
        %v2681 = vunpack.c.l.b16 %v956
        %v2682 = vunpack.c.h.b16 %v956
        %v2683 = vunpack.c.l.b16 %v957
        %v2684 = vunpack.c.h.b16 %v957
        %v2685 = vunpack.c.l.b16 %v958
        %v2686 = vunpack.c.h.b16 %v958
        %v2687 = vunpack.c.l.b16 %v959
        %v2688 = vunpack.c.h.b16 %v959
        %v2689 = vunpack.c.l.b16 %v960
        %v2690 = vunpack.c.h.b16 %v960
        %v2691 = vunpack.c.l.b16 %v961
        %v2692 = vunpack.c.h.b16 %v961
        %v2693 = vunpack.c.l.b16 %v962
        %v2694 = vunpack.c.h.b16 %v962
        %v2695 = vunpack.c.l.b16 %v963
        %v2696 = vunpack.c.h.b16 %v963
        %v2697 = vunpack.c.l.b16 %v964
        %v2698 = vunpack.c.h.b16 %v964
        %v2699 = vunpack.c.l.b16 %v965
        %v2700 = vunpack.c.h.b16 %v965
        %v2701 = vunpack.c.l.b16 %v966
        %v2702 = vunpack.c.h.b16 %v966
        %v2703 = vunpack.c.l.b16 %v967
        %v2704 = vunpack.c.h.b16 %v967
        %v2705 = vunpack.c.l.b16 %v968
        %v2706 = vunpack.c.h.b16 %v968
        %v2707 = vunpack.c.l.b16 %v969
        %v2708 = vunpack.c.h.b16 %v969
        %v2709 = vunpack.c.l.b16 %v970
        %v2710 = vunpack.c.h.b16 %v970
        %v2711 = vunpack.c.l.b16 %v971
        %v2712 = vunpack.c.h.b16 %v971
        %v2713 = vunpack.c.l.b16 %v972
        %v2714 = vunpack.c.h.b16 %v972
        %v2715 = vunpack.c.l.b16 %v973
        %v2716 = vunpack.c.h.b16 %v973
        %v2717 = vunpack.c.l.b16 %v974
        %v2718 = vunpack.c.h.b16 %v974
        %v2719 = vunpack.c.l.b16 %v975
        %v2720 = vunpack.c.h.b16 %v975
        %v2721 = vunpack.c.l.b16 %v976
        %v2722 = vunpack.c.h.b16 %v976
        %v2723 = vunpack.c.l.b16 %v977
        %v2724 = vunpack.c.h.b16 %v977
        %v2725 = vunpack.c.l.b16 %v978
        %v2726 = vunpack.c.h.b16 %v978
        %v2727 = vunpack.c.l.b16 %v979
        %v2728 = vunpack.c.h.b16 %v979
        %v2729 = vunpack.c.l.b16 %v980
        %v2730 = vunpack.c.h.b16 %v980
        %v2731 = vunpack.c.l.b16 %v981
        %v2732 = vunpack.c.h.b16 %v981
        %v2733 = vunpack.c.l.b16 %v982
        %v2734 = vunpack.c.h.b16 %v982
        %v2735 = vunpack.c.l.b16 %v983
        %v2736 = vunpack.c.h.b16 %v983
        %v2737 = vunpack.c.l.b16 %v984
        %v2738 = vunpack.c.h.b16 %v984
        %v2739 = vunpack.c.l.b16 %v985
        %v2740 = vunpack.c.h.b16 %v985
        %v2741 = vunpack.c.l.b16 %v986
        %v2742 = vunpack.c.h.b16 %v986
        %v2743 = vunpack.c.l.b16 %v987
        %v2744 = vunpack.c.h.b16 %v987
        %v2745 = vunpack.c.l.b16 %v988
        %v2746 = vunpack.c.h.b16 %v988
        %v2747 = vunpack.c.l.b16 %v989
        %v2748 = vunpack.c.h.b16 %v989
        %v2749 = vpack.c.b16 %v1603, %v1597
        %v2750 = vpack.c.b16 %v1604, %v1598
        %v2751 = vpack.c.b16 %v1605, %v1599
        %v2752 = vpack.c.b16 %v1606, %v1600
        %v2753 = vpack.c.b16 %v1607, %v1601
        %v2754 = vpack.c.b16 %v1608, %v1602
        %v2755 = vpack.c.b16 %v1615, %v1609
        %v2756 = vpack.c.b16 %v1616, %v1610
        %v2757 = vpack.c.b16 %v1617, %v1611
        %v2758 = vpack.c.b16 %v1618, %v1612
        %v2759 = vpack.c.b16 %v1619, %v1613
        %v2760 = vpack.c.b16 %v1620, %v1614
        %v2761 = vpack.c.b16 %v1627, %v1621
        %v2762 = vpack.c.b16 %v1628, %v1622
        %v2763 = vpack.c.b16 %v1629, %v1623
        %v2764 = vpack.c.b16 %v1630, %v1624
        %v2765 = vpack.c.b16 %v1631, %v1625
        %v2766 = vpack.c.b16 %v1632, %v1626
        %v2767 = vpack.c.b16 %v1639, %v1633
        %v2768 = vpack.c.b16 %v1640, %v1634
        %v2769 = vpack.c.b16 %v1641, %v1635
        %v2770 = vpack.c.b16 %v1642, %v1636
        %v2771 = vpack.c.b16 %v1643, %v1637
        %v2772 = vpack.c.b16 %v1644, %v1638
        %v2773 = vpack.c.b16 %v1651, %v1645
        %v2774 = vpack.c.b16 %v1652, %v1646
        %v2775 = vpack.c.b16 %v1653, %v1647
        %v2776 = vpack.c.b16 %v1654, %v1648
        %v2777 = vpack.c.b16 %v1655, %v1649
        %v2778 = vpack.c.b16 %v1656, %v1650
        %v2779 = vpack.c.b16 %v1663, %v1657
        %v2780 = vpack.c.b16 %v1664, %v1658
        %v2781 = vpack.c.b16 %v1665, %v1659
        %v2782 = vpack.c.b16 %v1666, %v1660
        %v2783 = vpack.c.b16 %v1667, %v1661
        %v2784 = vpack.c.b16 %v1668, %v1662
        %v2785 = vpack.c.b16 %v1675, %v1669
        %v2786 = vpack.c.b16 %v1676, %v1670
        %v2787 = vpack.c.b16 %v1677, %v1671
        %v2788 = vpack.c.b16 %v1678, %v1672
        %v2789 = vpack.c.b16 %v1679, %v1673
        %v2790 = vpack.c.b16 %v1680, %v1674
        %v2791 = vpack.c.b16 %v1687, %v1681
        %v2792 = vpack.c.b16 %v1688, %v1682
        %v2793 = vpack.c.b16 %v1689, %v1683
        %v2794 = vpack.c.b16 %v1690, %v1684
        %v2795 = vpack.c.b16 %v1691, %v1685
        %v2796 = vpack.c.b16 %v1692, %v1686
        %v2797 = vpack.c.b16 %v1699, %v1693
        %v2798 = vpack.c.b16 %v1700, %v1694
        %v2799 = vpack.c.b16 %v1701, %v1695
        %v2800 = vpack.c.b16 %v1702, %v1696
        %v2801 = vpack.c.b16 %v1703, %v1697
        %v2802 = vpack.c.b16 %v1704, %v1698
        %v2803 = vpack.c.b16 %v1711, %v1705
        %v2804 = vpack.c.b16 %v1712, %v1706
        %v2805 = vpack.c.b16 %v1713, %v1707
        %v2806 = vpack.c.b16 %v1714, %v1708
        %v2807 = vpack.c.b16 %v1715, %v1709
        %v2808 = vpack.c.b16 %v1716, %v1710
        %v2809 = vpack.c.b16 %v1723, %v1717
        %v2810 = vpack.c.b16 %v1724, %v1718
        %v2811 = vpack.c.b16 %v1725, %v1719
        %v2812 = vpack.c.b16 %v1726, %v1720
        %v2813 = vpack.c.b16 %v1727, %v1721
        %v2814 = vpack.c.b16 %v1728, %v1722
        %v2815 = vpack.c.b16 %v1735, %v1729
        %v2816 = vpack.c.b16 %v1736, %v1730
        %v2817 = vpack.c.b16 %v1737, %v1731
        %v2818 = vpack.c.b16 %v1738, %v1732
        %v2819 = vpack.c.b16 %v1739, %v1733
        %v2820 = vpack.c.b16 %v1740, %v1734
        %v2821 = vpack.c.b16 %v1747, %v1741
        %v2822 = vpack.c.b16 %v1748, %v1742
        %v2823 = vpack.c.b16 %v1749, %v1743
        %v2824 = vpack.c.b16 %v1750, %v1744
        %v2825 = vpack.c.b16 %v1751, %v1745
        %v2826 = vpack.c.b16 %v1752, %v1746
        %v2827 = vpack.c.b16 %v1759, %v1753
        %v2828 = vpack.c.b16 %v1760, %v1754
        %v2829 = vpack.c.b16 %v1761, %v1755
        %v2830 = vpack.c.b16 %v1762, %v1756
        %v2831 = vpack.c.b16 %v1763, %v1757
        %v2832 = vpack.c.b16 %v1764, %v1758
        %v2833 = vpack.c.b16 %v1771, %v1765
        %v2834 = vpack.c.b16 %v1772, %v1766
        %v2835 = vpack.c.b16 %v1773, %v1767
        %v2836 = vpack.c.b16 %v1774, %v1768
        %v2837 = vpack.c.b16 %v1775, %v1769
        %v2838 = vpack.c.b16 %v1776, %v1770
        %v2839 = vpack.c.b16 %v1783, %v1777
        %v2840 = vpack.c.b16 %v1784, %v1778
        %v2841 = vpack.c.b16 %v1785, %v1779
        %v2842 = vpack.c.b16 %v1786, %v1780
        %v2843 = vpack.c.b16 %v1787, %v1781
        %v2844 = vpack.c.b16 %v1788, %v1782
        %v2845 = vpack.c.b16 %v1795, %v1789
        %v2846 = vpack.c.b16 %v1796, %v1790
        %v2847 = vpack.c.b16 %v1797, %v1791
        %v2848 = vpack.c.b16 %v1798, %v1792
        %v2849 = vpack.c.b16 %v1799, %v1793
        %v2850 = vpack.c.b16 %v1800, %v1794
        %v2851 = vpack.c.b16 %v1807, %v1801
        %v2852 = vpack.c.b16 %v1808, %v1802
        %v2853 = vpack.c.b16 %v1809, %v1803
        %v2854 = vpack.c.b16 %v1810, %v1804
        %v2855 = vpack.c.b16 %v1811, %v1805
        %v2856 = vpack.c.b16 %v1812, %v1806
        %v2857 = vpack.c.b16 %v1819, %v1813
        %v2858 = vpack.c.b16 %v1820, %v1814
        %v2859 = vpack.c.b16 %v1821, %v1815
        %v2860 = vpack.c.b16 %v1822, %v1816
        %v2861 = vpack.c.b16 %v1823, %v1817
        %v2862 = vpack.c.b16 %v1824, %v1818
        %v2863 = vpack.c.b16 %v1831, %v1825
        %v2864 = vpack.c.b16 %v1832, %v1826
        %v2865 = vpack.c.b16 %v1833, %v1827
        %v2866 = vpack.c.b16 %v1834, %v1828
        %v2867 = vpack.c.b16 %v1835, %v1829
        %v2868 = vpack.c.b16 %v1836, %v1830
        %v2869 = vpack.c.b16 %v1843, %v1837
        %v2870 = vpack.c.b16 %v1844, %v1838
        %v2871 = vpack.c.b16 %v1845, %v1839
        %v2872 = vpack.c.b16 %v1846, %v1840
        %v2873 = vpack.c.b16 %v1847, %v1841
        %v2874 = vpack.c.b16 %v1848, %v1842
        %v2875 = vpack.c.b16 %v1855, %v1849
        %v2876 = vpack.c.b16 %v1856, %v1850
        %v2877 = vpack.c.b16 %v1857, %v1851
        %v2878 = vpack.c.b16 %v1858, %v1852
        %v2879 = vpack.c.b16 %v1859, %v1853
        %v2880 = vpack.c.b16 %v1860, %v1854
        %v2881 = vpack.c.b16 %v1867, %v1861
        %v2882 = vpack.c.b16 %v1868, %v1862
        %v2883 = vpack.c.b16 %v1869, %v1863
        %v2884 = vpack.c.b16 %v1870, %v1864
        %v2885 = vpack.c.b16 %v1871, %v1865
        %v2886 = vpack.c.b16 %v1872, %v1866
        %v2887 = vpack.c.b16 %v1879, %v1873
        %v2888 = vpack.c.b16 %v1880, %v1874
        %v2889 = vpack.c.b16 %v1881, %v1875
        %v2890 = vpack.c.b16 %v1882, %v1876
        %v2891 = vpack.c.b16 %v1883, %v1877
        %v2892 = vpack.c.b16 %v1884, %v1878
        %v2893 = vpack.c.b16 %v1891, %v1885
        %v2894 = vpack.c.b16 %v1892, %v1886
        %v2895 = vpack.c.b16 %v1893, %v1887
        %v2896 = vpack.c.b16 %v1894, %v1888
        %v2897 = vpack.c.b16 %v1895, %v1889
        %v2898 = vpack.c.b16 %v1896, %v1890
        %v2899 = vpack.c.b16 %v1903, %v1897
        %v2900 = vpack.c.b16 %v1904, %v1898
        %v2901 = vpack.c.b16 %v1905, %v1899
        %v2902 = vpack.c.b16 %v1906, %v1900
        %v2903 = vpack.c.b16 %v1907, %v1901
        %v2904 = vpack.c.b16 %v1908, %v1902
        %v2905 = vpack.c.b16 %v1915, %v1909
        %v2906 = vpack.c.b16 %v1916, %v1910
        %v2907 = vpack.c.b16 %v1917, %v1911
        %v2908 = vpack.c.b16 %v1918, %v1912
        %v2909 = vpack.c.b16 %v1919, %v1913
        %v2910 = vpack.c.b16 %v1920, %v1914
        %v2911 = vpack.c.b16 %v1927, %v1921
        %v2912 = vpack.c.b16 %v1928, %v1922
        %v2913 = vpack.c.b16 %v1929, %v1923
        %v2914 = vpack.c.b16 %v1930, %v1924
        %v2915 = vpack.c.b16 %v1931, %v1925
        %v2916 = vpack.c.b16 %v1932, %v1926
        %v2917 = vpack.c.b16 %v1939, %v1933
        %v2918 = vpack.c.b16 %v1940, %v1934
        %v2919 = vpack.c.b16 %v1941, %v1935
        %v2920 = vpack.c.b16 %v1942, %v1936
        %v2921 = vpack.c.b16 %v1943, %v1937
        %v2922 = vpack.c.b16 %v1944, %v1938
        %v2923 = vpack.c.b16 %v1951, %v1945
        %v2924 = vpack.c.b16 %v1952, %v1946
        %v2925 = vpack.c.b16 %v1953, %v1947
        %v2926 = vpack.c.b16 %v1954, %v1948
        %v2927 = vpack.c.b16 %v1955, %v1949
        %v2928 = vpack.c.b16 %v1956, %v1950
        %v2929 = vpack.c.b16 %v1963, %v1957
        %v2930 = vpack.c.b16 %v1964, %v1958
        %v2931 = vpack.c.b16 %v1965, %v1959
        %v2932 = vpack.c.b16 %v1966, %v1960
        %v2933 = vpack.c.b16 %v1967, %v1961
        %v2934 = vpack.c.b16 %v1968, %v1962
        %v2935 = vpack.c.b16 %v1975, %v1969
        %v2936 = vpack.c.b16 %v1976, %v1970
        %v2937 = vpack.c.b16 %v1977, %v1971
        %v2938 = vpack.c.b16 %v1978, %v1972
        %v2939 = vpack.c.b16 %v1979, %v1973
        %v2940 = vpack.c.b16 %v1980, %v1974
        %v2941 = vpack.c.b16 %v1987, %v1981
        %v2942 = vpack.c.b16 %v1988, %v1982
        %v2943 = vpack.c.b16 %v1989, %v1983
        %v2944 = vpack.c.b16 %v1990, %v1984
        %v2945 = vpack.c.b16 %v1991, %v1985
        %v2946 = vpack.c.b16 %v1992, %v1986
        %v2947 = vpack.c.b16 %v1999, %v1993
        %v2948 = vpack.c.b16 %v2000, %v1994
        %v2949 = vpack.c.b16 %v2001, %v1995
        %v2950 = vpack.c.b16 %v2002, %v1996
        %v2951 = vpack.c.b16 %v2003, %v1997
        %v2952 = vpack.c.b16 %v2004, %v1998
        %v2953 = vpack.c.b16 %v2011, %v2005
        %v2954 = vpack.c.b16 %v2012, %v2006
        %v2955 = vpack.c.b16 %v2013, %v2007
        %v2956 = vpack.c.b16 %v2014, %v2008
        %v2957 = vpack.c.b16 %v2015, %v2009
        %v2958 = vpack.c.b16 %v2016, %v2010
        %v2959 = vpack.c.b16 %v2023, %v2017
        %v2960 = vpack.c.b16 %v2024, %v2018
        %v2961 = vpack.c.b16 %v2025, %v2019
        %v2962 = vpack.c.b16 %v2026, %v2020
        %v2963 = vpack.c.b16 %v2027, %v2021
        %v2964 = vpack.c.b16 %v2028, %v2022
        %v2965 = vpack.c.b16 %v2035, %v2029
        %v2966 = vpack.c.b16 %v2036, %v2030
        %v2967 = vpack.c.b16 %v2037, %v2031
        %v2968 = vpack.c.b16 %v2038, %v2032
        %v2969 = vpack.c.b16 %v2039, %v2033
        %v2970 = vpack.c.b16 %v2040, %v2034
        %v2971 = vpack.c.b16 %v2047, %v2041
        %v2972 = vpack.c.b16 %v2048, %v2042
        %v2973 = vpack.c.b16 %v2049, %v2043
        %v2974 = vpack.c.b16 %v2050, %v2044
        %v2975 = vpack.c.b16 %v2051, %v2045
        %v2976 = vpack.c.b16 %v2052, %v2046
        %v2977 = vpack.c.b16 %v2059, %v2053
        %v2978 = vpack.c.b16 %v2060, %v2054
        %v2979 = vpack.c.b16 %v2061, %v2055
        %v2980 = vpack.c.b16 %v2062, %v2056
        %v2981 = vpack.c.b16 %v2063, %v2057
        %v2982 = vpack.c.b16 %v2064, %v2058
        %v2983 = vpack.c.b16 %v2071, %v2065
        %v2984 = vpack.c.b16 %v2072, %v2066
        %v2985 = vpack.c.b16 %v2073, %v2067
        %v2986 = vpack.c.b16 %v2074, %v2068
        %v2987 = vpack.c.b16 %v2075, %v2069
        %v2988 = vpack.c.b16 %v2076, %v2070
        %v2989 = vpack.c.b16 %v2083, %v2077
        %v2990 = vpack.c.b16 %v2084, %v2078
        %v2991 = vpack.c.b16 %v2085, %v2079
        %v2992 = vpack.c.b16 %v2086, %v2080
        %v2993 = vpack.c.b16 %v2087, %v2081
        %v2994 = vpack.c.b16 %v2088, %v2082
        %v2995 = vpack.c.b16 %v2095, %v2089
        %v2996 = vpack.c.b16 %v2096, %v2090
        %v2997 = vpack.c.b16 %v2097, %v2091
        %v2998 = vpack.c.b16 %v2098, %v2092
        %v2999 = vpack.c.b16 %v2099, %v2093
        %v3000 = vpack.c.b16 %v2100, %v2094
        %v3001 = vpack.c.b16 %v2107, %v2101
        %v3002 = vpack.c.b16 %v2108, %v2102
        %v3003 = vpack.c.b16 %v2109, %v2103
        %v3004 = vpack.c.b16 %v2110, %v2104
        %v3005 = vpack.c.b16 %v2111, %v2105
        %v3006 = vpack.c.b16 %v2112, %v2106
        %v3007 = vpack.c.b16 %v2119, %v2113
        %v3008 = vpack.c.b16 %v2120, %v2114
        %v3009 = vpack.c.b16 %v2121, %v2115
        %v3010 = vpack.c.b16 %v2122, %v2116
        %v3011 = vpack.c.b16 %v2123, %v2117
        %v3012 = vpack.c.b16 %v2124, %v2118
        %v3013 = vpack.c.b16 %v2131, %v2125
        %v3014 = vpack.c.b16 %v2132, %v2126
        %v3015 = vpack.c.b16 %v2133, %v2127
        %v3016 = vpack.c.b16 %v2134, %v2128
        %v3017 = vpack.c.b16 %v2135, %v2129
        %v3018 = vpack.c.b16 %v2136, %v2130
        %v3019 = vpack.c.b16 %v2143, %v2137
        %v3020 = vpack.c.b16 %v2144, %v2138
        %v3021 = vpack.c.b16 %v2145, %v2139
        %v3022 = vpack.c.b16 %v2146, %v2140
        %v3023 = vpack.c.b16 %v2147, %v2141
        %v3024 = vpack.c.b16 %v2148, %v2142
        %v3025 = vpack.c.b16 %v2155, %v2149
        %v3026 = vpack.c.b16 %v2156, %v2150
        %v3027 = vpack.c.b16 %v2157, %v2151
        %v3028 = vpack.c.b16 %v2158, %v2152
        %v3029 = vpack.c.b16 %v2159, %v2153
        %v3030 = vpack.c.b16 %v2160, %v2154
        %v3031 = vpack.c.b16 %v2167, %v2161
        %v3032 = vpack.c.b16 %v2168, %v2162
        %v3033 = vpack.c.b16 %v2169, %v2163
        %v3034 = vpack.c.b16 %v2170, %v2164
        %v3035 = vpack.c.b16 %v2171, %v2165
        %v3036 = vpack.c.b16 %v2172, %v2166
        %v3037 = vpack.c.b16 %v2179, %v2173
        %v3038 = vpack.c.b16 %v2180, %v2174
        %v3039 = vpack.c.b16 %v2181, %v2175
        %v3040 = vpack.c.b16 %v2182, %v2176
        %v3041 = vpack.c.b16 %v2183, %v2177
        %v3042 = vpack.c.b16 %v2184, %v2178
        %v3043 = vpack.c.b16 %v2191, %v2185
        %v3044 = vpack.c.b16 %v2192, %v2186
        %v3045 = vpack.c.b16 %v2193, %v2187
        %v3046 = vpack.c.b16 %v2194, %v2188
        %v3047 = vpack.c.b16 %v2195, %v2189
        %v3048 = vpack.c.b16 %v2196, %v2190
        %v3049 = vpack.c.b16 %v2203, %v2197
        %v3050 = vpack.c.b16 %v2204, %v2198
        %v3051 = vpack.c.b16 %v2205, %v2199
        %v3052 = vpack.c.b16 %v2206, %v2200
        %v3053 = vpack.c.b16 %v2207, %v2201
        %v3054 = vpack.c.b16 %v2208, %v2202
        %v3055 = vpack.c.b16 %v2215, %v2209
        %v3056 = vpack.c.b16 %v2216, %v2210
        %v3057 = vpack.c.b16 %v2217, %v2211
        %v3058 = vpack.c.b16 %v2218, %v2212
        %v3059 = vpack.c.b16 %v2219, %v2213
        %v3060 = vpack.c.b16 %v2220, %v2214
        %v3061 = vpack.c.b16 %v2227, %v2221
        %v3062 = vpack.c.b16 %v2228, %v2222
        %v3063 = vpack.c.b16 %v2229, %v2223
        %v3064 = vpack.c.b16 %v2230, %v2224
        %v3065 = vpack.c.b16 %v2231, %v2225
        %v3066 = vpack.c.b16 %v2232, %v2226
        %v3067 = vpack.c.b16 %v2239, %v2233
        %v3068 = vpack.c.b16 %v2240, %v2234
        %v3069 = vpack.c.b16 %v2241, %v2235
        %v3070 = vpack.c.b16 %v2242, %v2236
        %v3071 = vpack.c.b16 %v2243, %v2237
        %v3072 = vpack.c.b16 %v2244, %v2238
        %v3073 = vpack.c.b16 %v2251, %v2245
        %v3074 = vpack.c.b16 %v2252, %v2246
        %v3075 = vpack.c.b16 %v2253, %v2247
        %v3076 = vpack.c.b16 %v2254, %v2248
        %v3077 = vpack.c.b16 %v2255, %v2249
        %v3078 = vpack.c.b16 %v2256, %v2250
        %v3079 = vpack.c.b16 %v2263, %v2257
        %v3080 = vpack.c.b16 %v2264, %v2258
        %v3081 = vpack.c.b16 %v2265, %v2259
        %v3082 = vpack.c.b16 %v2266, %v2260
        %v3083 = vpack.c.b16 %v2267, %v2261
        %v3084 = vpack.c.b16 %v2268, %v2262
        %v3085 = vpack.c.b16 %v2275, %v2269
        %v3086 = vpack.c.b16 %v2276, %v2270
        %v3087 = vpack.c.b16 %v2277, %v2271
        %v3088 = vpack.c.b16 %v2278, %v2272
        %v3089 = vpack.c.b16 %v2279, %v2273
        %v3090 = vpack.c.b16 %v2280, %v2274
        %v3091 = vpack.c.b16 %v2287, %v2281
        %v3092 = vpack.c.b16 %v2288, %v2282
        %v3093 = vpack.c.b16 %v2289, %v2283
        %v3094 = vpack.c.b16 %v2290, %v2284
        %v3095 = vpack.c.b16 %v2291, %v2285
        %v3096 = vpack.c.b16 %v2292, %v2286
        %v3097 = vpack.c.b16 %v2299, %v2293
        %v3098 = vpack.c.b16 %v2300, %v2294
        %v3099 = vpack.c.b16 %v2301, %v2295
        %v3100 = vpack.c.b16 %v2302, %v2296
        %v3101 = vpack.c.b16 %v2303, %v2297
        %v3102 = vpack.c.b16 %v2304, %v2298
        %v3103 = vpack.c.b16 %v2311, %v2305
        %v3104 = vpack.c.b16 %v2312, %v2306
        %v3105 = vpack.c.b16 %v2313, %v2307
        %v3106 = vpack.c.b16 %v2314, %v2308
        %v3107 = vpack.c.b16 %v2315, %v2309
        %v3108 = vpack.c.b16 %v2316, %v2310
        %v3109 = vpack.c.b16 %v2323, %v2317
        %v3110 = vpack.c.b16 %v2324, %v2318
        %v3111 = vpack.c.b16 %v2325, %v2319
        %v3112 = vpack.c.b16 %v2326, %v2320
        %v3113 = vpack.c.b16 %v2327, %v2321
        %v3114 = vpack.c.b16 %v2328, %v2322
        %v3115 = vpack.c.b16 %v2335, %v2329
        %v3116 = vpack.c.b16 %v2336, %v2330
        %v3117 = vpack.c.b16 %v2337, %v2331
        %v3118 = vpack.c.b16 %v2338, %v2332
        %v3119 = vpack.c.b16 %v2339, %v2333
        %v3120 = vpack.c.b16 %v2340, %v2334
        %v3121 = vpack.c.b16 %v2347, %v2341
        %v3122 = vpack.c.b16 %v2348, %v2342
        %v3123 = vpack.c.b16 %v2349, %v2343
        %v3124 = vpack.c.b16 %v2350, %v2344
        %v3125 = vpack.c.b16 %v2351, %v2345
        %v3126 = vpack.c.b16 %v2352, %v2346
        %v3127 = vpack.c.b16 %v2359, %v2353
        %v3128 = vpack.c.b16 %v2360, %v2354
        %v3129 = vpack.c.b16 %v2361, %v2355
        %v3130 = vpack.c.b16 %v2362, %v2356
        %v3131 = vpack.c.b16 %v2363, %v2357
        %v3132 = vpack.c.b16 %v2364, %v2358
        %v3133 = vpack.c.b16 %v2371, %v2365
        %v3134 = vpack.c.b16 %v2372, %v2366
        %v3135 = vpack.c.b16 %v2373, %v2367
        %v3136 = vpack.c.b16 %v2374, %v2368
        %v3137 = vpack.c.b16 %v2375, %v2369
        %v3138 = vpack.c.b16 %v2376, %v2370
        %v3139 = vpack.c.b16 %v2383, %v2377
        %v3140 = vpack.c.b16 %v2384, %v2378
        %v3141 = vpack.c.b16 %v2385, %v2379
        %v3142 = vpack.c.b16 %v2386, %v2380
        %v3143 = vpack.c.b16 %v2387, %v2381
        %v3144 = vpack.c.b16 %v2388, %v2382
        %v3145 = vpack.c.b16 %v2395, %v2389
        %v3146 = vpack.c.b16 %v2396, %v2390
        %v3147 = vpack.c.b16 %v2397, %v2391
        %v3148 = vpack.c.b16 %v2398, %v2392
        %v3149 = vpack.c.b16 %v2399, %v2393
        %v3150 = vpack.c.b16 %v2400, %v2394
        %v3151 = vpack.c.b16 %v2407, %v2401
        %v3152 = vpack.c.b16 %v2408, %v2402
        %v3153 = vpack.c.b16 %v2409, %v2403
        %v3154 = vpack.c.b16 %v2410, %v2404
        %v3155 = vpack.c.b16 %v2411, %v2405
        %v3156 = vpack.c.b16 %v2412, %v2406
        %v3157 = vpack.c.b16 %v2419, %v2413
        %v3158 = vpack.c.b16 %v2420, %v2414
        %v3159 = vpack.c.b16 %v2421, %v2415
        %v3160 = vpack.c.b16 %v2422, %v2416
        %v3161 = vpack.c.b16 %v2423, %v2417
        %v3162 = vpack.c.b16 %v2424, %v2418
        %v3163 = vpack.c.b16 %v2431, %v2425
        %v3164 = vpack.c.b16 %v2432, %v2426
        %v3165 = vpack.c.b16 %v2433, %v2427
        %v3166 = vpack.c.b16 %v2434, %v2428
        %v3167 = vpack.c.b16 %v2435, %v2429
        %v3168 = vpack.c.b16 %v2436, %v2430
        %v3169 = vpack.c.b16 %v2443, %v2437
        %v3170 = vpack.c.b16 %v2444, %v2438
        %v3171 = vpack.c.b16 %v2445, %v2439
        %v3172 = vpack.c.b16 %v2446, %v2440
        %v3173 = vpack.c.b16 %v2447, %v2441
        %v3174 = vpack.c.b16 %v2448, %v2442
        %v3175 = vpack.c.b16 %v2455, %v2449
        %v3176 = vpack.c.b16 %v2456, %v2450
        %v3177 = vpack.c.b16 %v2457, %v2451
        %v3178 = vpack.c.b16 %v2458, %v2452
        %v3179 = vpack.c.b16 %v2459, %v2453
        %v3180 = vpack.c.b16 %v2460, %v2454
        %v3181 = vpack.c.b16 %v2467, %v2461
        %v3182 = vpack.c.b16 %v2468, %v2462
        %v3183 = vpack.c.b16 %v2469, %v2463
        %v3184 = vpack.c.b16 %v2470, %v2464
        %v3185 = vpack.c.b16 %v2471, %v2465
        %v3186 = vpack.c.b16 %v2472, %v2466
        %v3187 = vpack.c.b16 %v2479, %v2473
        %v3188 = vpack.c.b16 %v2480, %v2474
        %v3189 = vpack.c.b16 %v2481, %v2475
        %v3190 = vpack.c.b16 %v2482, %v2476
        %v3191 = vpack.c.b16 %v2483, %v2477
        %v3192 = vpack.c.b16 %v2484, %v2478
        %v3193 = vpack.c.b16 %v2491, %v2485
        %v3194 = vpack.c.b16 %v2492, %v2486
        %v3195 = vpack.c.b16 %v2493, %v2487
        %v3196 = vpack.c.b16 %v2494, %v2488
        %v3197 = vpack.c.b16 %v2495, %v2489
        %v3198 = vpack.c.b16 %v2496, %v2490
        %v3199 = vpack.c.b16 %v2503, %v2497
        %v3200 = vpack.c.b16 %v2504, %v2498
        %v3201 = vpack.c.b16 %v2505, %v2499
        %v3202 = vpack.c.b16 %v2506, %v2500
        %v3203 = vpack.c.b16 %v2507, %v2501
        %v3204 = vpack.c.b16 %v2508, %v2502
        %v3205 = vpack.c.b16 %v2515, %v2509
        %v3206 = vpack.c.b16 %v2516, %v2510
        %v3207 = vpack.c.b16 %v2517, %v2511
        %v3208 = vpack.c.b16 %v2518, %v2512
        %v3209 = vpack.c.b16 %v2519, %v2513
        %v3210 = vpack.c.b16 %v2520, %v2514
        %v3211 = vpack.c.b16 %v2527, %v2521
        %v3212 = vpack.c.b16 %v2528, %v2522
        %v3213 = vpack.c.b16 %v2529, %v2523
        %v3214 = vpack.c.b16 %v2530, %v2524
        %v3215 = vpack.c.b16 %v2531, %v2525
        %v3216 = vpack.c.b16 %v2532, %v2526
        %v3217 = vpack.c.b16 %v2539, %v2533
        %v3218 = vpack.c.b16 %v2540, %v2534
        %v3219 = vpack.c.b16 %v2541, %v2535
        %v3220 = vpack.c.b16 %v2542, %v2536
        %v3221 = vpack.c.b16 %v2543, %v2537
        %v3222 = vpack.c.b16 %v2544, %v2538
        %v3223 = vpack.c.b16 %v2551, %v2545
        %v3224 = vpack.c.b16 %v2552, %v2546
        %v3225 = vpack.c.b16 %v2553, %v2547
        %v3226 = vpack.c.b16 %v2554, %v2548
        %v3227 = vpack.c.b16 %v2555, %v2549
        %v3228 = vpack.c.b16 %v2556, %v2550
        %v3229 = vpack.c.b16 %v2563, %v2557
        %v3230 = vpack.c.b16 %v2564, %v2558
        %v3231 = vpack.c.b16 %v2565, %v2559
        %v3232 = vpack.c.b16 %v2566, %v2560
        %v3233 = vpack.c.b16 %v2567, %v2561
        %v3234 = vpack.c.b16 %v2568, %v2562
        %v3235 = vpack.c.b16 %v2575, %v2569
        %v3236 = vpack.c.b16 %v2576, %v2570
        %v3237 = vpack.c.b16 %v2577, %v2571
        %v3238 = vpack.c.b16 %v2578, %v2572
        %v3239 = vpack.c.b16 %v2579, %v2573
        %v3240 = vpack.c.b16 %v2580, %v2574
        %v3241 = vpack.c.b16 %v2587, %v2581
        %v3242 = vpack.c.b16 %v2588, %v2582
        %v3243 = vpack.c.b16 %v2589, %v2583
        %v3244 = vpack.c.b16 %v2590, %v2584
        %v3245 = vpack.c.b16 %v2591, %v2585
        %v3246 = vpack.c.b16 %v2592, %v2586
        %v3247 = vpack.c.b16 %v2599, %v2593
        %v3248 = vpack.c.b16 %v2600, %v2594
        %v3249 = vpack.c.b16 %v2601, %v2595
        %v3250 = vpack.c.b16 %v2602, %v2596
        %v3251 = vpack.c.b16 %v2603, %v2597
        %v3252 = vpack.c.b16 %v2604, %v2598
        %v3253 = vpack.c.b16 %v2611, %v2605
        %v3254 = vpack.c.b16 %v2612, %v2606
        %v3255 = vpack.c.b16 %v2613, %v2607
        %v3256 = vpack.c.b16 %v2614, %v2608
        %v3257 = vpack.c.b16 %v2615, %v2609
        %v3258 = vpack.c.b16 %v2616, %v2610
        %v3259 = vpack.c.b16 %v2623, %v2617
        %v3260 = vpack.c.b16 %v2624, %v2618
        %v3261 = vpack.c.b16 %v2625, %v2619
        %v3262 = vpack.c.b16 %v2626, %v2620
        %v3263 = vpack.c.b16 %v2627, %v2621
        %v3264 = vpack.c.b16 %v2628, %v2622
        %v3265 = vpack.c.b16 %v2635, %v2629
        %v3266 = vpack.c.b16 %v2636, %v2630
        %v3267 = vpack.c.b16 %v2637, %v2631
        %v3268 = vpack.c.b16 %v2638, %v2632
        %v3269 = vpack.c.b16 %v2639, %v2633
        %v3270 = vpack.c.b16 %v2640, %v2634
        %v3271 = vpack.c.b16 %v2647, %v2641
        %v3272 = vpack.c.b16 %v2648, %v2642
        %v3273 = vpack.c.b16 %v2649, %v2643
        %v3274 = vpack.c.b16 %v2650, %v2644
        %v3275 = vpack.c.b16 %v2651, %v2645
        %v3276 = vpack.c.b16 %v2652, %v2646
        %v3277 = vpack.c.b16 %v2659, %v2653
        %v3278 = vpack.c.b16 %v2660, %v2654
        %v3279 = vpack.c.b16 %v2661, %v2655
        %v3280 = vpack.c.b16 %v2662, %v2656
        %v3281 = vpack.c.b16 %v2663, %v2657
        %v3282 = vpack.c.b16 %v2664, %v2658
        %v3283 = vpack.c.b16 %v2671, %v2665
        %v3284 = vpack.c.b16 %v2672, %v2666
        %v3285 = vpack.c.b16 %v2673, %v2667
        %v3286 = vpack.c.b16 %v2674, %v2668
        %v3287 = vpack.c.b16 %v2675, %v2669
        %v3288 = vpack.c.b16 %v2676, %v2670
        %v3289 = vpack.c.b16 %v2683, %v2677
        %v3290 = vpack.c.b16 %v2684, %v2678
        %v3291 = vpack.c.b16 %v2685, %v2679
        %v3292 = vpack.c.b16 %v2686, %v2680
        %v3293 = vpack.c.b16 %v2687, %v2681
        %v3294 = vpack.c.b16 %v2688, %v2682
        %v3295 = vpack.c.b16 %v2695, %v2689
        %v3296 = vpack.c.b16 %v2696, %v2690
        %v3297 = vpack.c.b16 %v2697, %v2691
        %v3298 = vpack.c.b16 %v2698, %v2692
        %v3299 = vpack.c.b16 %v2699, %v2693
        %v3300 = vpack.c.b16 %v2700, %v2694
        %v3301 = vpack.c.b16 %v2707, %v2701
        %v3302 = vpack.c.b16 %v2708, %v2702
        %v3303 = vpack.c.b16 %v2709, %v2703
        %v3304 = vpack.c.b16 %v2710, %v2704
        %v3305 = vpack.c.b16 %v2711, %v2705
        %v3306 = vpack.c.b16 %v2712, %v2706
        %v3307 = vpack.c.b16 %v2719, %v2713
        %v3308 = vpack.c.b16 %v2720, %v2714
        %v3309 = vpack.c.b16 %v2721, %v2715
        %v3310 = vpack.c.b16 %v2722, %v2716
        %v3311 = vpack.c.b16 %v2723, %v2717
        %v3312 = vpack.c.b16 %v2724, %v2718
        %v3313 = vpack.c.b16 %v2731, %v2725
        %v3314 = vpack.c.b16 %v2732, %v2726
        %v3315 = vpack.c.b16 %v2733, %v2727
        %v3316 = vpack.c.b16 %v2734, %v2728
        %v3317 = vpack.c.b16 %v2735, %v2729
        %v3318 = vpack.c.b16 %v2736, %v2730
        %v3319 = vpack.c.b16 %v2743, %v2737
        %v3320 = vpack.c.b16 %v2744, %v2738
        %v3321 = vpack.c.b16 %v2745, %v2739
        %v3322 = vpack.c.b16 %v2746, %v2740
        %v3323 = vpack.c.b16 %v2747, %v2741
        %v3324 = vpack.c.b16 %v2748, %v2742
        %3901 = vmatprep.subr.bf16.mxu0 %v2792
        %3902 = vmatpush1.bf16.msra.mxu0 %v2791
        %3903 = vmatprep.subr.bf16.mxu0 %v2786
        %3904 = vmatpush1.bf16.msra.mxu0 %v2785
        %3905 = vmatprep.subr.bf16.mxu0 %v2780
        %3906 = vmatpush1.bf16.msra.mxu0 %v2779
        %3907 = vmatprep.subr.bf16.mxu0 %v2774
        %3908 = vmatpush1.bf16.msra.mxu0 %v2773
        %3909 = vmatprep.subr.bf16.mxu0 %v2768
        %3910 = vmatpush1.bf16.msra.mxu0 %v2767
        %3911 = vmatprep.subr.bf16.mxu0 %v2762
        %3912 = vmatpush1.bf16.msra.mxu0 %v2761
        %3913 = vmatprep.subr.bf16.mxu0 %v2756
        %3914 = vmatpush1.bf16.msra.mxu0 %v2755
        %3915 = vmatprep.subr.bf16.mxu0 %v2750
        %3916 = vmatpush1.bf16.msra.mxu0 %v2749
        %3917 = vmatprep.subr.bf16.mxu0 %v2840
        %3918 = vmatpush2.bf16.msra.mxu0 %v2839
        %3919 = vmatprep.subr.bf16.mxu0 %v2834
        %3920 = vmatpush2.bf16.msra.mxu0 %v2833
        %3921 = vmatprep.subr.bf16.mxu0 %v2828
        %3922 = vmatpush2.bf16.msra.mxu0 %v2827
        %3923 = vmatprep.subr.bf16.mxu0 %v2822
        %3924 = vmatpush2.bf16.msra.mxu0 %v2821
        %3925 = vmatprep.subr.bf16.mxu0 %v2816
        %3926 = vmatpush2.bf16.msra.mxu0 %v2815
        %3927 = vmatprep.subr.bf16.mxu0 %v2810
        %3928 = vmatpush2.bf16.msra.mxu0 %v2809
        %3929 = vmatprep.subr.bf16.mxu0 %v2804
        %3930 = vmatpush2.bf16.msra.mxu0 %v2803
        %3931 = vmatprep.subr.bf16.mxu0 %v2798
        %3932 = vmatpush2.bf16.msra.mxu0 %v2797
        %3933 = vmatprep.mubr.bf16.mxu0 %v401
        %3934 = vmatmul.mubr.bf16.gmra.mxu0 %v400
        %v3935 = vpop.f32.mrf.mxu0
        %v3936 = vadd.f32 %v994, %v3935
        %v3937 = vpop.f32.mrf.mxu0
        %v3938 = vadd.f32 %v998, %v3937
        %v3939 = vpop.f32.mrf.mxu0
        %v3940 = vpop.f32.mrf.mxu0
        %3941 = vdwg.mxu0
        %3942 = vmatprep.subr.bf16.mxu0 %v2888
        %3943 = vmatpush1.bf16.msra.mxu0 %v2887
        %3944 = vmatprep.subr.bf16.mxu0 %v2882
        %3945 = vmatpush1.bf16.msra.mxu0 %v2881
        %3946 = vmatprep.subr.bf16.mxu0 %v2876
        %3947 = vmatpush1.bf16.msra.mxu0 %v2875
        %3948 = vmatprep.subr.bf16.mxu0 %v2870
        %3949 = vmatpush1.bf16.msra.mxu0 %v2869
        %3950 = vmatprep.subr.bf16.mxu0 %v2864
        %3951 = vmatpush1.bf16.msra.mxu0 %v2863
        %3952 = vmatprep.subr.bf16.mxu0 %v2858
        %3953 = vmatpush1.bf16.msra.mxu0 %v2857
        %3954 = vmatprep.subr.bf16.mxu0 %v2852
        %3955 = vmatpush1.bf16.msra.mxu0 %v2851
        %3956 = vmatprep.subr.bf16.mxu0 %v2846
        %3957 = vmatpush1.bf16.msra.mxu0 %v2845
        %3958 = vmatprep.subr.bf16.mxu0 %v2936
        %3959 = vmatpush2.bf16.msra.mxu0 %v2935
        %3960 = vmatprep.subr.bf16.mxu0 %v2930
        %3961 = vmatpush2.bf16.msra.mxu0 %v2929
        %3962 = vmatprep.subr.bf16.mxu0 %v2924
        %3963 = vmatpush2.bf16.msra.mxu0 %v2923
        %3964 = vmatprep.subr.bf16.mxu0 %v2918
        %3965 = vmatpush2.bf16.msra.mxu0 %v2917
        %3966 = vmatprep.subr.bf16.mxu0 %v2912
        %3967 = vmatpush2.bf16.msra.mxu0 %v2911
        %3968 = vmatprep.subr.bf16.mxu0 %v2906
        %3969 = vmatpush2.bf16.msra.mxu0 %v2905
        %3970 = vmatprep.subr.bf16.mxu0 %v2900
        %3971 = vmatpush2.bf16.msra.mxu0 %v2899
        %3972 = vmatprep.subr.bf16.mxu0 %v2894
        %3973 = vmatpush2.bf16.msra.mxu0 %v2893
        %3974 = vmatprep.mubr.bf16.mxu0 %v403
        %3975 = vmatmul.mubr.bf16.gmra.mxu0 %v402
        %v3976 = vpop.f32.mrf.mxu0
        %v3977 = vadd.f32 %v3936, %v3976
        %v3978 = vpop.f32.mrf.mxu0
        %v3979 = vadd.f32 %v3938, %v3978
        %v3980 = vpop.f32.mrf.mxu0
        %v3981 = vpop.f32.mrf.mxu0
        %3982 = vdwg.mxu0
        %3983 = vmatprep.subr.bf16.mxu0 %v2984
        %3984 = vmatpush1.bf16.msra.mxu0 %v2983
        %3985 = vmatprep.subr.bf16.mxu0 %v2978
        %3986 = vmatpush1.bf16.msra.mxu0 %v2977
        %3987 = vmatprep.subr.bf16.mxu0 %v2972
        %3988 = vmatpush1.bf16.msra.mxu0 %v2971
        %3989 = vmatprep.subr.bf16.mxu0 %v2966
        %3990 = vmatpush1.bf16.msra.mxu0 %v2965
        %3991 = vmatprep.subr.bf16.mxu0 %v2960
        %3992 = vmatpush1.bf16.msra.mxu0 %v2959
        %3993 = vmatprep.subr.bf16.mxu0 %v2954
        %3994 = vmatpush1.bf16.msra.mxu0 %v2953
        %3995 = vmatprep.subr.bf16.mxu0 %v2948
        %3996 = vmatpush1.bf16.msra.mxu0 %v2947
        %3997 = vmatprep.subr.bf16.mxu0 %v2942
        %3998 = vmatpush1.bf16.msra.mxu0 %v2941
        %3999 = vmatprep.subr.bf16.mxu0 %v3032
        %4000 = vmatpush2.bf16.msra.mxu0 %v3031
        %4001 = vmatprep.subr.bf16.mxu0 %v3026
        %4002 = vmatpush2.bf16.msra.mxu0 %v3025
        %4003 = vmatprep.subr.bf16.mxu0 %v3020
        %4004 = vmatpush2.bf16.msra.mxu0 %v3019
        %4005 = vmatprep.subr.bf16.mxu0 %v3014
        %4006 = vmatpush2.bf16.msra.mxu0 %v3013
        %4007 = vmatprep.subr.bf16.mxu0 %v3008
        %4008 = vmatpush2.bf16.msra.mxu0 %v3007
        %4009 = vmatprep.subr.bf16.mxu0 %v3002
        %4010 = vmatpush2.bf16.msra.mxu0 %v3001
        %4011 = vmatprep.subr.bf16.mxu0 %v2996
        %4012 = vmatpush2.bf16.msra.mxu0 %v2995
        %4013 = vmatprep.subr.bf16.mxu0 %v2990
        %4014 = vmatpush2.bf16.msra.mxu0 %v2989
        %4015 = vmatprep.mubr.bf16.mxu0 %v405
        %4016 = vmatmul.mubr.bf16.gmra.mxu0 %v404
        %v4017 = vpop.f32.mrf.mxu0
        %v4018 = vadd.f32 %v3977, %v4017
        %v4019 = vpop.f32.mrf.mxu0
        %v4020 = vadd.f32 %v3979, %v4019
        %v4021 = vpop.f32.mrf.mxu0
        %v4022 = vpop.f32.mrf.mxu0
        %4023 = vdwg.mxu0
        %4024 = vmatprep.subr.bf16.mxu0 %v3080
        %4025 = vmatpush1.bf16.msra.mxu0 %v3079
        %4026 = vmatprep.subr.bf16.mxu0 %v3074
        %4027 = vmatpush1.bf16.msra.mxu0 %v3073
        %4028 = vmatprep.subr.bf16.mxu0 %v3068
        %4029 = vmatpush1.bf16.msra.mxu0 %v3067
        %4030 = vmatprep.subr.bf16.mxu0 %v3062
        %4031 = vmatpush1.bf16.msra.mxu0 %v3061
        %4032 = vmatprep.subr.bf16.mxu0 %v3056
        %4033 = vmatpush1.bf16.msra.mxu0 %v3055
        %4034 = vmatprep.subr.bf16.mxu0 %v3050
        %4035 = vmatpush1.bf16.msra.mxu0 %v3049
        %4036 = vmatprep.subr.bf16.mxu0 %v3044
        %4037 = vmatpush1.bf16.msra.mxu0 %v3043
        %4038 = vmatprep.subr.bf16.mxu0 %v3038
        %4039 = vmatpush1.bf16.msra.mxu0 %v3037
        %4040 = vmatprep.subr.bf16.mxu0 %v3128
        %4041 = vmatpush2.bf16.msra.mxu0 %v3127
        %4042 = vmatprep.subr.bf16.mxu0 %v3122
        %4043 = vmatpush2.bf16.msra.mxu0 %v3121
        %4044 = vmatprep.subr.bf16.mxu0 %v3116
        %4045 = vmatpush2.bf16.msra.mxu0 %v3115
        %4046 = vmatprep.subr.bf16.mxu0 %v3110
        %4047 = vmatpush2.bf16.msra.mxu0 %v3109
        %4048 = vmatprep.subr.bf16.mxu0 %v3104
        %4049 = vmatpush2.bf16.msra.mxu0 %v3103
        %4050 = vmatprep.subr.bf16.mxu0 %v3098
        %4051 = vmatpush2.bf16.msra.mxu0 %v3097
        %4052 = vmatprep.subr.bf16.mxu0 %v3092
        %4053 = vmatpush2.bf16.msra.mxu0 %v3091
        %4054 = vmatprep.subr.bf16.mxu0 %v3086
        %4055 = vmatpush2.bf16.msra.mxu0 %v3085
        %4056 = vmatprep.mubr.bf16.mxu0 %v407
        %4057 = vmatmul.mubr.bf16.gmra.mxu0 %v406
        %v4058 = vpop.f32.mrf.mxu0
        %v4059 = vadd.f32 %v4018, %v4058
        %v4060 = vpop.f32.mrf.mxu0
        %v4061 = vadd.f32 %v4020, %v4060
        %v4062 = vpop.f32.mrf.mxu0
        %v4063 = vpop.f32.mrf.mxu0
        %4064 = vdwg.mxu0
        %4065 = vmatprep.subr.bf16.mxu0 %v3176
        %4066 = vmatpush1.bf16.msra.mxu0 %v3175
        %4067 = vmatprep.subr.bf16.mxu0 %v3170
        %4068 = vmatpush1.bf16.msra.mxu0 %v3169
        %4069 = vmatprep.subr.bf16.mxu0 %v3164
        %4070 = vmatpush1.bf16.msra.mxu0 %v3163
        %4071 = vmatprep.subr.bf16.mxu0 %v3158
        %4072 = vmatpush1.bf16.msra.mxu0 %v3157
        %4073 = vmatprep.subr.bf16.mxu0 %v3152
        %4074 = vmatpush1.bf16.msra.mxu0 %v3151
        %4075 = vmatprep.subr.bf16.mxu0 %v3146
        %4076 = vmatpush1.bf16.msra.mxu0 %v3145
        %4077 = vmatprep.subr.bf16.mxu0 %v3140
        %4078 = vmatpush1.bf16.msra.mxu0 %v3139
        %4079 = vmatprep.subr.bf16.mxu0 %v3134
        %4080 = vmatpush1.bf16.msra.mxu0 %v3133
        %4081 = vmatprep.subr.bf16.mxu0 %v3224
        %4082 = vmatpush2.bf16.msra.mxu0 %v3223
        %4083 = vmatprep.subr.bf16.mxu0 %v3218
        %4084 = vmatpush2.bf16.msra.mxu0 %v3217
        %4085 = vmatprep.subr.bf16.mxu0 %v3212
        %4086 = vmatpush2.bf16.msra.mxu0 %v3211
        %4087 = vmatprep.subr.bf16.mxu0 %v3206
        %4088 = vmatpush2.bf16.msra.mxu0 %v3205
        %4089 = vmatprep.subr.bf16.mxu0 %v3200
        %4090 = vmatpush2.bf16.msra.mxu0 %v3199
        %4091 = vmatprep.subr.bf16.mxu0 %v3194
        %4092 = vmatpush2.bf16.msra.mxu0 %v3193
        %4093 = vmatprep.subr.bf16.mxu0 %v3188
        %4094 = vmatpush2.bf16.msra.mxu0 %v3187
        %4095 = vmatprep.subr.bf16.mxu0 %v3182
        %4096 = vmatpush2.bf16.msra.mxu0 %v3181
        %4097 = vmatprep.mubr.bf16.mxu0 %v409
        %4098 = vmatmul.mubr.bf16.gmra.mxu0 %v408
        %v4099 = vpop.f32.mrf.mxu0
        %v4100 = vadd.f32 %v4059, %v4099
        %v4101 = vpop.f32.mrf.mxu0
        %v4102 = vadd.f32 %v4061, %v4101
        %v4103 = vpop.f32.mrf.mxu0
        %v4104 = vpop.f32.mrf.mxu0
        %4105 = vdwg.mxu0
        %4106 = vmatprep.subr.bf16.mxu0 %v3272
        %4107 = vmatpush1.bf16.msra.mxu0 %v3271
        %4108 = vmatprep.subr.bf16.mxu0 %v3266
        %4109 = vmatpush1.bf16.msra.mxu0 %v3265
        %4110 = vmatprep.subr.bf16.mxu0 %v3260
        %4111 = vmatpush1.bf16.msra.mxu0 %v3259
        %4112 = vmatprep.subr.bf16.mxu0 %v3254
        %4113 = vmatpush1.bf16.msra.mxu0 %v3253
        %4114 = vmatprep.subr.bf16.mxu0 %v3248
        %4115 = vmatpush1.bf16.msra.mxu0 %v3247
        %4116 = vmatprep.subr.bf16.mxu0 %v3242
        %4117 = vmatpush1.bf16.msra.mxu0 %v3241
        %4118 = vmatprep.subr.bf16.mxu0 %v3236
        %4119 = vmatpush1.bf16.msra.mxu0 %v3235
        %4120 = vmatprep.subr.bf16.mxu0 %v3230
        %4121 = vmatpush1.bf16.msra.mxu0 %v3229
        %4122 = vmatprep.subr.bf16.mxu0 %v3320
        %4123 = vmatpush2.bf16.msra.mxu0 %v3319
        %4124 = vmatprep.subr.bf16.mxu0 %v3314
        %4125 = vmatpush2.bf16.msra.mxu0 %v3313
        %4126 = vmatprep.subr.bf16.mxu0 %v3308
        %4127 = vmatpush2.bf16.msra.mxu0 %v3307
        %4128 = vmatprep.subr.bf16.mxu0 %v3302
        %4129 = vmatpush2.bf16.msra.mxu0 %v3301
        %4130 = vmatprep.subr.bf16.mxu0 %v3296
        %4131 = vmatpush2.bf16.msra.mxu0 %v3295
        %4132 = vmatprep.subr.bf16.mxu0 %v3290
        %4133 = vmatpush2.bf16.msra.mxu0 %v3289
        %4134 = vmatprep.subr.bf16.mxu0 %v3284
        %4135 = vmatpush2.bf16.msra.mxu0 %v3283
        %4136 = vmatprep.subr.bf16.mxu0 %v3278
        %4137 = vmatpush2.bf16.msra.mxu0 %v3277
        %4138 = vmatprep.mubr.bf16.mxu0 %v411
        %4139 = vmatmul.mubr.bf16.gmra.mxu0 %v410
        %v4140 = vpop.f32.mrf.mxu0
        %v4141 = vadd.f32 %v4100, %v4140
        %v4142 = vpop.f32.mrf.mxu0
        %v4143 = vadd.f32 %v4102, %v4142
        %v4144 = vpop.f32.mrf.mxu0
        %v4145 = vpop.f32.mrf.mxu0
        %4146 = vdwg.mxu0
        %4147 = vmatprep.subr.bf16.mxu0 %v2794
        %4148 = vmatpush1.bf16.msra.mxu0 %v2793
        %4149 = vmatprep.subr.bf16.mxu0 %v2788
        %4150 = vmatpush1.bf16.msra.mxu0 %v2787
        %4151 = vmatprep.subr.bf16.mxu0 %v2782
        %4152 = vmatpush1.bf16.msra.mxu0 %v2781
        %4153 = vmatprep.subr.bf16.mxu0 %v2776
        %4154 = vmatpush1.bf16.msra.mxu0 %v2775
        %4155 = vmatprep.subr.bf16.mxu0 %v2770
        %4156 = vmatpush1.bf16.msra.mxu0 %v2769
        %4157 = vmatprep.subr.bf16.mxu0 %v2764
        %4158 = vmatpush1.bf16.msra.mxu0 %v2763
        %4159 = vmatprep.subr.bf16.mxu0 %v2758
        %4160 = vmatpush1.bf16.msra.mxu0 %v2757
        %4161 = vmatprep.subr.bf16.mxu0 %v2752
        %4162 = vmatpush1.bf16.msra.mxu0 %v2751
        %4163 = vmatprep.subr.bf16.mxu0 %v2842
        %4164 = vmatpush2.bf16.msra.mxu0 %v2841
        %4165 = vmatprep.subr.bf16.mxu0 %v2836
        %4166 = vmatpush2.bf16.msra.mxu0 %v2835
        %4167 = vmatprep.subr.bf16.mxu0 %v2830
        %4168 = vmatpush2.bf16.msra.mxu0 %v2829
        %4169 = vmatprep.subr.bf16.mxu0 %v2824
        %4170 = vmatpush2.bf16.msra.mxu0 %v2823
        %4171 = vmatprep.subr.bf16.mxu0 %v2818
        %4172 = vmatpush2.bf16.msra.mxu0 %v2817
        %4173 = vmatprep.subr.bf16.mxu0 %v2812
        %4174 = vmatpush2.bf16.msra.mxu0 %v2811
        %4175 = vmatprep.subr.bf16.mxu0 %v2806
        %4176 = vmatpush2.bf16.msra.mxu0 %v2805
        %4177 = vmatprep.subr.bf16.mxu0 %v2800
        %4178 = vmatpush2.bf16.msra.mxu0 %v2799
        %4179 = vmatprep.mubr.bf16.mxu0 %v401
        %4180 = vmatmul.mubr.bf16.gmra.mxu0 %v400
        %v4181 = vpop.f32.mrf.mxu0
        %v4182 = vadd.f32 %v1002, %v4181
        %v4183 = vpop.f32.mrf.mxu0
        %v4184 = vadd.f32 %v1006, %v4183
        %v4185 = vpop.f32.mrf.mxu0
        %v4186 = vpop.f32.mrf.mxu0
        %4187 = vdwg.mxu0
        %4188 = vmatprep.subr.bf16.mxu0 %v2890
        %4189 = vmatpush1.bf16.msra.mxu0 %v2889
        %4190 = vmatprep.subr.bf16.mxu0 %v2884
        %4191 = vmatpush1.bf16.msra.mxu0 %v2883
        %4192 = vmatprep.subr.bf16.mxu0 %v2878
        %4193 = vmatpush1.bf16.msra.mxu0 %v2877
        %4194 = vmatprep.subr.bf16.mxu0 %v2872
        %4195 = vmatpush1.bf16.msra.mxu0 %v2871
        %4196 = vmatprep.subr.bf16.mxu0 %v2866
        %4197 = vmatpush1.bf16.msra.mxu0 %v2865
        %4198 = vmatprep.subr.bf16.mxu0 %v2860
        %4199 = vmatpush1.bf16.msra.mxu0 %v2859
        %4200 = vmatprep.subr.bf16.mxu0 %v2854
        %4201 = vmatpush1.bf16.msra.mxu0 %v2853
        %4202 = vmatprep.subr.bf16.mxu0 %v2848
        %4203 = vmatpush1.bf16.msra.mxu0 %v2847
        %4204 = vmatprep.subr.bf16.mxu0 %v2938
        %4205 = vmatpush2.bf16.msra.mxu0 %v2937
        %4206 = vmatprep.subr.bf16.mxu0 %v2932
        %4207 = vmatpush2.bf16.msra.mxu0 %v2931
        %4208 = vmatprep.subr.bf16.mxu0 %v2926
        %4209 = vmatpush2.bf16.msra.mxu0 %v2925
        %4210 = vmatprep.subr.bf16.mxu0 %v2920
        %4211 = vmatpush2.bf16.msra.mxu0 %v2919
        %4212 = vmatprep.subr.bf16.mxu0 %v2914
        %4213 = vmatpush2.bf16.msra.mxu0 %v2913
        %4214 = vmatprep.subr.bf16.mxu0 %v2908
        %4215 = vmatpush2.bf16.msra.mxu0 %v2907
        %4216 = vmatprep.subr.bf16.mxu0 %v2902
        %4217 = vmatpush2.bf16.msra.mxu0 %v2901
        %4218 = vmatprep.subr.bf16.mxu0 %v2896
        %4219 = vmatpush2.bf16.msra.mxu0 %v2895
        %4220 = vmatprep.mubr.bf16.mxu0 %v403
        %4221 = vmatmul.mubr.bf16.gmra.mxu0 %v402
        %v4222 = vpop.f32.mrf.mxu0
        %v4223 = vadd.f32 %v4182, %v4222
        %v4224 = vpop.f32.mrf.mxu0
        %v4225 = vadd.f32 %v4184, %v4224
        %v4226 = vpop.f32.mrf.mxu0
        %v4227 = vpop.f32.mrf.mxu0
        %4228 = vdwg.mxu0
        %4229 = vmatprep.subr.bf16.mxu0 %v2986
        %4230 = vmatpush1.bf16.msra.mxu0 %v2985
        %4231 = vmatprep.subr.bf16.mxu0 %v2980
        %4232 = vmatpush1.bf16.msra.mxu0 %v2979
        %4233 = vmatprep.subr.bf16.mxu0 %v2974
        %4234 = vmatpush1.bf16.msra.mxu0 %v2973
        %4235 = vmatprep.subr.bf16.mxu0 %v2968
        %4236 = vmatpush1.bf16.msra.mxu0 %v2967
        %4237 = vmatprep.subr.bf16.mxu0 %v2962
        %4238 = vmatpush1.bf16.msra.mxu0 %v2961
        %4239 = vmatprep.subr.bf16.mxu0 %v2956
        %4240 = vmatpush1.bf16.msra.mxu0 %v2955
        %4241 = vmatprep.subr.bf16.mxu0 %v2950
        %4242 = vmatpush1.bf16.msra.mxu0 %v2949
        %4243 = vmatprep.subr.bf16.mxu0 %v2944
        %4244 = vmatpush1.bf16.msra.mxu0 %v2943
        %4245 = vmatprep.subr.bf16.mxu0 %v3034
        %4246 = vmatpush2.bf16.msra.mxu0 %v3033
        %4247 = vmatprep.subr.bf16.mxu0 %v3028
        %4248 = vmatpush2.bf16.msra.mxu0 %v3027
        %4249 = vmatprep.subr.bf16.mxu0 %v3022
        %4250 = vmatpush2.bf16.msra.mxu0 %v3021
        %4251 = vmatprep.subr.bf16.mxu0 %v3016
        %4252 = vmatpush2.bf16.msra.mxu0 %v3015
        %4253 = vmatprep.subr.bf16.mxu0 %v3010
        %4254 = vmatpush2.bf16.msra.mxu0 %v3009
        %4255 = vmatprep.subr.bf16.mxu0 %v3004
        %4256 = vmatpush2.bf16.msra.mxu0 %v3003
        %4257 = vmatprep.subr.bf16.mxu0 %v2998
        %4258 = vmatpush2.bf16.msra.mxu0 %v2997
        %4259 = vmatprep.subr.bf16.mxu0 %v2992
        %4260 = vmatpush2.bf16.msra.mxu0 %v2991
        %4261 = vmatprep.mubr.bf16.mxu0 %v405
        %4262 = vmatmul.mubr.bf16.gmra.mxu0 %v404
        %v4263 = vpop.f32.mrf.mxu0
        %v4264 = vadd.f32 %v4223, %v4263
        %v4265 = vpop.f32.mrf.mxu0
        %v4266 = vadd.f32 %v4225, %v4265
        %v4267 = vpop.f32.mrf.mxu0
        %v4268 = vpop.f32.mrf.mxu0
        %4269 = vdwg.mxu0
        %4270 = vmatprep.subr.bf16.mxu0 %v3082
        %4271 = vmatpush1.bf16.msra.mxu0 %v3081
        %4272 = vmatprep.subr.bf16.mxu0 %v3076
        %4273 = vmatpush1.bf16.msra.mxu0 %v3075
        %4274 = vmatprep.subr.bf16.mxu0 %v3070
        %4275 = vmatpush1.bf16.msra.mxu0 %v3069
        %4276 = vmatprep.subr.bf16.mxu0 %v3064
        %4277 = vmatpush1.bf16.msra.mxu0 %v3063
        %4278 = vmatprep.subr.bf16.mxu0 %v3058
        %4279 = vmatpush1.bf16.msra.mxu0 %v3057
        %4280 = vmatprep.subr.bf16.mxu0 %v3052
        %4281 = vmatpush1.bf16.msra.mxu0 %v3051
        %4282 = vmatprep.subr.bf16.mxu0 %v3046
        %4283 = vmatpush1.bf16.msra.mxu0 %v3045
        %4284 = vmatprep.subr.bf16.mxu0 %v3040
        %4285 = vmatpush1.bf16.msra.mxu0 %v3039
        %4286 = vmatprep.subr.bf16.mxu0 %v3130
        %4287 = vmatpush2.bf16.msra.mxu0 %v3129
        %4288 = vmatprep.subr.bf16.mxu0 %v3124
        %4289 = vmatpush2.bf16.msra.mxu0 %v3123
        %4290 = vmatprep.subr.bf16.mxu0 %v3118
        %4291 = vmatpush2.bf16.msra.mxu0 %v3117
        %4292 = vmatprep.subr.bf16.mxu0 %v3112
        %4293 = vmatpush2.bf16.msra.mxu0 %v3111
        %4294 = vmatprep.subr.bf16.mxu0 %v3106
        %4295 = vmatpush2.bf16.msra.mxu0 %v3105
        %4296 = vmatprep.subr.bf16.mxu0 %v3100
        %4297 = vmatpush2.bf16.msra.mxu0 %v3099
        %4298 = vmatprep.subr.bf16.mxu0 %v3094
        %4299 = vmatpush2.bf16.msra.mxu0 %v3093
        %4300 = vmatprep.subr.bf16.mxu0 %v3088
        %4301 = vmatpush2.bf16.msra.mxu0 %v3087
        %4302 = vmatprep.mubr.bf16.mxu0 %v407
        %4303 = vmatmul.mubr.bf16.gmra.mxu0 %v406
        %v4304 = vpop.f32.mrf.mxu0
        %v4305 = vadd.f32 %v4264, %v4304
        %v4306 = vpop.f32.mrf.mxu0
        %v4307 = vadd.f32 %v4266, %v4306
        %v4308 = vpop.f32.mrf.mxu0
        %v4309 = vpop.f32.mrf.mxu0
        %4310 = vdwg.mxu0
        %4311 = vmatprep.subr.bf16.mxu0 %v3178
        %4312 = vmatpush1.bf16.msra.mxu0 %v3177
        %4313 = vmatprep.subr.bf16.mxu0 %v3172
        %4314 = vmatpush1.bf16.msra.mxu0 %v3171
        %4315 = vmatprep.subr.bf16.mxu0 %v3166
        %4316 = vmatpush1.bf16.msra.mxu0 %v3165
        %4317 = vmatprep.subr.bf16.mxu0 %v3160
        %4318 = vmatpush1.bf16.msra.mxu0 %v3159
        %4319 = vmatprep.subr.bf16.mxu0 %v3154
        %4320 = vmatpush1.bf16.msra.mxu0 %v3153
        %4321 = vmatprep.subr.bf16.mxu0 %v3148
        %4322 = vmatpush1.bf16.msra.mxu0 %v3147
        %4323 = vmatprep.subr.bf16.mxu0 %v3142
        %4324 = vmatpush1.bf16.msra.mxu0 %v3141
        %4325 = vmatprep.subr.bf16.mxu0 %v3136
        %4326 = vmatpush1.bf16.msra.mxu0 %v3135
        %4327 = vmatprep.subr.bf16.mxu0 %v3226
        %4328 = vmatpush2.bf16.msra.mxu0 %v3225
        %4329 = vmatprep.subr.bf16.mxu0 %v3220
        %4330 = vmatpush2.bf16.msra.mxu0 %v3219
        %4331 = vmatprep.subr.bf16.mxu0 %v3214
        %4332 = vmatpush2.bf16.msra.mxu0 %v3213
        %4333 = vmatprep.subr.bf16.mxu0 %v3208
        %4334 = vmatpush2.bf16.msra.mxu0 %v3207
        %4335 = vmatprep.subr.bf16.mxu0 %v3202
        %4336 = vmatpush2.bf16.msra.mxu0 %v3201
        %4337 = vmatprep.subr.bf16.mxu0 %v3196
        %4338 = vmatpush2.bf16.msra.mxu0 %v3195
        %4339 = vmatprep.subr.bf16.mxu0 %v3190
        %4340 = vmatpush2.bf16.msra.mxu0 %v3189
        %4341 = vmatprep.subr.bf16.mxu0 %v3184
        %4342 = vmatpush2.bf16.msra.mxu0 %v3183
        %4343 = vmatprep.mubr.bf16.mxu0 %v409
        %4344 = vmatmul.mubr.bf16.gmra.mxu0 %v408
        %v4345 = vpop.f32.mrf.mxu0
        %v4346 = vadd.f32 %v4305, %v4345
        %v4347 = vpop.f32.mrf.mxu0
        %v4348 = vadd.f32 %v4307, %v4347
        %v4349 = vpop.f32.mrf.mxu0
        %v4350 = vpop.f32.mrf.mxu0
        %4351 = vdwg.mxu0
        %4352 = vmatprep.subr.bf16.mxu0 %v3274
        %4353 = vmatpush1.bf16.msra.mxu0 %v3273
        %4354 = vmatprep.subr.bf16.mxu0 %v3268
        %4355 = vmatpush1.bf16.msra.mxu0 %v3267
        %4356 = vmatprep.subr.bf16.mxu0 %v3262
        %4357 = vmatpush1.bf16.msra.mxu0 %v3261
        %4358 = vmatprep.subr.bf16.mxu0 %v3256
        %4359 = vmatpush1.bf16.msra.mxu0 %v3255
        %4360 = vmatprep.subr.bf16.mxu0 %v3250
        %4361 = vmatpush1.bf16.msra.mxu0 %v3249
        %4362 = vmatprep.subr.bf16.mxu0 %v3244
        %4363 = vmatpush1.bf16.msra.mxu0 %v3243
        %4364 = vmatprep.subr.bf16.mxu0 %v3238
        %4365 = vmatpush1.bf16.msra.mxu0 %v3237
        %4366 = vmatprep.subr.bf16.mxu0 %v3232
        %4367 = vmatpush1.bf16.msra.mxu0 %v3231
        %4368 = vmatprep.subr.bf16.mxu0 %v3322
        %4369 = vmatpush2.bf16.msra.mxu0 %v3321
        %4370 = vmatprep.subr.bf16.mxu0 %v3316
        %4371 = vmatpush2.bf16.msra.mxu0 %v3315
        %4372 = vmatprep.subr.bf16.mxu0 %v3310
        %4373 = vmatpush2.bf16.msra.mxu0 %v3309
        %4374 = vmatprep.subr.bf16.mxu0 %v3304
        %4375 = vmatpush2.bf16.msra.mxu0 %v3303
        %4376 = vmatprep.subr.bf16.mxu0 %v3298
        %4377 = vmatpush2.bf16.msra.mxu0 %v3297
        %4378 = vmatprep.subr.bf16.mxu0 %v3292
        %4379 = vmatpush2.bf16.msra.mxu0 %v3291
        %4380 = vmatprep.subr.bf16.mxu0 %v3286
        %4381 = vmatpush2.bf16.msra.mxu0 %v3285
        %4382 = vmatprep.subr.bf16.mxu0 %v3280
        %4383 = vmatpush2.bf16.msra.mxu0 %v3279
        %4384 = vmatprep.mubr.bf16.mxu0 %v411
        %4385 = vmatmul.mubr.bf16.gmra.mxu0 %v410
        %v4386 = vpop.f32.mrf.mxu0
        %v4387 = vadd.f32 %v4346, %v4386
        %v4388 = vpop.f32.mrf.mxu0
        %v4389 = vadd.f32 %v4348, %v4388
        %v4390 = vpop.f32.mrf.mxu0
        %v4391 = vpop.f32.mrf.mxu0
        %4392 = vdwg.mxu0
        %4393 = vmatprep.subr.bf16.mxu0 %v2796
        %4394 = vmatpush1.bf16.msra.mxu0 %v2795
        %4395 = vmatprep.subr.bf16.mxu0 %v2790
        %4396 = vmatpush1.bf16.msra.mxu0 %v2789
        %4397 = vmatprep.subr.bf16.mxu0 %v2784
        %4398 = vmatpush1.bf16.msra.mxu0 %v2783
        %4399 = vmatprep.subr.bf16.mxu0 %v2778
        %4400 = vmatpush1.bf16.msra.mxu0 %v2777
        %4401 = vmatprep.subr.bf16.mxu0 %v2772
        %4402 = vmatpush1.bf16.msra.mxu0 %v2771
        %4403 = vmatprep.subr.bf16.mxu0 %v2766
        %4404 = vmatpush1.bf16.msra.mxu0 %v2765
        %4405 = vmatprep.subr.bf16.mxu0 %v2760
        %4406 = vmatpush1.bf16.msra.mxu0 %v2759
        %4407 = vmatprep.subr.bf16.mxu0 %v2754
        %4408 = vmatpush1.bf16.msra.mxu0 %v2753
        %4409 = vmatprep.subr.bf16.mxu0 %v2844
        %4410 = vmatpush2.bf16.msra.mxu0 %v2843
        %4411 = vmatprep.subr.bf16.mxu0 %v2838
        %4412 = vmatpush2.bf16.msra.mxu0 %v2837
        %4413 = vmatprep.subr.bf16.mxu0 %v2832
        %4414 = vmatpush2.bf16.msra.mxu0 %v2831
        %4415 = vmatprep.subr.bf16.mxu0 %v2826
        %4416 = vmatpush2.bf16.msra.mxu0 %v2825
        %4417 = vmatprep.subr.bf16.mxu0 %v2820
        %4418 = vmatpush2.bf16.msra.mxu0 %v2819
        %4419 = vmatprep.subr.bf16.mxu0 %v2814
        %4420 = vmatpush2.bf16.msra.mxu0 %v2813
        %4421 = vmatprep.subr.bf16.mxu0 %v2808
        %4422 = vmatpush2.bf16.msra.mxu0 %v2807
        %4423 = vmatprep.subr.bf16.mxu0 %v2802
        %4424 = vmatpush2.bf16.msra.mxu0 %v2801
        %4425 = vmatprep.mubr.bf16.mxu0 %v401
        %4426 = vmatmul.mubr.bf16.gmra.mxu0 %v400
        %v4427 = vpop.f32.mrf.mxu0
        %v4428 = vadd.f32 %v1010, %v4427
        %v4429 = vpop.f32.mrf.mxu0
        %v4430 = vadd.f32 %v1014, %v4429
        %v4431 = vpop.f32.mrf.mxu0
        %v4432 = vpop.f32.mrf.mxu0
        %4433 = vdwg.mxu0
        %4434 = vmatprep.subr.bf16.mxu0 %v2892
        %4435 = vmatpush1.bf16.msra.mxu0 %v2891
        %4436 = vmatprep.subr.bf16.mxu0 %v2886
        %4437 = vmatpush1.bf16.msra.mxu0 %v2885
        %4438 = vmatprep.subr.bf16.mxu0 %v2880
        %4439 = vmatpush1.bf16.msra.mxu0 %v2879
        %4440 = vmatprep.subr.bf16.mxu0 %v2874
        %4441 = vmatpush1.bf16.msra.mxu0 %v2873
        %4442 = vmatprep.subr.bf16.mxu0 %v2868
        %4443 = vmatpush1.bf16.msra.mxu0 %v2867
        %4444 = vmatprep.subr.bf16.mxu0 %v2862
        %4445 = vmatpush1.bf16.msra.mxu0 %v2861
        %4446 = vmatprep.subr.bf16.mxu0 %v2856
        %4447 = vmatpush1.bf16.msra.mxu0 %v2855
        %4448 = vmatprep.subr.bf16.mxu0 %v2850
        %4449 = vmatpush1.bf16.msra.mxu0 %v2849
        %4450 = vmatprep.subr.bf16.mxu0 %v2940
        %4451 = vmatpush2.bf16.msra.mxu0 %v2939
        %4452 = vmatprep.subr.bf16.mxu0 %v2934
        %4453 = vmatpush2.bf16.msra.mxu0 %v2933
        %4454 = vmatprep.subr.bf16.mxu0 %v2928
        %4455 = vmatpush2.bf16.msra.mxu0 %v2927
        %4456 = vmatprep.subr.bf16.mxu0 %v2922
        %4457 = vmatpush2.bf16.msra.mxu0 %v2921
        %4458 = vmatprep.subr.bf16.mxu0 %v2916
        %4459 = vmatpush2.bf16.msra.mxu0 %v2915
        %4460 = vmatprep.subr.bf16.mxu0 %v2910
        %4461 = vmatpush2.bf16.msra.mxu0 %v2909
        %4462 = vmatprep.subr.bf16.mxu0 %v2904
        %4463 = vmatpush2.bf16.msra.mxu0 %v2903
        %4464 = vmatprep.subr.bf16.mxu0 %v2898
        %4465 = vmatpush2.bf16.msra.mxu0 %v2897
        %4466 = vmatprep.mubr.bf16.mxu0 %v403
        %4467 = vmatmul.mubr.bf16.gmra.mxu0 %v402
        %v4468 = vpop.f32.mrf.mxu0
        %v4469 = vadd.f32 %v4428, %v4468
        %v4470 = vpop.f32.mrf.mxu0
        %v4471 = vadd.f32 %v4430, %v4470
        %v4472 = vpop.f32.mrf.mxu0
        %v4473 = vpop.f32.mrf.mxu0
        %4474 = vdwg.mxu0
        %4475 = vmatprep.subr.bf16.mxu0 %v2988
        %4476 = vmatpush1.bf16.msra.mxu0 %v2987
        %4477 = vmatprep.subr.bf16.mxu0 %v2982
        %4478 = vmatpush1.bf16.msra.mxu0 %v2981
        %4479 = vmatprep.subr.bf16.mxu0 %v2976
        %4480 = vmatpush1.bf16.msra.mxu0 %v2975
        %4481 = vmatprep.subr.bf16.mxu0 %v2970
        %4482 = vmatpush1.bf16.msra.mxu0 %v2969
        %4483 = vmatprep.subr.bf16.mxu0 %v2964
        %4484 = vmatpush1.bf16.msra.mxu0 %v2963
        %4485 = vmatprep.subr.bf16.mxu0 %v2958
        %4486 = vmatpush1.bf16.msra.mxu0 %v2957
        %4487 = vmatprep.subr.bf16.mxu0 %v2952
        %4488 = vmatpush1.bf16.msra.mxu0 %v2951
        %4489 = vmatprep.subr.bf16.mxu0 %v2946
        %4490 = vmatpush1.bf16.msra.mxu0 %v2945
        %4491 = vmatprep.subr.bf16.mxu0 %v3036
        %4492 = vmatpush2.bf16.msra.mxu0 %v3035
        %4493 = vmatprep.subr.bf16.mxu0 %v3030
        %4494 = vmatpush2.bf16.msra.mxu0 %v3029
        %4495 = vmatprep.subr.bf16.mxu0 %v3024
        %4496 = vmatpush2.bf16.msra.mxu0 %v3023
        %4497 = vmatprep.subr.bf16.mxu0 %v3018
        %4498 = vmatpush2.bf16.msra.mxu0 %v3017
        %4499 = vmatprep.subr.bf16.mxu0 %v3012
        %4500 = vmatpush2.bf16.msra.mxu0 %v3011
        %4501 = vmatprep.subr.bf16.mxu0 %v3006
        %4502 = vmatpush2.bf16.msra.mxu0 %v3005
        %4503 = vmatprep.subr.bf16.mxu0 %v3000
        %4504 = vmatpush2.bf16.msra.mxu0 %v2999
        %4505 = vmatprep.subr.bf16.mxu0 %v2994
        %4506 = vmatpush2.bf16.msra.mxu0 %v2993
        %4507 = vmatprep.mubr.bf16.mxu0 %v405
        %4508 = vmatmul.mubr.bf16.gmra.mxu0 %v404
        %v4509 = vpop.f32.mrf.mxu0
        %v4510 = vadd.f32 %v4469, %v4509
        %v4511 = vpop.f32.mrf.mxu0
        %v4512 = vadd.f32 %v4471, %v4511
        %v4513 = vpop.f32.mrf.mxu0
        %v4514 = vpop.f32.mrf.mxu0
        %4515 = vdwg.mxu0
        %4516 = vmatprep.subr.bf16.mxu0 %v3084
        %4517 = vmatpush1.bf16.msra.mxu0 %v3083
        %4518 = vmatprep.subr.bf16.mxu0 %v3078
        %4519 = vmatpush1.bf16.msra.mxu0 %v3077
        %4520 = vmatprep.subr.bf16.mxu0 %v3072
        %4521 = vmatpush1.bf16.msra.mxu0 %v3071
        %4522 = vmatprep.subr.bf16.mxu0 %v3066
        %4523 = vmatpush1.bf16.msra.mxu0 %v3065
        %4524 = vmatprep.subr.bf16.mxu0 %v3060
        %4525 = vmatpush1.bf16.msra.mxu0 %v3059
        %4526 = vmatprep.subr.bf16.mxu0 %v3054
        %4527 = vmatpush1.bf16.msra.mxu0 %v3053
        %4528 = vmatprep.subr.bf16.mxu0 %v3048
        %4529 = vmatpush1.bf16.msra.mxu0 %v3047
        %4530 = vmatprep.subr.bf16.mxu0 %v3042
        %4531 = vmatpush1.bf16.msra.mxu0 %v3041
        %4532 = vmatprep.subr.bf16.mxu0 %v3132
        %4533 = vmatpush2.bf16.msra.mxu0 %v3131
        %4534 = vmatprep.subr.bf16.mxu0 %v3126
        %4535 = vmatpush2.bf16.msra.mxu0 %v3125
        %4536 = vmatprep.subr.bf16.mxu0 %v3120
        %4537 = vmatpush2.bf16.msra.mxu0 %v3119
        %4538 = vmatprep.subr.bf16.mxu0 %v3114
        %4539 = vmatpush2.bf16.msra.mxu0 %v3113
        %4540 = vmatprep.subr.bf16.mxu0 %v3108
        %4541 = vmatpush2.bf16.msra.mxu0 %v3107
        %4542 = vmatprep.subr.bf16.mxu0 %v3102
        %4543 = vmatpush2.bf16.msra.mxu0 %v3101
        %4544 = vmatprep.subr.bf16.mxu0 %v3096
        %4545 = vmatpush2.bf16.msra.mxu0 %v3095
        %4546 = vmatprep.subr.bf16.mxu0 %v3090
        %4547 = vmatpush2.bf16.msra.mxu0 %v3089
        %4548 = vmatprep.mubr.bf16.mxu0 %v407
        %4549 = vmatmul.mubr.bf16.gmra.mxu0 %v406
        %v4550 = vpop.f32.mrf.mxu0
        %v4551 = vadd.f32 %v4510, %v4550
        %v4552 = vpop.f32.mrf.mxu0
        %v4553 = vadd.f32 %v4512, %v4552
        %v4554 = vpop.f32.mrf.mxu0
        %v4555 = vpop.f32.mrf.mxu0
        %4556 = vdwg.mxu0
        %4557 = vmatprep.subr.bf16.mxu0 %v3180
        %4558 = vmatpush1.bf16.msra.mxu0 %v3179
        %4559 = vmatprep.subr.bf16.mxu0 %v3174
        %4560 = vmatpush1.bf16.msra.mxu0 %v3173
        %4561 = vmatprep.subr.bf16.mxu0 %v3168
        %4562 = vmatpush1.bf16.msra.mxu0 %v3167
        %4563 = vmatprep.subr.bf16.mxu0 %v3162
        %4564 = vmatpush1.bf16.msra.mxu0 %v3161
        %4565 = vmatprep.subr.bf16.mxu0 %v3156
        %4566 = vmatpush1.bf16.msra.mxu0 %v3155
        %4567 = vmatprep.subr.bf16.mxu0 %v3150
        %4568 = vmatpush1.bf16.msra.mxu0 %v3149
        %4569 = vmatprep.subr.bf16.mxu0 %v3144
        %4570 = vmatpush1.bf16.msra.mxu0 %v3143
        %4571 = vmatprep.subr.bf16.mxu0 %v3138
        %4572 = vmatpush1.bf16.msra.mxu0 %v3137
        %4573 = vmatprep.subr.bf16.mxu0 %v3228
        %4574 = vmatpush2.bf16.msra.mxu0 %v3227
        %4575 = vmatprep.subr.bf16.mxu0 %v3222
        %4576 = vmatpush2.bf16.msra.mxu0 %v3221
        %4577 = vmatprep.subr.bf16.mxu0 %v3216
        %4578 = vmatpush2.bf16.msra.mxu0 %v3215
        %4579 = vmatprep.subr.bf16.mxu0 %v3210
        %4580 = vmatpush2.bf16.msra.mxu0 %v3209
        %4581 = vmatprep.subr.bf16.mxu0 %v3204
        %4582 = vmatpush2.bf16.msra.mxu0 %v3203
        %4583 = vmatprep.subr.bf16.mxu0 %v3198
        %4584 = vmatpush2.bf16.msra.mxu0 %v3197
        %4585 = vmatprep.subr.bf16.mxu0 %v3192
        %4586 = vmatpush2.bf16.msra.mxu0 %v3191
        %4587 = vmatprep.subr.bf16.mxu0 %v3186
        %4588 = vmatpush2.bf16.msra.mxu0 %v3185
        %4589 = vmatprep.mubr.bf16.mxu0 %v409
        %4590 = vmatmul.mubr.bf16.gmra.mxu0 %v408
        %v4591 = vpop.f32.mrf.mxu0
        %v4592 = vadd.f32 %v4551, %v4591
        %v4593 = vpop.f32.mrf.mxu0
        %v4594 = vadd.f32 %v4553, %v4593
        %v4595 = vpop.f32.mrf.mxu0
        %v4596 = vpop.f32.mrf.mxu0
        %4597 = vdwg.mxu0
        %4598 = vmatprep.subr.bf16.mxu0 %v3276
        %4599 = vmatpush1.bf16.msra.mxu0 %v3275
        %4600 = vmatprep.subr.bf16.mxu0 %v3270
        %4601 = vmatpush1.bf16.msra.mxu0 %v3269
        %4602 = vmatprep.subr.bf16.mxu0 %v3264
        %4603 = vmatpush1.bf16.msra.mxu0 %v3263
        %4604 = vmatprep.subr.bf16.mxu0 %v3258
        %4605 = vmatpush1.bf16.msra.mxu0 %v3257
        %4606 = vmatprep.subr.bf16.mxu0 %v3252
        %4607 = vmatpush1.bf16.msra.mxu0 %v3251
        %4608 = vmatprep.subr.bf16.mxu0 %v3246
        %4609 = vmatpush1.bf16.msra.mxu0 %v3245
        %4610 = vmatprep.subr.bf16.mxu0 %v3240
        %4611 = vmatpush1.bf16.msra.mxu0 %v3239
        %4612 = vmatprep.subr.bf16.mxu0 %v3234
        %4613 = vmatpush1.bf16.msra.mxu0 %v3233
        %4614 = vmatprep.subr.bf16.mxu0 %v3324
        %4615 = vmatpush2.bf16.msra.mxu0 %v3323
        %4616 = vmatprep.subr.bf16.mxu0 %v3318
        %4617 = vmatpush2.bf16.msra.mxu0 %v3317
        %4618 = vmatprep.subr.bf16.mxu0 %v3312
        %4619 = vmatpush2.bf16.msra.mxu0 %v3311
        %4620 = vmatprep.subr.bf16.mxu0 %v3306
        %4621 = vmatpush2.bf16.msra.mxu0 %v3305
        %4622 = vmatprep.subr.bf16.mxu0 %v3300
        %4623 = vmatpush2.bf16.msra.mxu0 %v3299
        %4624 = vmatprep.subr.bf16.mxu0 %v3294
        %4625 = vmatpush2.bf16.msra.mxu0 %v3293
        %4626 = vmatprep.subr.bf16.mxu0 %v3288
        %4627 = vmatpush2.bf16.msra.mxu0 %v3287
        %4628 = vmatprep.subr.bf16.mxu0 %v3282
        %4629 = vmatpush2.bf16.msra.mxu0 %v3281
        %4630 = vmatprep.mubr.bf16.mxu0 %v411
        %4631 = vmatmul.mubr.bf16.gmra.mxu0 %v410
        %v4632 = vpop.f32.mrf.mxu0
        %v4633 = vadd.f32 %v4592, %v4632
        %v4634 = vpop.f32.mrf.mxu0
        %v4635 = vadd.f32 %v4594, %v4634
        %v4636 = vpop.f32.mrf.mxu0
        %v4637 = vpop.f32.mrf.mxu0
        %4638 = vdwg.mxu0
        %v4639 = vmul.f32 %v4141, 0.5
        %v4640 = vmul.f32 %v4143, 0.5
        %v4641 = vmul.f32 %v4387, 0.5
        %v4642 = vmul.f32 %v4389, 0.5
        %v4643 = vmul.f32 %v4633, 0.5
        %v4644 = vmul.f32 %v4635, 0.5
        %v4645 = vmul.f32 %v4141, 0.70710677
        %v4646 = vmul.f32 %v4143, 0.70710677
        %v4647 = vmul.f32 %v4387, 0.70710677
        %v4648 = vmul.f32 %v4389, 0.70710677
        %v4649 = vmul.f32 %v4633, 0.70710677
        %v4650 = vmul.f32 %v4635, 0.70710677
        %v4651 = verf.f32.pop %v4645
        %v4652 = verf.f32.pop %v4646
        %v4653 = verf.f32.pop %v4647
        %v4654 = verf.f32.pop %v4648
        %v4655 = verf.f32.pop %v4649
        %v4656 = verf.f32.pop %v4650
        %v4657 = vadd.f32 %v4651, 1.0
        %v4658 = vadd.f32 %v4652, 1.0
        %v4659 = vadd.f32 %v4653, 1.0
        %v4660 = vadd.f32 %v4654, 1.0
        %v4661 = vadd.f32 %v4655, 1.0
        %v4662 = vadd.f32 %v4656, 1.0
        %v4663 = vmul.f32 %v4639, %v4657
        %v4664 = vmul.f32 %v4640, %v4658
        %v4665 = vmul.f32 %v4641, %v4659
        %v4666 = vmul.f32 %v4642, %v4660
        %v4667 = vmul.f32 %v4643, %v4661
        %v4668 = vmul.f32 %v4644, %v4662
        %v4669 = vpack.c.bf16 %v4663, %v4663
        %v4670 = vpack.c.bf16 %v4664, %v4664
        %v4671 = vpack.c.bf16 %v4665, %v4665
        %v4672 = vpack.c.bf16 %v4666, %v4666
        %v4673 = vpack.c.bf16 %v4667, %v4667
        %v4674 = vpack.c.bf16 %v4668, %v4668
        %v4675 = vld [vmem:[%s337] sm:$0xff]
        %v4676 = vld [vmem:[%s337 + $0x8] sm:$0xff]
        %v4677 = vld [vmem:[%s337 + $0x10] sm:$0xff]
        %v4678 = vld [vmem:[%s337 + $0x18] sm:$0xff]
        %v4679 = vld [vmem:[%s337 + $0x20] sm:$0xff]
        %v4680 = vld [vmem:[%s337 + $0x28] sm:$0xff]
        %v4681 = vld [vmem:[%s337 + $0x30] sm:$0xff]
        %v4682 = vld [vmem:[%s337 + $0x38] sm:$0xff]
        %v4683 = vld [vmem:[%s337 + $0x40] sm:$0xff]
        %v4684 = vld [vmem:[%s337 + $0x48] sm:$0xff]
        %v4685 = vld [vmem:[%s337 + $0x50] sm:$0xff]
        %v4686 = vld [vmem:[%s337 + $0x58] sm:$0xff]
        %v4687 = vld [vmem:[%s337 + $0x60] sm:$0xff]
        %v4688 = vld [vmem:[%s337 + $0x68] sm:$0xff]
        %v4689 = vld [vmem:[%s337 + $0x70] sm:$0xff]
        %v4690 = vld [vmem:[%s337 + $0x78] sm:$0xff]
        %v4691 = vld [vmem:[%s337 + $0x80] sm:$0xff]
        %v4692 = vld [vmem:[%s337 + $0x88] sm:$0xff]
        %v4693 = vld [vmem:[%s337 + $0x90] sm:$0xff]
        %v4694 = vld [vmem:[%s337 + $0x98] sm:$0xff]
        %v4695 = vld [vmem:[%s337 + $0xa0] sm:$0xff]
        %v4696 = vld [vmem:[%s337 + $0xa8] sm:$0xff]
        %v4697 = vld [vmem:[%s337 + $0xb0] sm:$0xff]
        %v4698 = vld [vmem:[%s337 + $0xb8] sm:$0xff]
        %v4699 = vld [vmem:[%s337 + $0xc0] sm:$0xff]
        %v4700 = vld [vmem:[%s337 + $0xc8] sm:$0xff]
        %v4701 = vld [vmem:[%s337 + $0xd0] sm:$0xff]
        %v4702 = vld [vmem:[%s337 + $0xd8] sm:$0xff]
        %v4703 = vld [vmem:[%s337 + $0xe0] sm:$0xff]
        %v4704 = vld [vmem:[%s337 + $0xe8] sm:$0xff]
        %v4705 = vld [vmem:[%s337 + $0xf0] sm:$0xff]
        %v4706 = vld [vmem:[%s337 + $0xf8] sm:$0xff]
        %v4707 = vld [vmem:[%s337 + $0x100] sm:$0xff]
        %v4708 = vld [vmem:[%s337 + $0x108] sm:$0xff]
        %v4709 = vld [vmem:[%s337 + $0x110] sm:$0xff]
        %v4710 = vld [vmem:[%s337 + $0x118] sm:$0xff]
        %v4711 = vld [vmem:[%s337 + $0x120] sm:$0xff]
        %v4712 = vld [vmem:[%s337 + $0x128] sm:$0xff]
        %v4713 = vld [vmem:[%s337 + $0x130] sm:$0xff]
        %v4714 = vld [vmem:[%s337 + $0x138] sm:$0xff]
        %v4715 = vld [vmem:[%s337 + $0x140] sm:$0xff]
        %v4716 = vld [vmem:[%s337 + $0x148] sm:$0xff]
        %v4717 = vld [vmem:[%s337 + $0x150] sm:$0xff]
        %v4718 = vld [vmem:[%s337 + $0x158] sm:$0xff]
        %v4719 = vld [vmem:[%s337 + $0x160] sm:$0xff]
        %v4720 = vld [vmem:[%s337 + $0x168] sm:$0xff]
        %v4721 = vld [vmem:[%s337 + $0x170] sm:$0xff]
        %v4722 = vld [vmem:[%s337 + $0x178] sm:$0xff]
        %v4723 = vld [vmem:[%s337 + $0x180] sm:$0xff]
        %v4724 = vld [vmem:[%s337 + $0x188] sm:$0xff]
        %v4725 = vld [vmem:[%s337 + $0x190] sm:$0xff]
        %v4726 = vld [vmem:[%s337 + $0x198] sm:$0xff]
        %v4727 = vld [vmem:[%s337 + $0x1a0] sm:$0xff]
        %v4728 = vld [vmem:[%s337 + $0x1a8] sm:$0xff]
        %v4729 = vld [vmem:[%s337 + $0x1b0] sm:$0xff]
        %v4730 = vld [vmem:[%s337 + $0x1b8] sm:$0xff]
        %v4731 = vld [vmem:[%s337 + $0x1c0] sm:$0xff]
        %v4732 = vld [vmem:[%s337 + $0x1c8] sm:$0xff]
        %v4733 = vld [vmem:[%s337 + $0x1d0] sm:$0xff]
        %v4734 = vld [vmem:[%s337 + $0x1d8] sm:$0xff]
        %v4735 = vld [vmem:[%s337 + $0x1e0] sm:$0xff]
        %v4736 = vld [vmem:[%s337 + $0x1e8] sm:$0xff]
        %v4737 = vld [vmem:[%s337 + $0x1f0] sm:$0xff]
        %v4738 = vld [vmem:[%s337 + $0x1f8] sm:$0xff]
        %v4739 = vld [vmem:[%s337 + $0x200] sm:$0xff]
        %v4740 = vld [vmem:[%s337 + $0x208] sm:$0xff]
        %v4741 = vld [vmem:[%s337 + $0x210] sm:$0xff]
        %v4742 = vld [vmem:[%s337 + $0x218] sm:$0xff]
        %v4743 = vld [vmem:[%s337 + $0x220] sm:$0xff]
        %v4744 = vld [vmem:[%s337 + $0x228] sm:$0xff]
        %v4745 = vld [vmem:[%s337 + $0x230] sm:$0xff]
        %v4746 = vld [vmem:[%s337 + $0x238] sm:$0xff]
        %v4747 = vld [vmem:[%s337 + $0x240] sm:$0xff]
        %v4748 = vld [vmem:[%s337 + $0x248] sm:$0xff]
        %v4749 = vld [vmem:[%s337 + $0x250] sm:$0xff]
        %v4750 = vld [vmem:[%s337 + $0x258] sm:$0xff]
        %v4751 = vld [vmem:[%s337 + $0x260] sm:$0xff]
        %v4752 = vld [vmem:[%s337 + $0x268] sm:$0xff]
        %v4753 = vld [vmem:[%s337 + $0x270] sm:$0xff]
        %v4754 = vld [vmem:[%s337 + $0x278] sm:$0xff]
        %v4755 = vld [vmem:[%s337 + $0x280] sm:$0xff]
        %v4756 = vld [vmem:[%s337 + $0x288] sm:$0xff]
        %v4757 = vld [vmem:[%s337 + $0x290] sm:$0xff]
        %v4758 = vld [vmem:[%s337 + $0x298] sm:$0xff]
        %v4759 = vld [vmem:[%s337 + $0x2a0] sm:$0xff]
        %v4760 = vld [vmem:[%s337 + $0x2a8] sm:$0xff]
        %v4761 = vld [vmem:[%s337 + $0x2b0] sm:$0xff]
        %v4762 = vld [vmem:[%s337 + $0x2b8] sm:$0xff]
        %v4763 = vld [vmem:[%s337 + $0x2c0] sm:$0xff]
        %v4764 = vld [vmem:[%s337 + $0x2c8] sm:$0xff]
        %v4765 = vld [vmem:[%s337 + $0x2d0] sm:$0xff]
        %v4766 = vld [vmem:[%s337 + $0x2d8] sm:$0xff]
        %v4767 = vld [vmem:[%s337 + $0x2e0] sm:$0xff]
        %v4768 = vld [vmem:[%s337 + $0x2e8] sm:$0xff]
        %v4769 = vld [vmem:[%s337 + $0x2f0] sm:$0xff]
        %v4770 = vld [vmem:[%s337 + $0x2f8] sm:$0xff]
        %v4771 = vld [vmem:[%s337 + $0x300] sm:$0xff]
        %v4772 = vld [vmem:[%s337 + $0x308] sm:$0xff]
        %v4773 = vld [vmem:[%s337 + $0x310] sm:$0xff]
        %v4774 = vld [vmem:[%s337 + $0x318] sm:$0xff]
        %v4775 = vld [vmem:[%s337 + $0x320] sm:$0xff]
        %v4776 = vld [vmem:[%s337 + $0x328] sm:$0xff]
        %v4777 = vld [vmem:[%s337 + $0x330] sm:$0xff]
        %v4778 = vld [vmem:[%s337 + $0x338] sm:$0xff]
        %v4779 = vld [vmem:[%s337 + $0x340] sm:$0xff]
        %v4780 = vld [vmem:[%s337 + $0x348] sm:$0xff]
        %v4781 = vld [vmem:[%s337 + $0x350] sm:$0xff]
        %v4782 = vld [vmem:[%s337 + $0x358] sm:$0xff]
        %v4783 = vld [vmem:[%s337 + $0x360] sm:$0xff]
        %v4784 = vld [vmem:[%s337 + $0x368] sm:$0xff]
        %v4785 = vld [vmem:[%s337 + $0x370] sm:$0xff]
        %v4786 = vld [vmem:[%s337 + $0x378] sm:$0xff]
        %v4787 = vld [vmem:[%s337 + $0x380] sm:$0xff]
        %v4788 = vld [vmem:[%s337 + $0x388] sm:$0xff]
        %v4789 = vld [vmem:[%s337 + $0x390] sm:$0xff]
        %v4790 = vld [vmem:[%s337 + $0x398] sm:$0xff]
        %v4791 = vld [vmem:[%s337 + $0x3a0] sm:$0xff]
        %v4792 = vld [vmem:[%s337 + $0x3a8] sm:$0xff]
        %v4793 = vld [vmem:[%s337 + $0x3b0] sm:$0xff]
        %v4794 = vld [vmem:[%s337 + $0x3b8] sm:$0xff]
        %v4795 = vld [vmem:[%s337 + $0x3c0] sm:$0xff]
        %v4796 = vld [vmem:[%s337 + $0x3c8] sm:$0xff]
        %v4797 = vld [vmem:[%s337 + $0x3d0] sm:$0xff]
        %v4798 = vld [vmem:[%s337 + $0x3d8] sm:$0xff]
        %v4799 = vld [vmem:[%s337 + $0x3e0] sm:$0xff]
        %v4800 = vld [vmem:[%s337 + $0x3e8] sm:$0xff]
        %v4801 = vld [vmem:[%s337 + $0x3f0] sm:$0xff]
        %v4802 = vld [vmem:[%s337 + $0x3f8] sm:$0xff]
        %v4803 = vld [vmem:[%s337 + $0x400] sm:$0xff]
        %v4804 = vld [vmem:[%s337 + $0x408] sm:$0xff]
        %v4805 = vld [vmem:[%s337 + $0x410] sm:$0xff]
        %v4806 = vld [vmem:[%s337 + $0x418] sm:$0xff]
        %v4807 = vld [vmem:[%s337 + $0x420] sm:$0xff]
        %v4808 = vld [vmem:[%s337 + $0x428] sm:$0xff]
        %v4809 = vld [vmem:[%s337 + $0x430] sm:$0xff]
        %v4810 = vld [vmem:[%s337 + $0x438] sm:$0xff]
        %v4811 = vld [vmem:[%s337 + $0x440] sm:$0xff]
        %v4812 = vld [vmem:[%s337 + $0x448] sm:$0xff]
        %v4813 = vld [vmem:[%s337 + $0x450] sm:$0xff]
        %v4814 = vld [vmem:[%s337 + $0x458] sm:$0xff]
        %v4815 = vld [vmem:[%s337 + $0x460] sm:$0xff]
        %v4816 = vld [vmem:[%s337 + $0x468] sm:$0xff]
        %v4817 = vld [vmem:[%s337 + $0x470] sm:$0xff]
        %v4818 = vld [vmem:[%s337 + $0x478] sm:$0xff]
        %v4819 = vld [vmem:[%s337 + $0x480] sm:$0xff]
        %v4820 = vld [vmem:[%s337 + $0x488] sm:$0xff]
        %v4821 = vld [vmem:[%s337 + $0x490] sm:$0xff]
        %v4822 = vld [vmem:[%s337 + $0x498] sm:$0xff]
        %v4823 = vld [vmem:[%s337 + $0x4a0] sm:$0xff]
        %v4824 = vld [vmem:[%s337 + $0x4a8] sm:$0xff]
        %v4825 = vld [vmem:[%s337 + $0x4b0] sm:$0xff]
        %v4826 = vld [vmem:[%s337 + $0x4b8] sm:$0xff]
        %v4827 = vld [vmem:[%s337 + $0x4c0] sm:$0xff]
        %v4828 = vld [vmem:[%s337 + $0x4c8] sm:$0xff]
        %v4829 = vld [vmem:[%s337 + $0x4d0] sm:$0xff]
        %v4830 = vld [vmem:[%s337 + $0x4d8] sm:$0xff]
        %v4831 = vld [vmem:[%s337 + $0x4e0] sm:$0xff]
        %v4832 = vld [vmem:[%s337 + $0x4e8] sm:$0xff]
        %v4833 = vld [vmem:[%s337 + $0x4f0] sm:$0xff]
        %v4834 = vld [vmem:[%s337 + $0x4f8] sm:$0xff]
        %v4835 = vld [vmem:[%s337 + $0x500] sm:$0xff]
        %v4836 = vld [vmem:[%s337 + $0x508] sm:$0xff]
        %v4837 = vld [vmem:[%s337 + $0x510] sm:$0xff]
        %v4838 = vld [vmem:[%s337 + $0x518] sm:$0xff]
        %v4839 = vld [vmem:[%s337 + $0x520] sm:$0xff]
        %v4840 = vld [vmem:[%s337 + $0x528] sm:$0xff]
        %v4841 = vld [vmem:[%s337 + $0x530] sm:$0xff]
        %v4842 = vld [vmem:[%s337 + $0x538] sm:$0xff]
        %v4843 = vld [vmem:[%s337 + $0x540] sm:$0xff]
        %v4844 = vld [vmem:[%s337 + $0x548] sm:$0xff]
        %v4845 = vld [vmem:[%s337 + $0x550] sm:$0xff]
        %v4846 = vld [vmem:[%s337 + $0x558] sm:$0xff]
        %v4847 = vld [vmem:[%s337 + $0x560] sm:$0xff]
        %v4848 = vld [vmem:[%s337 + $0x568] sm:$0xff]
        %v4849 = vld [vmem:[%s337 + $0x570] sm:$0xff]
        %v4850 = vld [vmem:[%s337 + $0x578] sm:$0xff]
        %v4851 = vld [vmem:[%s337 + $0x580] sm:$0xff]
        %v4852 = vld [vmem:[%s337 + $0x588] sm:$0xff]
        %v4853 = vld [vmem:[%s337 + $0x590] sm:$0xff]
        %v4854 = vld [vmem:[%s337 + $0x598] sm:$0xff]
        %v4855 = vld [vmem:[%s337 + $0x5a0] sm:$0xff]
        %v4856 = vld [vmem:[%s337 + $0x5a8] sm:$0xff]
        %v4857 = vld [vmem:[%s337 + $0x5b0] sm:$0xff]
        %v4858 = vld [vmem:[%s337 + $0x5b8] sm:$0xff]
        %v4859 = vld [vmem:[%s337 + $0x5c0] sm:$0xff]
        %v4860 = vld [vmem:[%s337 + $0x5c8] sm:$0xff]
        %v4861 = vld [vmem:[%s337 + $0x5d0] sm:$0xff]
        %v4862 = vld [vmem:[%s337 + $0x5d8] sm:$0xff]
        %v4863 = vld [vmem:[%s337 + $0x5e0] sm:$0xff]
        %v4864 = vld [vmem:[%s337 + $0x5e8] sm:$0xff]
        %v4865 = vld [vmem:[%s337 + $0x5f0] sm:$0xff]
        %v4866 = vld [vmem:[%s337 + $0x5f8] sm:$0xff]
        %v4867 = vld [vmem:[%s337 + $0x600] sm:$0xff]
        %v4868 = vld [vmem:[%s337 + $0x608] sm:$0xff]
        %v4869 = vld [vmem:[%s337 + $0x610] sm:$0xff]
        %v4870 = vld [vmem:[%s337 + $0x618] sm:$0xff]
        %v4871 = vld [vmem:[%s337 + $0x620] sm:$0xff]
        %v4872 = vld [vmem:[%s337 + $0x628] sm:$0xff]
        %v4873 = vld [vmem:[%s337 + $0x630] sm:$0xff]
        %v4874 = vld [vmem:[%s337 + $0x638] sm:$0xff]
        %v4875 = vld [vmem:[%s337 + $0x640] sm:$0xff]
        %v4876 = vld [vmem:[%s337 + $0x648] sm:$0xff]
        %v4877 = vld [vmem:[%s337 + $0x650] sm:$0xff]
        %v4878 = vld [vmem:[%s337 + $0x658] sm:$0xff]
        %v4879 = vld [vmem:[%s337 + $0x660] sm:$0xff]
        %v4880 = vld [vmem:[%s337 + $0x668] sm:$0xff]
        %v4881 = vld [vmem:[%s337 + $0x670] sm:$0xff]
        %v4882 = vld [vmem:[%s337 + $0x678] sm:$0xff]
        %v4883 = vld [vmem:[%s337 + $0x680] sm:$0xff]
        %v4884 = vld [vmem:[%s337 + $0x688] sm:$0xff]
        %v4885 = vld [vmem:[%s337 + $0x690] sm:$0xff]
        %v4886 = vld [vmem:[%s337 + $0x698] sm:$0xff]
        %v4887 = vld [vmem:[%s337 + $0x6a0] sm:$0xff]
        %v4888 = vld [vmem:[%s337 + $0x6a8] sm:$0xff]
        %v4889 = vld [vmem:[%s337 + $0x6b0] sm:$0xff]
        %v4890 = vld [vmem:[%s337 + $0x6b8] sm:$0xff]
        %v4891 = vld [vmem:[%s337 + $0x6c0] sm:$0xff]
        %v4892 = vld [vmem:[%s337 + $0x6c8] sm:$0xff]
        %v4893 = vld [vmem:[%s337 + $0x6d0] sm:$0xff]
        %v4894 = vld [vmem:[%s337 + $0x6d8] sm:$0xff]
        %v4895 = vld [vmem:[%s337 + $0x6e0] sm:$0xff]
        %v4896 = vld [vmem:[%s337 + $0x6e8] sm:$0xff]
        %v4897 = vld [vmem:[%s337 + $0x6f0] sm:$0xff]
        %v4898 = vld [vmem:[%s337 + $0x6f8] sm:$0xff]
        %v4899 = vld [vmem:[%s337 + $0x700] sm:$0xff]
        %v4900 = vld [vmem:[%s337 + $0x708] sm:$0xff]
        %v4901 = vld [vmem:[%s337 + $0x710] sm:$0xff]
        %v4902 = vld [vmem:[%s337 + $0x718] sm:$0xff]
        %v4903 = vld [vmem:[%s337 + $0x720] sm:$0xff]
        %v4904 = vld [vmem:[%s337 + $0x728] sm:$0xff]
        %v4905 = vld [vmem:[%s337 + $0x730] sm:$0xff]
        %v4906 = vld [vmem:[%s337 + $0x738] sm:$0xff]
        %v4907 = vld [vmem:[%s337 + $0x740] sm:$0xff]
        %v4908 = vld [vmem:[%s337 + $0x748] sm:$0xff]
        %v4909 = vld [vmem:[%s337 + $0x750] sm:$0xff]
        %v4910 = vld [vmem:[%s337 + $0x758] sm:$0xff]
        %v4911 = vld [vmem:[%s337 + $0x760] sm:$0xff]
        %v4912 = vld [vmem:[%s337 + $0x768] sm:$0xff]
        %v4913 = vld [vmem:[%s337 + $0x770] sm:$0xff]
        %v4914 = vld [vmem:[%s337 + $0x778] sm:$0xff]
        %v4915 = vld [vmem:[%s337 + $0x780] sm:$0xff]
        %v4916 = vld [vmem:[%s337 + $0x788] sm:$0xff]
        %v4917 = vld [vmem:[%s337 + $0x790] sm:$0xff]
        %v4918 = vld [vmem:[%s337 + $0x798] sm:$0xff]
        %v4919 = vld [vmem:[%s337 + $0x7a0] sm:$0xff]
        %v4920 = vld [vmem:[%s337 + $0x7a8] sm:$0xff]
        %v4921 = vld [vmem:[%s337 + $0x7b0] sm:$0xff]
        %v4922 = vld [vmem:[%s337 + $0x7b8] sm:$0xff]
        %v4923 = vld [vmem:[%s337 + $0x7c0] sm:$0xff]
        %v4924 = vld [vmem:[%s337 + $0x7c8] sm:$0xff]
        %v4925 = vld [vmem:[%s337 + $0x7d0] sm:$0xff]
        %v4926 = vld [vmem:[%s337 + $0x7d8] sm:$0xff]
        %v4927 = vld [vmem:[%s337 + $0x7e0] sm:$0xff]
        %v4928 = vld [vmem:[%s337 + $0x7e8] sm:$0xff]
        %v4929 = vld [vmem:[%s337 + $0x7f0] sm:$0xff]
        %v4930 = vld [vmem:[%s337 + $0x7f8] sm:$0xff]
        %v4931 = vld [vmem:[%s337 + $0x800] sm:$0xff]
        %v4932 = vld [vmem:[%s337 + $0x808] sm:$0xff]
        %v4933 = vld [vmem:[%s337 + $0x810] sm:$0xff]
        %v4934 = vld [vmem:[%s337 + $0x818] sm:$0xff]
        %v4935 = vld [vmem:[%s337 + $0x820] sm:$0xff]
        %v4936 = vld [vmem:[%s337 + $0x828] sm:$0xff]
        %v4937 = vld [vmem:[%s337 + $0x830] sm:$0xff]
        %v4938 = vld [vmem:[%s337 + $0x838] sm:$0xff]
        %v4939 = vld [vmem:[%s337 + $0x840] sm:$0xff]
        %v4940 = vld [vmem:[%s337 + $0x848] sm:$0xff]
        %v4941 = vld [vmem:[%s337 + $0x850] sm:$0xff]
        %v4942 = vld [vmem:[%s337 + $0x858] sm:$0xff]
        %v4943 = vld [vmem:[%s337 + $0x860] sm:$0xff]
        %v4944 = vld [vmem:[%s337 + $0x868] sm:$0xff]
        %v4945 = vld [vmem:[%s337 + $0x870] sm:$0xff]
        %v4946 = vld [vmem:[%s337 + $0x878] sm:$0xff]
        %v4947 = vld [vmem:[%s337 + $0x880] sm:$0xff]
        %v4948 = vld [vmem:[%s337 + $0x888] sm:$0xff]
        %v4949 = vld [vmem:[%s337 + $0x890] sm:$0xff]
        %v4950 = vld [vmem:[%s337 + $0x898] sm:$0xff]
        %v4951 = vld [vmem:[%s337 + $0x8a0] sm:$0xff]
        %v4952 = vld [vmem:[%s337 + $0x8a8] sm:$0xff]
        %v4953 = vld [vmem:[%s337 + $0x8b0] sm:$0xff]
        %v4954 = vld [vmem:[%s337 + $0x8b8] sm:$0xff]
        %v4955 = vld [vmem:[%s337 + $0x8c0] sm:$0xff]
        %v4956 = vld [vmem:[%s337 + $0x8c8] sm:$0xff]
        %v4957 = vld [vmem:[%s337 + $0x8d0] sm:$0xff]
        %v4958 = vld [vmem:[%s337 + $0x8d8] sm:$0xff]
        %v4959 = vld [vmem:[%s337 + $0x8e0] sm:$0xff]
        %v4960 = vld [vmem:[%s337 + $0x8e8] sm:$0xff]
        %v4961 = vld [vmem:[%s337 + $0x8f0] sm:$0xff]
        %v4962 = vld [vmem:[%s337 + $0x8f8] sm:$0xff]
        %v4964 = vlaneseq
        %v4965 = vshrl.u32 %v4964, 7
        %v4966 = vsub.s32 0, %v4965
        %v4967 = vrot.slane %v413, %v4966
        %v4968 = vlaneseq
        %v4969 = vshrl.u32 %v4968, 7
        %v4970 = vsub.s32 1, %v4969
        %v4971 = vrot.slane %v413, %v4970
        %v4972 = vlaneseq
        %v4973 = vshrl.u32 %v4972, 7
        %v4974 = vsub.s32 2, %v4973
        %v4975 = vrot.slane %v413, %v4974
        %v4976 = vlaneseq
        %v4977 = vshrl.u32 %v4976, 7
        %v4978 = vsub.s32 3, %v4977
        %v4979 = vrot.slane %v413, %v4978
        %v4980 = vlaneseq
        %v4981 = vshrl.u32 %v4980, 7
        %v4982 = vsub.s32 4, %v4981
        %v4983 = vrot.slane %v413, %v4982
        %v4984 = vlaneseq
        %v4985 = vshrl.u32 %v4984, 7
        %v4986 = vsub.s32 5, %v4985
        %v4987 = vrot.slane %v413, %v4986
        %v5282 = vunpack.c.l.b16 %v4675
        %v5283 = vunpack.c.h.b16 %v4675
        %v5284 = vunpack.c.l.b16 %v4676
        %v5285 = vunpack.c.h.b16 %v4676
        %v5286 = vunpack.c.l.b16 %v4677
        %v5287 = vunpack.c.h.b16 %v4677
        %v5288 = vunpack.c.l.b16 %v4678
        %v5289 = vunpack.c.h.b16 %v4678
        %v5290 = vunpack.c.l.b16 %v4679
        %v5291 = vunpack.c.h.b16 %v4679
        %v5292 = vunpack.c.l.b16 %v4680
        %v5293 = vunpack.c.h.b16 %v4680
        %v5294 = vunpack.c.l.b16 %v4681
        %v5295 = vunpack.c.h.b16 %v4681
        %v5296 = vunpack.c.l.b16 %v4682
        %v5297 = vunpack.c.h.b16 %v4682
        %v5298 = vunpack.c.l.b16 %v4683
        %v5299 = vunpack.c.h.b16 %v4683
        %v5300 = vunpack.c.l.b16 %v4684
        %v5301 = vunpack.c.h.b16 %v4684
        %v5302 = vunpack.c.l.b16 %v4685
        %v5303 = vunpack.c.h.b16 %v4685
        %v5304 = vunpack.c.l.b16 %v4686
        %v5305 = vunpack.c.h.b16 %v4686
        %v5306 = vunpack.c.l.b16 %v4687
        %v5307 = vunpack.c.h.b16 %v4687
        %v5308 = vunpack.c.l.b16 %v4688
        %v5309 = vunpack.c.h.b16 %v4688
        %v5310 = vunpack.c.l.b16 %v4689
        %v5311 = vunpack.c.h.b16 %v4689
        %v5312 = vunpack.c.l.b16 %v4690
        %v5313 = vunpack.c.h.b16 %v4690
        %v5314 = vunpack.c.l.b16 %v4691
        %v5315 = vunpack.c.h.b16 %v4691
        %v5316 = vunpack.c.l.b16 %v4692
        %v5317 = vunpack.c.h.b16 %v4692
        %v5318 = vunpack.c.l.b16 %v4693
        %v5319 = vunpack.c.h.b16 %v4693
        %v5320 = vunpack.c.l.b16 %v4694
        %v5321 = vunpack.c.h.b16 %v4694
        %v5322 = vunpack.c.l.b16 %v4695
        %v5323 = vunpack.c.h.b16 %v4695
        %v5324 = vunpack.c.l.b16 %v4696
        %v5325 = vunpack.c.h.b16 %v4696
        %v5326 = vunpack.c.l.b16 %v4697
        %v5327 = vunpack.c.h.b16 %v4697
        %v5328 = vunpack.c.l.b16 %v4698
        %v5329 = vunpack.c.h.b16 %v4698
        %v5330 = vunpack.c.l.b16 %v4699
        %v5331 = vunpack.c.h.b16 %v4699
        %v5332 = vunpack.c.l.b16 %v4700
        %v5333 = vunpack.c.h.b16 %v4700
        %v5334 = vunpack.c.l.b16 %v4701
        %v5335 = vunpack.c.h.b16 %v4701
        %v5336 = vunpack.c.l.b16 %v4702
        %v5337 = vunpack.c.h.b16 %v4702
        %v5338 = vunpack.c.l.b16 %v4703
        %v5339 = vunpack.c.h.b16 %v4703
        %v5340 = vunpack.c.l.b16 %v4704
        %v5341 = vunpack.c.h.b16 %v4704
        %v5342 = vunpack.c.l.b16 %v4705
        %v5343 = vunpack.c.h.b16 %v4705
        %v5344 = vunpack.c.l.b16 %v4706
        %v5345 = vunpack.c.h.b16 %v4706
        %v5346 = vunpack.c.l.b16 %v4707
        %v5347 = vunpack.c.h.b16 %v4707
        %v5348 = vunpack.c.l.b16 %v4708
        %v5349 = vunpack.c.h.b16 %v4708
        %v5350 = vunpack.c.l.b16 %v4709
        %v5351 = vunpack.c.h.b16 %v4709
        %v5352 = vunpack.c.l.b16 %v4710
        %v5353 = vunpack.c.h.b16 %v4710
        %v5354 = vunpack.c.l.b16 %v4711
        %v5355 = vunpack.c.h.b16 %v4711
        %v5356 = vunpack.c.l.b16 %v4712
        %v5357 = vunpack.c.h.b16 %v4712
        %v5358 = vunpack.c.l.b16 %v4713
        %v5359 = vunpack.c.h.b16 %v4713
        %v5360 = vunpack.c.l.b16 %v4714
        %v5361 = vunpack.c.h.b16 %v4714
        %v5362 = vunpack.c.l.b16 %v4715
        %v5363 = vunpack.c.h.b16 %v4715
        %v5364 = vunpack.c.l.b16 %v4716
        %v5365 = vunpack.c.h.b16 %v4716
        %v5366 = vunpack.c.l.b16 %v4717
        %v5367 = vunpack.c.h.b16 %v4717
        %v5368 = vunpack.c.l.b16 %v4718
        %v5369 = vunpack.c.h.b16 %v4718
        %v5370 = vunpack.c.l.b16 %v4719
        %v5371 = vunpack.c.h.b16 %v4719
        %v5372 = vunpack.c.l.b16 %v4720
        %v5373 = vunpack.c.h.b16 %v4720
        %v5374 = vunpack.c.l.b16 %v4721
        %v5375 = vunpack.c.h.b16 %v4721
        %v5376 = vunpack.c.l.b16 %v4722
        %v5377 = vunpack.c.h.b16 %v4722
        %v5378 = vunpack.c.l.b16 %v4723
        %v5379 = vunpack.c.h.b16 %v4723
        %v5380 = vunpack.c.l.b16 %v4724
        %v5381 = vunpack.c.h.b16 %v4724
        %v5382 = vunpack.c.l.b16 %v4725
        %v5383 = vunpack.c.h.b16 %v4725
        %v5384 = vunpack.c.l.b16 %v4726
        %v5385 = vunpack.c.h.b16 %v4726
        %v5386 = vunpack.c.l.b16 %v4727
        %v5387 = vunpack.c.h.b16 %v4727
        %v5388 = vunpack.c.l.b16 %v4728
        %v5389 = vunpack.c.h.b16 %v4728
        %v5390 = vunpack.c.l.b16 %v4729
        %v5391 = vunpack.c.h.b16 %v4729
        %v5392 = vunpack.c.l.b16 %v4730
        %v5393 = vunpack.c.h.b16 %v4730
        %v5394 = vunpack.c.l.b16 %v4731
        %v5395 = vunpack.c.h.b16 %v4731
        %v5396 = vunpack.c.l.b16 %v4732
        %v5397 = vunpack.c.h.b16 %v4732
        %v5398 = vunpack.c.l.b16 %v4733
        %v5399 = vunpack.c.h.b16 %v4733
        %v5400 = vunpack.c.l.b16 %v4734
        %v5401 = vunpack.c.h.b16 %v4734
        %v5402 = vunpack.c.l.b16 %v4735
        %v5403 = vunpack.c.h.b16 %v4735
        %v5404 = vunpack.c.l.b16 %v4736
        %v5405 = vunpack.c.h.b16 %v4736
        %v5406 = vunpack.c.l.b16 %v4737
        %v5407 = vunpack.c.h.b16 %v4737
        %v5408 = vunpack.c.l.b16 %v4738
        %v5409 = vunpack.c.h.b16 %v4738
        %v5410 = vunpack.c.l.b16 %v4739
        %v5411 = vunpack.c.h.b16 %v4739
        %v5412 = vunpack.c.l.b16 %v4740
        %v5413 = vunpack.c.h.b16 %v4740
        %v5414 = vunpack.c.l.b16 %v4741
        %v5415 = vunpack.c.h.b16 %v4741
        %v5416 = vunpack.c.l.b16 %v4742
        %v5417 = vunpack.c.h.b16 %v4742
        %v5418 = vunpack.c.l.b16 %v4743
        %v5419 = vunpack.c.h.b16 %v4743
        %v5420 = vunpack.c.l.b16 %v4744
        %v5421 = vunpack.c.h.b16 %v4744
        %v5422 = vunpack.c.l.b16 %v4745
        %v5423 = vunpack.c.h.b16 %v4745
        %v5424 = vunpack.c.l.b16 %v4746
        %v5425 = vunpack.c.h.b16 %v4746
        %v5426 = vunpack.c.l.b16 %v4747
        %v5427 = vunpack.c.h.b16 %v4747
        %v5428 = vunpack.c.l.b16 %v4748
        %v5429 = vunpack.c.h.b16 %v4748
        %v5430 = vunpack.c.l.b16 %v4749
        %v5431 = vunpack.c.h.b16 %v4749
        %v5432 = vunpack.c.l.b16 %v4750
        %v5433 = vunpack.c.h.b16 %v4750
        %v5434 = vunpack.c.l.b16 %v4751
        %v5435 = vunpack.c.h.b16 %v4751
        %v5436 = vunpack.c.l.b16 %v4752
        %v5437 = vunpack.c.h.b16 %v4752
        %v5438 = vunpack.c.l.b16 %v4753
        %v5439 = vunpack.c.h.b16 %v4753
        %v5440 = vunpack.c.l.b16 %v4754
        %v5441 = vunpack.c.h.b16 %v4754
        %v5442 = vunpack.c.l.b16 %v4755
        %v5443 = vunpack.c.h.b16 %v4755
        %v5444 = vunpack.c.l.b16 %v4756
        %v5445 = vunpack.c.h.b16 %v4756
        %v5446 = vunpack.c.l.b16 %v4757
        %v5447 = vunpack.c.h.b16 %v4757
        %v5448 = vunpack.c.l.b16 %v4758
        %v5449 = vunpack.c.h.b16 %v4758
        %v5450 = vunpack.c.l.b16 %v4759
        %v5451 = vunpack.c.h.b16 %v4759
        %v5452 = vunpack.c.l.b16 %v4760
        %v5453 = vunpack.c.h.b16 %v4760
        %v5454 = vunpack.c.l.b16 %v4761
        %v5455 = vunpack.c.h.b16 %v4761
        %v5456 = vunpack.c.l.b16 %v4762
        %v5457 = vunpack.c.h.b16 %v4762
        %v5458 = vunpack.c.l.b16 %v4763
        %v5459 = vunpack.c.h.b16 %v4763
        %v5460 = vunpack.c.l.b16 %v4764
        %v5461 = vunpack.c.h.b16 %v4764
        %v5462 = vunpack.c.l.b16 %v4765
        %v5463 = vunpack.c.h.b16 %v4765
        %v5464 = vunpack.c.l.b16 %v4766
        %v5465 = vunpack.c.h.b16 %v4766
        %v5466 = vunpack.c.l.b16 %v4767
        %v5467 = vunpack.c.h.b16 %v4767
        %v5468 = vunpack.c.l.b16 %v4768
        %v5469 = vunpack.c.h.b16 %v4768
        %v5470 = vunpack.c.l.b16 %v4769
        %v5471 = vunpack.c.h.b16 %v4769
        %v5472 = vunpack.c.l.b16 %v4770
        %v5473 = vunpack.c.h.b16 %v4770
        %v5474 = vunpack.c.l.b16 %v4771
        %v5475 = vunpack.c.h.b16 %v4771
        %v5476 = vunpack.c.l.b16 %v4772
        %v5477 = vunpack.c.h.b16 %v4772
        %v5478 = vunpack.c.l.b16 %v4773
        %v5479 = vunpack.c.h.b16 %v4773
        %v5480 = vunpack.c.l.b16 %v4774
        %v5481 = vunpack.c.h.b16 %v4774
        %v5482 = vunpack.c.l.b16 %v4775
        %v5483 = vunpack.c.h.b16 %v4775
        %v5484 = vunpack.c.l.b16 %v4776
        %v5485 = vunpack.c.h.b16 %v4776
        %v5486 = vunpack.c.l.b16 %v4777
        %v5487 = vunpack.c.h.b16 %v4777
        %v5488 = vunpack.c.l.b16 %v4778
        %v5489 = vunpack.c.h.b16 %v4778
        %v5490 = vunpack.c.l.b16 %v4779
        %v5491 = vunpack.c.h.b16 %v4779
        %v5492 = vunpack.c.l.b16 %v4780
        %v5493 = vunpack.c.h.b16 %v4780
        %v5494 = vunpack.c.l.b16 %v4781
        %v5495 = vunpack.c.h.b16 %v4781
        %v5496 = vunpack.c.l.b16 %v4782
        %v5497 = vunpack.c.h.b16 %v4782
        %v5498 = vunpack.c.l.b16 %v4783
        %v5499 = vunpack.c.h.b16 %v4783
        %v5500 = vunpack.c.l.b16 %v4784
        %v5501 = vunpack.c.h.b16 %v4784
        %v5502 = vunpack.c.l.b16 %v4785
        %v5503 = vunpack.c.h.b16 %v4785
        %v5504 = vunpack.c.l.b16 %v4786
        %v5505 = vunpack.c.h.b16 %v4786
        %v5506 = vunpack.c.l.b16 %v4787
        %v5507 = vunpack.c.h.b16 %v4787
        %v5508 = vunpack.c.l.b16 %v4788
        %v5509 = vunpack.c.h.b16 %v4788
        %v5510 = vunpack.c.l.b16 %v4789
        %v5511 = vunpack.c.h.b16 %v4789
        %v5512 = vunpack.c.l.b16 %v4790
        %v5513 = vunpack.c.h.b16 %v4790
        %v5514 = vunpack.c.l.b16 %v4791
        %v5515 = vunpack.c.h.b16 %v4791
        %v5516 = vunpack.c.l.b16 %v4792
        %v5517 = vunpack.c.h.b16 %v4792
        %v5518 = vunpack.c.l.b16 %v4793
        %v5519 = vunpack.c.h.b16 %v4793
        %v5520 = vunpack.c.l.b16 %v4794
        %v5521 = vunpack.c.h.b16 %v4794
        %v5522 = vunpack.c.l.b16 %v4795
        %v5523 = vunpack.c.h.b16 %v4795
        %v5524 = vunpack.c.l.b16 %v4796
        %v5525 = vunpack.c.h.b16 %v4796
        %v5526 = vunpack.c.l.b16 %v4797
        %v5527 = vunpack.c.h.b16 %v4797
        %v5528 = vunpack.c.l.b16 %v4798
        %v5529 = vunpack.c.h.b16 %v4798
        %v5530 = vunpack.c.l.b16 %v4799
        %v5531 = vunpack.c.h.b16 %v4799
        %v5532 = vunpack.c.l.b16 %v4800
        %v5533 = vunpack.c.h.b16 %v4800
        %v5534 = vunpack.c.l.b16 %v4801
        %v5535 = vunpack.c.h.b16 %v4801
        %v5536 = vunpack.c.l.b16 %v4802
        %v5537 = vunpack.c.h.b16 %v4802
        %v5538 = vunpack.c.l.b16 %v4803
        %v5539 = vunpack.c.h.b16 %v4803
        %v5540 = vunpack.c.l.b16 %v4804
        %v5541 = vunpack.c.h.b16 %v4804
        %v5542 = vunpack.c.l.b16 %v4805
        %v5543 = vunpack.c.h.b16 %v4805
        %v5544 = vunpack.c.l.b16 %v4806
        %v5545 = vunpack.c.h.b16 %v4806
        %v5546 = vunpack.c.l.b16 %v4807
        %v5547 = vunpack.c.h.b16 %v4807
        %v5548 = vunpack.c.l.b16 %v4808
        %v5549 = vunpack.c.h.b16 %v4808
        %v5550 = vunpack.c.l.b16 %v4809
        %v5551 = vunpack.c.h.b16 %v4809
        %v5552 = vunpack.c.l.b16 %v4810
        %v5553 = vunpack.c.h.b16 %v4810
        %v5554 = vunpack.c.l.b16 %v4811
        %v5555 = vunpack.c.h.b16 %v4811
        %v5556 = vunpack.c.l.b16 %v4812
        %v5557 = vunpack.c.h.b16 %v4812
        %v5558 = vunpack.c.l.b16 %v4813
        %v5559 = vunpack.c.h.b16 %v4813
        %v5560 = vunpack.c.l.b16 %v4814
        %v5561 = vunpack.c.h.b16 %v4814
        %v5562 = vunpack.c.l.b16 %v4815
        %v5563 = vunpack.c.h.b16 %v4815
        %v5564 = vunpack.c.l.b16 %v4816
        %v5565 = vunpack.c.h.b16 %v4816
        %v5566 = vunpack.c.l.b16 %v4817
        %v5567 = vunpack.c.h.b16 %v4817
        %v5568 = vunpack.c.l.b16 %v4818
        %v5569 = vunpack.c.h.b16 %v4818
        %v5570 = vunpack.c.l.b16 %v4819
        %v5571 = vunpack.c.h.b16 %v4819
        %v5572 = vunpack.c.l.b16 %v4820
        %v5573 = vunpack.c.h.b16 %v4820
        %v5574 = vunpack.c.l.b16 %v4821
        %v5575 = vunpack.c.h.b16 %v4821
        %v5576 = vunpack.c.l.b16 %v4822
        %v5577 = vunpack.c.h.b16 %v4822
        %v5578 = vunpack.c.l.b16 %v4823
        %v5579 = vunpack.c.h.b16 %v4823
        %v5580 = vunpack.c.l.b16 %v4824
        %v5581 = vunpack.c.h.b16 %v4824
        %v5582 = vunpack.c.l.b16 %v4825
        %v5583 = vunpack.c.h.b16 %v4825
        %v5584 = vunpack.c.l.b16 %v4826
        %v5585 = vunpack.c.h.b16 %v4826
        %v5586 = vunpack.c.l.b16 %v4827
        %v5587 = vunpack.c.h.b16 %v4827
        %v5588 = vunpack.c.l.b16 %v4828
        %v5589 = vunpack.c.h.b16 %v4828
        %v5590 = vunpack.c.l.b16 %v4829
        %v5591 = vunpack.c.h.b16 %v4829
        %v5592 = vunpack.c.l.b16 %v4830
        %v5593 = vunpack.c.h.b16 %v4830
        %v5594 = vunpack.c.l.b16 %v4831
        %v5595 = vunpack.c.h.b16 %v4831
        %v5596 = vunpack.c.l.b16 %v4832
        %v5597 = vunpack.c.h.b16 %v4832
        %v5598 = vunpack.c.l.b16 %v4833
        %v5599 = vunpack.c.h.b16 %v4833
        %v5600 = vunpack.c.l.b16 %v4834
        %v5601 = vunpack.c.h.b16 %v4834
        %v5602 = vunpack.c.l.b16 %v4835
        %v5603 = vunpack.c.h.b16 %v4835
        %v5604 = vunpack.c.l.b16 %v4836
        %v5605 = vunpack.c.h.b16 %v4836
        %v5606 = vunpack.c.l.b16 %v4837
        %v5607 = vunpack.c.h.b16 %v4837
        %v5608 = vunpack.c.l.b16 %v4838
        %v5609 = vunpack.c.h.b16 %v4838
        %v5610 = vunpack.c.l.b16 %v4839
        %v5611 = vunpack.c.h.b16 %v4839
        %v5612 = vunpack.c.l.b16 %v4840
        %v5613 = vunpack.c.h.b16 %v4840
        %v5614 = vunpack.c.l.b16 %v4841
        %v5615 = vunpack.c.h.b16 %v4841
        %v5616 = vunpack.c.l.b16 %v4842
        %v5617 = vunpack.c.h.b16 %v4842
        %v5618 = vunpack.c.l.b16 %v4843
        %v5619 = vunpack.c.h.b16 %v4843
        %v5620 = vunpack.c.l.b16 %v4844
        %v5621 = vunpack.c.h.b16 %v4844
        %v5622 = vunpack.c.l.b16 %v4845
        %v5623 = vunpack.c.h.b16 %v4845
        %v5624 = vunpack.c.l.b16 %v4846
        %v5625 = vunpack.c.h.b16 %v4846
        %v5626 = vunpack.c.l.b16 %v4847
        %v5627 = vunpack.c.h.b16 %v4847
        %v5628 = vunpack.c.l.b16 %v4848
        %v5629 = vunpack.c.h.b16 %v4848
        %v5630 = vunpack.c.l.b16 %v4849
        %v5631 = vunpack.c.h.b16 %v4849
        %v5632 = vunpack.c.l.b16 %v4850
        %v5633 = vunpack.c.h.b16 %v4850
        %v5634 = vunpack.c.l.b16 %v4851
        %v5635 = vunpack.c.h.b16 %v4851
        %v5636 = vunpack.c.l.b16 %v4852
        %v5637 = vunpack.c.h.b16 %v4852
        %v5638 = vunpack.c.l.b16 %v4853
        %v5639 = vunpack.c.h.b16 %v4853
        %v5640 = vunpack.c.l.b16 %v4854
        %v5641 = vunpack.c.h.b16 %v4854
        %v5642 = vunpack.c.l.b16 %v4855
        %v5643 = vunpack.c.h.b16 %v4855
        %v5644 = vunpack.c.l.b16 %v4856
        %v5645 = vunpack.c.h.b16 %v4856
        %v5646 = vunpack.c.l.b16 %v4857
        %v5647 = vunpack.c.h.b16 %v4857
        %v5648 = vunpack.c.l.b16 %v4858
        %v5649 = vunpack.c.h.b16 %v4858
        %v5650 = vunpack.c.l.b16 %v4859
        %v5651 = vunpack.c.h.b16 %v4859
        %v5652 = vunpack.c.l.b16 %v4860
        %v5653 = vunpack.c.h.b16 %v4860
        %v5654 = vunpack.c.l.b16 %v4861
        %v5655 = vunpack.c.h.b16 %v4861
        %v5656 = vunpack.c.l.b16 %v4862
        %v5657 = vunpack.c.h.b16 %v4862
        %v5658 = vunpack.c.l.b16 %v4863
        %v5659 = vunpack.c.h.b16 %v4863
        %v5660 = vunpack.c.l.b16 %v4864
        %v5661 = vunpack.c.h.b16 %v4864
        %v5662 = vunpack.c.l.b16 %v4865
        %v5663 = vunpack.c.h.b16 %v4865
        %v5664 = vunpack.c.l.b16 %v4866
        %v5665 = vunpack.c.h.b16 %v4866
        %v5666 = vunpack.c.l.b16 %v4867
        %v5667 = vunpack.c.h.b16 %v4867
        %v5668 = vunpack.c.l.b16 %v4868
        %v5669 = vunpack.c.h.b16 %v4868
        %v5670 = vunpack.c.l.b16 %v4869
        %v5671 = vunpack.c.h.b16 %v4869
        %v5672 = vunpack.c.l.b16 %v4870
        %v5673 = vunpack.c.h.b16 %v4870
        %v5674 = vunpack.c.l.b16 %v4871
        %v5675 = vunpack.c.h.b16 %v4871
        %v5676 = vunpack.c.l.b16 %v4872
        %v5677 = vunpack.c.h.b16 %v4872
        %v5678 = vunpack.c.l.b16 %v4873
        %v5679 = vunpack.c.h.b16 %v4873
        %v5680 = vunpack.c.l.b16 %v4874
        %v5681 = vunpack.c.h.b16 %v4874
        %v5682 = vunpack.c.l.b16 %v4875
        %v5683 = vunpack.c.h.b16 %v4875
        %v5684 = vunpack.c.l.b16 %v4876
        %v5685 = vunpack.c.h.b16 %v4876
        %v5686 = vunpack.c.l.b16 %v4877
        %v5687 = vunpack.c.h.b16 %v4877
        %v5688 = vunpack.c.l.b16 %v4878
        %v5689 = vunpack.c.h.b16 %v4878
        %v5690 = vunpack.c.l.b16 %v4879
        %v5691 = vunpack.c.h.b16 %v4879
        %v5692 = vunpack.c.l.b16 %v4880
        %v5693 = vunpack.c.h.b16 %v4880
        %v5694 = vunpack.c.l.b16 %v4881
        %v5695 = vunpack.c.h.b16 %v4881
        %v5696 = vunpack.c.l.b16 %v4882
        %v5697 = vunpack.c.h.b16 %v4882
        %v5698 = vunpack.c.l.b16 %v4883
        %v5699 = vunpack.c.h.b16 %v4883
        %v5700 = vunpack.c.l.b16 %v4884
        %v5701 = vunpack.c.h.b16 %v4884
        %v5702 = vunpack.c.l.b16 %v4885
        %v5703 = vunpack.c.h.b16 %v4885
        %v5704 = vunpack.c.l.b16 %v4886
        %v5705 = vunpack.c.h.b16 %v4886
        %v5706 = vunpack.c.l.b16 %v4887
        %v5707 = vunpack.c.h.b16 %v4887
        %v5708 = vunpack.c.l.b16 %v4888
        %v5709 = vunpack.c.h.b16 %v4888
        %v5710 = vunpack.c.l.b16 %v4889
        %v5711 = vunpack.c.h.b16 %v4889
        %v5712 = vunpack.c.l.b16 %v4890
        %v5713 = vunpack.c.h.b16 %v4890
        %v5714 = vunpack.c.l.b16 %v4891
        %v5715 = vunpack.c.h.b16 %v4891
        %v5716 = vunpack.c.l.b16 %v4892
        %v5717 = vunpack.c.h.b16 %v4892
        %v5718 = vunpack.c.l.b16 %v4893
        %v5719 = vunpack.c.h.b16 %v4893
        %v5720 = vunpack.c.l.b16 %v4894
        %v5721 = vunpack.c.h.b16 %v4894
        %v5722 = vunpack.c.l.b16 %v4895
        %v5723 = vunpack.c.h.b16 %v4895
        %v5724 = vunpack.c.l.b16 %v4896
        %v5725 = vunpack.c.h.b16 %v4896
        %v5726 = vunpack.c.l.b16 %v4897
        %v5727 = vunpack.c.h.b16 %v4897
        %v5728 = vunpack.c.l.b16 %v4898
        %v5729 = vunpack.c.h.b16 %v4898
        %v5730 = vunpack.c.l.b16 %v4899
        %v5731 = vunpack.c.h.b16 %v4899
        %v5732 = vunpack.c.l.b16 %v4900
        %v5733 = vunpack.c.h.b16 %v4900
        %v5734 = vunpack.c.l.b16 %v4901
        %v5735 = vunpack.c.h.b16 %v4901
        %v5736 = vunpack.c.l.b16 %v4902
        %v5737 = vunpack.c.h.b16 %v4902
        %v5738 = vunpack.c.l.b16 %v4903
        %v5739 = vunpack.c.h.b16 %v4903
        %v5740 = vunpack.c.l.b16 %v4904
        %v5741 = vunpack.c.h.b16 %v4904
        %v5742 = vunpack.c.l.b16 %v4905
        %v5743 = vunpack.c.h.b16 %v4905
        %v5744 = vunpack.c.l.b16 %v4906
        %v5745 = vunpack.c.h.b16 %v4906
        %v5746 = vunpack.c.l.b16 %v4907
        %v5747 = vunpack.c.h.b16 %v4907
        %v5748 = vunpack.c.l.b16 %v4908
        %v5749 = vunpack.c.h.b16 %v4908
        %v5750 = vunpack.c.l.b16 %v4909
        %v5751 = vunpack.c.h.b16 %v4909
        %v5752 = vunpack.c.l.b16 %v4910
        %v5753 = vunpack.c.h.b16 %v4910
        %v5754 = vunpack.c.l.b16 %v4911
        %v5755 = vunpack.c.h.b16 %v4911
        %v5756 = vunpack.c.l.b16 %v4912
        %v5757 = vunpack.c.h.b16 %v4912
        %v5758 = vunpack.c.l.b16 %v4913
        %v5759 = vunpack.c.h.b16 %v4913
        %v5760 = vunpack.c.l.b16 %v4914
        %v5761 = vunpack.c.h.b16 %v4914
        %v5762 = vunpack.c.l.b16 %v4915
        %v5763 = vunpack.c.h.b16 %v4915
        %v5764 = vunpack.c.l.b16 %v4916
        %v5765 = vunpack.c.h.b16 %v4916
        %v5766 = vunpack.c.l.b16 %v4917
        %v5767 = vunpack.c.h.b16 %v4917
        %v5768 = vunpack.c.l.b16 %v4918
        %v5769 = vunpack.c.h.b16 %v4918
        %v5770 = vunpack.c.l.b16 %v4919
        %v5771 = vunpack.c.h.b16 %v4919
        %v5772 = vunpack.c.l.b16 %v4920
        %v5773 = vunpack.c.h.b16 %v4920
        %v5774 = vunpack.c.l.b16 %v4921
        %v5775 = vunpack.c.h.b16 %v4921
        %v5776 = vunpack.c.l.b16 %v4922
        %v5777 = vunpack.c.h.b16 %v4922
        %v5778 = vunpack.c.l.b16 %v4923
        %v5779 = vunpack.c.h.b16 %v4923
        %v5780 = vunpack.c.l.b16 %v4924
        %v5781 = vunpack.c.h.b16 %v4924
        %v5782 = vunpack.c.l.b16 %v4925
        %v5783 = vunpack.c.h.b16 %v4925
        %v5784 = vunpack.c.l.b16 %v4926
        %v5785 = vunpack.c.h.b16 %v4926
        %v5786 = vunpack.c.l.b16 %v4927
        %v5787 = vunpack.c.h.b16 %v4927
        %v5788 = vunpack.c.l.b16 %v4928
        %v5789 = vunpack.c.h.b16 %v4928
        %v5790 = vunpack.c.l.b16 %v4929
        %v5791 = vunpack.c.h.b16 %v4929
        %v5792 = vunpack.c.l.b16 %v4930
        %v5793 = vunpack.c.h.b16 %v4930
        %v5794 = vunpack.c.l.b16 %v4931
        %v5795 = vunpack.c.h.b16 %v4931
        %v5796 = vunpack.c.l.b16 %v4932
        %v5797 = vunpack.c.h.b16 %v4932
        %v5798 = vunpack.c.l.b16 %v4933
        %v5799 = vunpack.c.h.b16 %v4933
        %v5800 = vunpack.c.l.b16 %v4934
        %v5801 = vunpack.c.h.b16 %v4934
        %v5802 = vunpack.c.l.b16 %v4935
        %v5803 = vunpack.c.h.b16 %v4935
        %v5804 = vunpack.c.l.b16 %v4936
        %v5805 = vunpack.c.h.b16 %v4936
        %v5806 = vunpack.c.l.b16 %v4937
        %v5807 = vunpack.c.h.b16 %v4937
        %v5808 = vunpack.c.l.b16 %v4938
        %v5809 = vunpack.c.h.b16 %v4938
        %v5810 = vunpack.c.l.b16 %v4939
        %v5811 = vunpack.c.h.b16 %v4939
        %v5812 = vunpack.c.l.b16 %v4940
        %v5813 = vunpack.c.h.b16 %v4940
        %v5814 = vunpack.c.l.b16 %v4941
        %v5815 = vunpack.c.h.b16 %v4941
        %v5816 = vunpack.c.l.b16 %v4942
        %v5817 = vunpack.c.h.b16 %v4942
        %v5818 = vunpack.c.l.b16 %v4943
        %v5819 = vunpack.c.h.b16 %v4943
        %v5820 = vunpack.c.l.b16 %v4944
        %v5821 = vunpack.c.h.b16 %v4944
        %v5822 = vunpack.c.l.b16 %v4945
        %v5823 = vunpack.c.h.b16 %v4945
        %v5824 = vunpack.c.l.b16 %v4946
        %v5825 = vunpack.c.h.b16 %v4946
        %v5826 = vunpack.c.l.b16 %v4947
        %v5827 = vunpack.c.h.b16 %v4947
        %v5828 = vunpack.c.l.b16 %v4948
        %v5829 = vunpack.c.h.b16 %v4948
        %v5830 = vunpack.c.l.b16 %v4949
        %v5831 = vunpack.c.h.b16 %v4949
        %v5832 = vunpack.c.l.b16 %v4950
        %v5833 = vunpack.c.h.b16 %v4950
        %v5834 = vunpack.c.l.b16 %v4951
        %v5835 = vunpack.c.h.b16 %v4951
        %v5836 = vunpack.c.l.b16 %v4952
        %v5837 = vunpack.c.h.b16 %v4952
        %v5838 = vunpack.c.l.b16 %v4953
        %v5839 = vunpack.c.h.b16 %v4953
        %v5840 = vunpack.c.l.b16 %v4954
        %v5841 = vunpack.c.h.b16 %v4954
        %v5842 = vunpack.c.l.b16 %v4955
        %v5843 = vunpack.c.h.b16 %v4955
        %v5844 = vunpack.c.l.b16 %v4956
        %v5845 = vunpack.c.h.b16 %v4956
        %v5846 = vunpack.c.l.b16 %v4957
        %v5847 = vunpack.c.h.b16 %v4957
        %v5848 = vunpack.c.l.b16 %v4958
        %v5849 = vunpack.c.h.b16 %v4958
        %v5850 = vunpack.c.l.b16 %v4959
        %v5851 = vunpack.c.h.b16 %v4959
        %v5852 = vunpack.c.l.b16 %v4960
        %v5853 = vunpack.c.h.b16 %v4960
        %v5854 = vunpack.c.l.b16 %v4961
        %v5855 = vunpack.c.h.b16 %v4961
        %v5856 = vunpack.c.l.b16 %v4962
        %v5857 = vunpack.c.h.b16 %v4962
        %v5858 = vpack.c.b16 %v5288, %v5282
        %v5859 = vpack.c.b16 %v5289, %v5283
        %v5860 = vpack.c.b16 %v5290, %v5284
        %v5861 = vpack.c.b16 %v5291, %v5285
        %v5862 = vpack.c.b16 %v5292, %v5286
        %v5863 = vpack.c.b16 %v5293, %v5287
        %v5864 = vpack.c.b16 %v5300, %v5294
        %v5865 = vpack.c.b16 %v5301, %v5295
        %v5866 = vpack.c.b16 %v5302, %v5296
        %v5867 = vpack.c.b16 %v5303, %v5297
        %v5868 = vpack.c.b16 %v5304, %v5298
        %v5869 = vpack.c.b16 %v5305, %v5299
        %v5870 = vpack.c.b16 %v5312, %v5306
        %v5871 = vpack.c.b16 %v5313, %v5307
        %v5872 = vpack.c.b16 %v5314, %v5308
        %v5873 = vpack.c.b16 %v5315, %v5309
        %v5874 = vpack.c.b16 %v5316, %v5310
        %v5875 = vpack.c.b16 %v5317, %v5311
        %v5876 = vpack.c.b16 %v5324, %v5318
        %v5877 = vpack.c.b16 %v5325, %v5319
        %v5878 = vpack.c.b16 %v5326, %v5320
        %v5879 = vpack.c.b16 %v5327, %v5321
        %v5880 = vpack.c.b16 %v5328, %v5322
        %v5881 = vpack.c.b16 %v5329, %v5323
        %v5882 = vpack.c.b16 %v5336, %v5330
        %v5883 = vpack.c.b16 %v5337, %v5331
        %v5884 = vpack.c.b16 %v5338, %v5332
        %v5885 = vpack.c.b16 %v5339, %v5333
        %v5886 = vpack.c.b16 %v5340, %v5334
        %v5887 = vpack.c.b16 %v5341, %v5335
        %v5888 = vpack.c.b16 %v5348, %v5342
        %v5889 = vpack.c.b16 %v5349, %v5343
        %v5890 = vpack.c.b16 %v5350, %v5344
        %v5891 = vpack.c.b16 %v5351, %v5345
        %v5892 = vpack.c.b16 %v5352, %v5346
        %v5893 = vpack.c.b16 %v5353, %v5347
        %v5894 = vpack.c.b16 %v5360, %v5354
        %v5895 = vpack.c.b16 %v5361, %v5355
        %v5896 = vpack.c.b16 %v5362, %v5356
        %v5897 = vpack.c.b16 %v5363, %v5357
        %v5898 = vpack.c.b16 %v5364, %v5358
        %v5899 = vpack.c.b16 %v5365, %v5359
        %v5900 = vpack.c.b16 %v5372, %v5366
        %v5901 = vpack.c.b16 %v5373, %v5367
        %v5902 = vpack.c.b16 %v5374, %v5368
        %v5903 = vpack.c.b16 %v5375, %v5369
        %v5904 = vpack.c.b16 %v5376, %v5370
        %v5905 = vpack.c.b16 %v5377, %v5371
        %v5906 = vpack.c.b16 %v5384, %v5378
        %v5907 = vpack.c.b16 %v5385, %v5379
        %v5908 = vpack.c.b16 %v5386, %v5380
        %v5909 = vpack.c.b16 %v5387, %v5381
        %v5910 = vpack.c.b16 %v5388, %v5382
        %v5911 = vpack.c.b16 %v5389, %v5383
        %v5912 = vpack.c.b16 %v5396, %v5390
        %v5913 = vpack.c.b16 %v5397, %v5391
        %v5914 = vpack.c.b16 %v5398, %v5392
        %v5915 = vpack.c.b16 %v5399, %v5393
        %v5916 = vpack.c.b16 %v5400, %v5394
        %v5917 = vpack.c.b16 %v5401, %v5395
        %v5918 = vpack.c.b16 %v5408, %v5402
        %v5919 = vpack.c.b16 %v5409, %v5403
        %v5920 = vpack.c.b16 %v5410, %v5404
        %v5921 = vpack.c.b16 %v5411, %v5405
        %v5922 = vpack.c.b16 %v5412, %v5406
        %v5923 = vpack.c.b16 %v5413, %v5407
        %v5924 = vpack.c.b16 %v5420, %v5414
        %v5925 = vpack.c.b16 %v5421, %v5415
        %v5926 = vpack.c.b16 %v5422, %v5416
        %v5927 = vpack.c.b16 %v5423, %v5417
        %v5928 = vpack.c.b16 %v5424, %v5418
        %v5929 = vpack.c.b16 %v5425, %v5419
        %v5930 = vpack.c.b16 %v5432, %v5426
        %v5931 = vpack.c.b16 %v5433, %v5427
        %v5932 = vpack.c.b16 %v5434, %v5428
        %v5933 = vpack.c.b16 %v5435, %v5429
        %v5934 = vpack.c.b16 %v5436, %v5430
        %v5935 = vpack.c.b16 %v5437, %v5431
        %v5936 = vpack.c.b16 %v5444, %v5438
        %v5937 = vpack.c.b16 %v5445, %v5439
        %v5938 = vpack.c.b16 %v5446, %v5440
        %v5939 = vpack.c.b16 %v5447, %v5441
        %v5940 = vpack.c.b16 %v5448, %v5442
        %v5941 = vpack.c.b16 %v5449, %v5443
        %v5942 = vpack.c.b16 %v5456, %v5450
        %v5943 = vpack.c.b16 %v5457, %v5451
        %v5944 = vpack.c.b16 %v5458, %v5452
        %v5945 = vpack.c.b16 %v5459, %v5453
        %v5946 = vpack.c.b16 %v5460, %v5454
        %v5947 = vpack.c.b16 %v5461, %v5455
        %v5948 = vpack.c.b16 %v5468, %v5462
        %v5949 = vpack.c.b16 %v5469, %v5463
        %v5950 = vpack.c.b16 %v5470, %v5464
        %v5951 = vpack.c.b16 %v5471, %v5465
        %v5952 = vpack.c.b16 %v5472, %v5466
        %v5953 = vpack.c.b16 %v5473, %v5467
        %v5954 = vpack.c.b16 %v5480, %v5474
        %v5955 = vpack.c.b16 %v5481, %v5475
        %v5956 = vpack.c.b16 %v5482, %v5476
        %v5957 = vpack.c.b16 %v5483, %v5477
        %v5958 = vpack.c.b16 %v5484, %v5478
        %v5959 = vpack.c.b16 %v5485, %v5479
        %v5960 = vpack.c.b16 %v5492, %v5486
        %v5961 = vpack.c.b16 %v5493, %v5487
        %v5962 = vpack.c.b16 %v5494, %v5488
        %v5963 = vpack.c.b16 %v5495, %v5489
        %v5964 = vpack.c.b16 %v5496, %v5490
        %v5965 = vpack.c.b16 %v5497, %v5491
        %v5966 = vpack.c.b16 %v5504, %v5498
        %v5967 = vpack.c.b16 %v5505, %v5499
        %v5968 = vpack.c.b16 %v5506, %v5500
        %v5969 = vpack.c.b16 %v5507, %v5501
        %v5970 = vpack.c.b16 %v5508, %v5502
        %v5971 = vpack.c.b16 %v5509, %v5503
        %v5972 = vpack.c.b16 %v5516, %v5510
        %v5973 = vpack.c.b16 %v5517, %v5511
        %v5974 = vpack.c.b16 %v5518, %v5512
        %v5975 = vpack.c.b16 %v5519, %v5513
        %v5976 = vpack.c.b16 %v5520, %v5514
        %v5977 = vpack.c.b16 %v5521, %v5515
        %v5978 = vpack.c.b16 %v5528, %v5522
        %v5979 = vpack.c.b16 %v5529, %v5523
        %v5980 = vpack.c.b16 %v5530, %v5524
        %v5981 = vpack.c.b16 %v5531, %v5525
        %v5982 = vpack.c.b16 %v5532, %v5526
        %v5983 = vpack.c.b16 %v5533, %v5527
        %v5984 = vpack.c.b16 %v5540, %v5534
        %v5985 = vpack.c.b16 %v5541, %v5535
        %v5986 = vpack.c.b16 %v5542, %v5536
        %v5987 = vpack.c.b16 %v5543, %v5537
        %v5988 = vpack.c.b16 %v5544, %v5538
        %v5989 = vpack.c.b16 %v5545, %v5539
        %v5990 = vpack.c.b16 %v5552, %v5546
        %v5991 = vpack.c.b16 %v5553, %v5547
        %v5992 = vpack.c.b16 %v5554, %v5548
        %v5993 = vpack.c.b16 %v5555, %v5549
        %v5994 = vpack.c.b16 %v5556, %v5550
        %v5995 = vpack.c.b16 %v5557, %v5551
        %v5996 = vpack.c.b16 %v5564, %v5558
        %v5997 = vpack.c.b16 %v5565, %v5559
        %v5998 = vpack.c.b16 %v5566, %v5560
        %v5999 = vpack.c.b16 %v5567, %v5561
        %v6000 = vpack.c.b16 %v5568, %v5562
        %v6001 = vpack.c.b16 %v5569, %v5563
        %v6002 = vpack.c.b16 %v5576, %v5570
        %v6003 = vpack.c.b16 %v5577, %v5571
        %v6004 = vpack.c.b16 %v5578, %v5572
        %v6005 = vpack.c.b16 %v5579, %v5573
        %v6006 = vpack.c.b16 %v5580, %v5574
        %v6007 = vpack.c.b16 %v5581, %v5575
        %v6008 = vpack.c.b16 %v5588, %v5582
        %v6009 = vpack.c.b16 %v5589, %v5583
        %v6010 = vpack.c.b16 %v5590, %v5584
        %v6011 = vpack.c.b16 %v5591, %v5585
        %v6012 = vpack.c.b16 %v5592, %v5586
        %v6013 = vpack.c.b16 %v5593, %v5587
        %v6014 = vpack.c.b16 %v5600, %v5594
        %v6015 = vpack.c.b16 %v5601, %v5595
        %v6016 = vpack.c.b16 %v5602, %v5596
        %v6017 = vpack.c.b16 %v5603, %v5597
        %v6018 = vpack.c.b16 %v5604, %v5598
        %v6019 = vpack.c.b16 %v5605, %v5599
        %v6020 = vpack.c.b16 %v5612, %v5606
        %v6021 = vpack.c.b16 %v5613, %v5607
        %v6022 = vpack.c.b16 %v5614, %v5608
        %v6023 = vpack.c.b16 %v5615, %v5609
        %v6024 = vpack.c.b16 %v5616, %v5610
        %v6025 = vpack.c.b16 %v5617, %v5611
        %v6026 = vpack.c.b16 %v5624, %v5618
        %v6027 = vpack.c.b16 %v5625, %v5619
        %v6028 = vpack.c.b16 %v5626, %v5620
        %v6029 = vpack.c.b16 %v5627, %v5621
        %v6030 = vpack.c.b16 %v5628, %v5622
        %v6031 = vpack.c.b16 %v5629, %v5623
        %v6032 = vpack.c.b16 %v5636, %v5630
        %v6033 = vpack.c.b16 %v5637, %v5631
        %v6034 = vpack.c.b16 %v5638, %v5632
        %v6035 = vpack.c.b16 %v5639, %v5633
        %v6036 = vpack.c.b16 %v5640, %v5634
        %v6037 = vpack.c.b16 %v5641, %v5635
        %v6038 = vpack.c.b16 %v5648, %v5642
        %v6039 = vpack.c.b16 %v5649, %v5643
        %v6040 = vpack.c.b16 %v5650, %v5644
        %v6041 = vpack.c.b16 %v5651, %v5645
        %v6042 = vpack.c.b16 %v5652, %v5646
        %v6043 = vpack.c.b16 %v5653, %v5647
        %v6044 = vpack.c.b16 %v5660, %v5654
        %v6045 = vpack.c.b16 %v5661, %v5655
        %v6046 = vpack.c.b16 %v5662, %v5656
        %v6047 = vpack.c.b16 %v5663, %v5657
        %v6048 = vpack.c.b16 %v5664, %v5658
        %v6049 = vpack.c.b16 %v5665, %v5659
        %v6050 = vpack.c.b16 %v5672, %v5666
        %v6051 = vpack.c.b16 %v5673, %v5667
        %v6052 = vpack.c.b16 %v5674, %v5668
        %v6053 = vpack.c.b16 %v5675, %v5669
        %v6054 = vpack.c.b16 %v5676, %v5670
        %v6055 = vpack.c.b16 %v5677, %v5671
        %v6056 = vpack.c.b16 %v5684, %v5678
        %v6057 = vpack.c.b16 %v5685, %v5679
        %v6058 = vpack.c.b16 %v5686, %v5680
        %v6059 = vpack.c.b16 %v5687, %v5681
        %v6060 = vpack.c.b16 %v5688, %v5682
        %v6061 = vpack.c.b16 %v5689, %v5683
        %v6062 = vpack.c.b16 %v5696, %v5690
        %v6063 = vpack.c.b16 %v5697, %v5691
        %v6064 = vpack.c.b16 %v5698, %v5692
        %v6065 = vpack.c.b16 %v5699, %v5693
        %v6066 = vpack.c.b16 %v5700, %v5694
        %v6067 = vpack.c.b16 %v5701, %v5695
        %v6068 = vpack.c.b16 %v5708, %v5702
        %v6069 = vpack.c.b16 %v5709, %v5703
        %v6070 = vpack.c.b16 %v5710, %v5704
        %v6071 = vpack.c.b16 %v5711, %v5705
        %v6072 = vpack.c.b16 %v5712, %v5706
        %v6073 = vpack.c.b16 %v5713, %v5707
        %v6074 = vpack.c.b16 %v5720, %v5714
        %v6075 = vpack.c.b16 %v5721, %v5715
        %v6076 = vpack.c.b16 %v5722, %v5716
        %v6077 = vpack.c.b16 %v5723, %v5717
        %v6078 = vpack.c.b16 %v5724, %v5718
        %v6079 = vpack.c.b16 %v5725, %v5719
        %v6080 = vpack.c.b16 %v5732, %v5726
        %v6081 = vpack.c.b16 %v5733, %v5727
        %v6082 = vpack.c.b16 %v5734, %v5728
        %v6083 = vpack.c.b16 %v5735, %v5729
        %v6084 = vpack.c.b16 %v5736, %v5730
        %v6085 = vpack.c.b16 %v5737, %v5731
        %v6086 = vpack.c.b16 %v5744, %v5738
        %v6087 = vpack.c.b16 %v5745, %v5739
        %v6088 = vpack.c.b16 %v5746, %v5740
        %v6089 = vpack.c.b16 %v5747, %v5741
        %v6090 = vpack.c.b16 %v5748, %v5742
        %v6091 = vpack.c.b16 %v5749, %v5743
        %v6092 = vpack.c.b16 %v5756, %v5750
        %v6093 = vpack.c.b16 %v5757, %v5751
        %v6094 = vpack.c.b16 %v5758, %v5752
        %v6095 = vpack.c.b16 %v5759, %v5753
        %v6096 = vpack.c.b16 %v5760, %v5754
        %v6097 = vpack.c.b16 %v5761, %v5755
        %v6098 = vpack.c.b16 %v5768, %v5762
        %v6099 = vpack.c.b16 %v5769, %v5763
        %v6100 = vpack.c.b16 %v5770, %v5764
        %v6101 = vpack.c.b16 %v5771, %v5765
        %v6102 = vpack.c.b16 %v5772, %v5766
        %v6103 = vpack.c.b16 %v5773, %v5767
        %v6104 = vpack.c.b16 %v5780, %v5774
        %v6105 = vpack.c.b16 %v5781, %v5775
        %v6106 = vpack.c.b16 %v5782, %v5776
        %v6107 = vpack.c.b16 %v5783, %v5777
        %v6108 = vpack.c.b16 %v5784, %v5778
        %v6109 = vpack.c.b16 %v5785, %v5779
        %v6110 = vpack.c.b16 %v5792, %v5786
        %v6111 = vpack.c.b16 %v5793, %v5787
        %v6112 = vpack.c.b16 %v5794, %v5788
        %v6113 = vpack.c.b16 %v5795, %v5789
        %v6114 = vpack.c.b16 %v5796, %v5790
        %v6115 = vpack.c.b16 %v5797, %v5791
        %v6116 = vpack.c.b16 %v5804, %v5798
        %v6117 = vpack.c.b16 %v5805, %v5799
        %v6118 = vpack.c.b16 %v5806, %v5800
        %v6119 = vpack.c.b16 %v5807, %v5801
        %v6120 = vpack.c.b16 %v5808, %v5802
        %v6121 = vpack.c.b16 %v5809, %v5803
        %v6122 = vpack.c.b16 %v5816, %v5810
        %v6123 = vpack.c.b16 %v5817, %v5811
        %v6124 = vpack.c.b16 %v5818, %v5812
        %v6125 = vpack.c.b16 %v5819, %v5813
        %v6126 = vpack.c.b16 %v5820, %v5814
        %v6127 = vpack.c.b16 %v5821, %v5815
        %v6128 = vpack.c.b16 %v5828, %v5822
        %v6129 = vpack.c.b16 %v5829, %v5823
        %v6130 = vpack.c.b16 %v5830, %v5824
        %v6131 = vpack.c.b16 %v5831, %v5825
        %v6132 = vpack.c.b16 %v5832, %v5826
        %v6133 = vpack.c.b16 %v5833, %v5827
        %v6134 = vpack.c.b16 %v5840, %v5834
        %v6135 = vpack.c.b16 %v5841, %v5835
        %v6136 = vpack.c.b16 %v5842, %v5836
        %v6137 = vpack.c.b16 %v5843, %v5837
        %v6138 = vpack.c.b16 %v5844, %v5838
        %v6139 = vpack.c.b16 %v5845, %v5839
        %v6140 = vpack.c.b16 %v5852, %v5846
        %v6141 = vpack.c.b16 %v5853, %v5847
        %v6142 = vpack.c.b16 %v5854, %v5848
        %v6143 = vpack.c.b16 %v5855, %v5849
        %v6144 = vpack.c.b16 %v5856, %v5850
        %v6145 = vpack.c.b16 %v5857, %v5851
        %6434 = vmatprep.subr.bf16.mxu0 %v5901
        %6435 = vmatpush1.bf16.msra.mxu0 %v5900
        %6436 = vmatprep.subr.bf16.mxu0 %v5895
        %6437 = vmatpush1.bf16.msra.mxu0 %v5894
        %6438 = vmatprep.subr.bf16.mxu0 %v5889
        %6439 = vmatpush1.bf16.msra.mxu0 %v5888
        %6440 = vmatprep.subr.bf16.mxu0 %v5883
        %6441 = vmatpush1.bf16.msra.mxu0 %v5882
        %6442 = vmatprep.subr.bf16.mxu0 %v5877
        %6443 = vmatpush1.bf16.msra.mxu0 %v5876
        %6444 = vmatprep.subr.bf16.mxu0 %v5871
        %6445 = vmatpush1.bf16.msra.mxu0 %v5870
        %6446 = vmatprep.subr.bf16.mxu0 %v5865
        %6447 = vmatpush1.bf16.msra.mxu0 %v5864
        %6448 = vmatprep.subr.bf16.mxu0 %v5859
        %6449 = vmatpush1.bf16.msra.mxu0 %v5858
        %6450 = vmatprep.subr.bf16.mxu0 %v5949
        %6451 = vmatpush2.bf16.msra.mxu0 %v5948
        %6452 = vmatprep.subr.bf16.mxu0 %v5943
        %6453 = vmatpush2.bf16.msra.mxu0 %v5942
        %6454 = vmatprep.subr.bf16.mxu0 %v5937
        %6455 = vmatpush2.bf16.msra.mxu0 %v5936
        %6456 = vmatprep.subr.bf16.mxu0 %v5931
        %6457 = vmatpush2.bf16.msra.mxu0 %v5930
        %6458 = vmatprep.subr.bf16.mxu0 %v5925
        %6459 = vmatpush2.bf16.msra.mxu0 %v5924
        %6460 = vmatprep.subr.bf16.mxu0 %v5919
        %6461 = vmatpush2.bf16.msra.mxu0 %v5918
        %6462 = vmatprep.subr.bf16.mxu0 %v5913
        %6463 = vmatpush2.bf16.msra.mxu0 %v5912
        %6464 = vmatprep.subr.bf16.mxu0 %v5907
        %6465 = vmatpush2.bf16.msra.mxu0 %v5906
        %6466 = vmatprep.mubr.bf16.mxu0 %v4670
        %6467 = vmatmul.mubr.bf16.gmra.mxu0 %v4669
        %v6468 = vpop.f32.mrf.mxu0
        %v6469 = vadd.f32 %v4967, %v6468
        %v6470 = vpop.f32.mrf.mxu0
        %v6471 = vadd.f32 %v4971, %v6470
        %v6472 = vpop.f32.mrf.mxu0
        %v6473 = vpop.f32.mrf.mxu0
        %6474 = vdwg.mxu0
        %6475 = vmatprep.subr.bf16.mxu0 %v5997
        %6476 = vmatpush1.bf16.msra.mxu0 %v5996
        %6477 = vmatprep.subr.bf16.mxu0 %v5991
        %6478 = vmatpush1.bf16.msra.mxu0 %v5990
        %6479 = vmatprep.subr.bf16.mxu0 %v5985
        %6480 = vmatpush1.bf16.msra.mxu0 %v5984
        %6481 = vmatprep.subr.bf16.mxu0 %v5979
        %6482 = vmatpush1.bf16.msra.mxu0 %v5978
        %6483 = vmatprep.subr.bf16.mxu0 %v5973
        %6484 = vmatpush1.bf16.msra.mxu0 %v5972
        %6485 = vmatprep.subr.bf16.mxu0 %v5967
        %6486 = vmatpush1.bf16.msra.mxu0 %v5966
        %6487 = vmatprep.subr.bf16.mxu0 %v5961
        %6488 = vmatpush1.bf16.msra.mxu0 %v5960
        %6489 = vmatprep.subr.bf16.mxu0 %v5955
        %6490 = vmatpush1.bf16.msra.mxu0 %v5954
        %6491 = vmatprep.subr.bf16.mxu0 %v6045
        %6492 = vmatpush2.bf16.msra.mxu0 %v6044
        %6493 = vmatprep.subr.bf16.mxu0 %v6039
        %6494 = vmatpush2.bf16.msra.mxu0 %v6038
        %6495 = vmatprep.subr.bf16.mxu0 %v6033
        %6496 = vmatpush2.bf16.msra.mxu0 %v6032
        %6497 = vmatprep.subr.bf16.mxu0 %v6027
        %6498 = vmatpush2.bf16.msra.mxu0 %v6026
        %6499 = vmatprep.subr.bf16.mxu0 %v6021
        %6500 = vmatpush2.bf16.msra.mxu0 %v6020
        %6501 = vmatprep.subr.bf16.mxu0 %v6015
        %6502 = vmatpush2.bf16.msra.mxu0 %v6014
        %6503 = vmatprep.subr.bf16.mxu0 %v6009
        %6504 = vmatpush2.bf16.msra.mxu0 %v6008
        %6505 = vmatprep.subr.bf16.mxu0 %v6003
        %6506 = vmatpush2.bf16.msra.mxu0 %v6002
        %6507 = vmatprep.mubr.bf16.mxu0 %v4672
        %6508 = vmatmul.mubr.bf16.gmra.mxu0 %v4671
        %v6509 = vpop.f32.mrf.mxu0
        %v6510 = vadd.f32 %v6469, %v6509
        %v6511 = vpop.f32.mrf.mxu0
        %v6512 = vadd.f32 %v6471, %v6511
        %v6513 = vpop.f32.mrf.mxu0
        %v6514 = vpop.f32.mrf.mxu0
        %6515 = vdwg.mxu0
        %6516 = vmatprep.subr.bf16.mxu0 %v6093
        %6517 = vmatpush1.bf16.msra.mxu0 %v6092
        %6518 = vmatprep.subr.bf16.mxu0 %v6087
        %6519 = vmatpush1.bf16.msra.mxu0 %v6086
        %6520 = vmatprep.subr.bf16.mxu0 %v6081
        %6521 = vmatpush1.bf16.msra.mxu0 %v6080
        %6522 = vmatprep.subr.bf16.mxu0 %v6075
        %6523 = vmatpush1.bf16.msra.mxu0 %v6074
        %6524 = vmatprep.subr.bf16.mxu0 %v6069
        %6525 = vmatpush1.bf16.msra.mxu0 %v6068
        %6526 = vmatprep.subr.bf16.mxu0 %v6063
        %6527 = vmatpush1.bf16.msra.mxu0 %v6062
        %6528 = vmatprep.subr.bf16.mxu0 %v6057
        %6529 = vmatpush1.bf16.msra.mxu0 %v6056
        %6530 = vmatprep.subr.bf16.mxu0 %v6051
        %6531 = vmatpush1.bf16.msra.mxu0 %v6050
        %6532 = vmatprep.subr.bf16.mxu0 %v6141
        %6533 = vmatpush2.bf16.msra.mxu0 %v6140
        %6534 = vmatprep.subr.bf16.mxu0 %v6135
        %6535 = vmatpush2.bf16.msra.mxu0 %v6134
        %6536 = vmatprep.subr.bf16.mxu0 %v6129
        %6537 = vmatpush2.bf16.msra.mxu0 %v6128
        %6538 = vmatprep.subr.bf16.mxu0 %v6123
        %6539 = vmatpush2.bf16.msra.mxu0 %v6122
        %6540 = vmatprep.subr.bf16.mxu0 %v6117
        %6541 = vmatpush2.bf16.msra.mxu0 %v6116
        %6542 = vmatprep.subr.bf16.mxu0 %v6111
        %6543 = vmatpush2.bf16.msra.mxu0 %v6110
        %6544 = vmatprep.subr.bf16.mxu0 %v6105
        %6545 = vmatpush2.bf16.msra.mxu0 %v6104
        %6546 = vmatprep.subr.bf16.mxu0 %v6099
        %6547 = vmatpush2.bf16.msra.mxu0 %v6098
        %6548 = vmatprep.mubr.bf16.mxu0 %v4674
        %6549 = vmatmul.mubr.bf16.gmra.mxu0 %v4673
        %v6550 = vpop.f32.mrf.mxu0
        %v6551 = vadd.f32 %v6510, %v6550
        %v6552 = vpop.f32.mrf.mxu0
        %v6553 = vadd.f32 %v6512, %v6552
        %v6554 = vpop.f32.mrf.mxu0
        %v6555 = vpop.f32.mrf.mxu0
        %6556 = vdwg.mxu0
        %6557 = vmatprep.subr.bf16.mxu0 %v5903
        %6558 = vmatpush1.bf16.msra.mxu0 %v5902
        %6559 = vmatprep.subr.bf16.mxu0 %v5897
        %6560 = vmatpush1.bf16.msra.mxu0 %v5896
        %6561 = vmatprep.subr.bf16.mxu0 %v5891
        %6562 = vmatpush1.bf16.msra.mxu0 %v5890
        %6563 = vmatprep.subr.bf16.mxu0 %v5885
        %6564 = vmatpush1.bf16.msra.mxu0 %v5884
        %6565 = vmatprep.subr.bf16.mxu0 %v5879
        %6566 = vmatpush1.bf16.msra.mxu0 %v5878
        %6567 = vmatprep.subr.bf16.mxu0 %v5873
        %6568 = vmatpush1.bf16.msra.mxu0 %v5872
        %6569 = vmatprep.subr.bf16.mxu0 %v5867
        %6570 = vmatpush1.bf16.msra.mxu0 %v5866
        %6571 = vmatprep.subr.bf16.mxu0 %v5861
        %6572 = vmatpush1.bf16.msra.mxu0 %v5860
        %6573 = vmatprep.subr.bf16.mxu0 %v5951
        %6574 = vmatpush2.bf16.msra.mxu0 %v5950
        %6575 = vmatprep.subr.bf16.mxu0 %v5945
        %6576 = vmatpush2.bf16.msra.mxu0 %v5944
        %6577 = vmatprep.subr.bf16.mxu0 %v5939
        %6578 = vmatpush2.bf16.msra.mxu0 %v5938
        %6579 = vmatprep.subr.bf16.mxu0 %v5933
        %6580 = vmatpush2.bf16.msra.mxu0 %v5932
        %6581 = vmatprep.subr.bf16.mxu0 %v5927
        %6582 = vmatpush2.bf16.msra.mxu0 %v5926
        %6583 = vmatprep.subr.bf16.mxu0 %v5921
        %6584 = vmatpush2.bf16.msra.mxu0 %v5920
        %6585 = vmatprep.subr.bf16.mxu0 %v5915
        %6586 = vmatpush2.bf16.msra.mxu0 %v5914
        %6587 = vmatprep.subr.bf16.mxu0 %v5909
        %6588 = vmatpush2.bf16.msra.mxu0 %v5908
        %6589 = vmatprep.mubr.bf16.mxu0 %v4670
        %6590 = vmatmul.mubr.bf16.gmra.mxu0 %v4669
        %v6591 = vpop.f32.mrf.mxu0
        %v6592 = vadd.f32 %v4975, %v6591
        %v6593 = vpop.f32.mrf.mxu0
        %v6594 = vadd.f32 %v4979, %v6593
        %v6595 = vpop.f32.mrf.mxu0
        %v6596 = vpop.f32.mrf.mxu0
        %6597 = vdwg.mxu0
        %6598 = vmatprep.subr.bf16.mxu0 %v5999
        %6599 = vmatpush1.bf16.msra.mxu0 %v5998
        %6600 = vmatprep.subr.bf16.mxu0 %v5993
        %6601 = vmatpush1.bf16.msra.mxu0 %v5992
        %6602 = vmatprep.subr.bf16.mxu0 %v5987
        %6603 = vmatpush1.bf16.msra.mxu0 %v5986
        %6604 = vmatprep.subr.bf16.mxu0 %v5981
        %6605 = vmatpush1.bf16.msra.mxu0 %v5980
        %6606 = vmatprep.subr.bf16.mxu0 %v5975
        %6607 = vmatpush1.bf16.msra.mxu0 %v5974
        %6608 = vmatprep.subr.bf16.mxu0 %v5969
        %6609 = vmatpush1.bf16.msra.mxu0 %v5968
        %6610 = vmatprep.subr.bf16.mxu0 %v5963
        %6611 = vmatpush1.bf16.msra.mxu0 %v5962
        %6612 = vmatprep.subr.bf16.mxu0 %v5957
        %6613 = vmatpush1.bf16.msra.mxu0 %v5956
        %6614 = vmatprep.subr.bf16.mxu0 %v6047
        %6615 = vmatpush2.bf16.msra.mxu0 %v6046
        %6616 = vmatprep.subr.bf16.mxu0 %v6041
        %6617 = vmatpush2.bf16.msra.mxu0 %v6040
        %6618 = vmatprep.subr.bf16.mxu0 %v6035
        %6619 = vmatpush2.bf16.msra.mxu0 %v6034
        %6620 = vmatprep.subr.bf16.mxu0 %v6029
        %6621 = vmatpush2.bf16.msra.mxu0 %v6028
        %6622 = vmatprep.subr.bf16.mxu0 %v6023
        %6623 = vmatpush2.bf16.msra.mxu0 %v6022
        %6624 = vmatprep.subr.bf16.mxu0 %v6017
        %6625 = vmatpush2.bf16.msra.mxu0 %v6016
        %6626 = vmatprep.subr.bf16.mxu0 %v6011
        %6627 = vmatpush2.bf16.msra.mxu0 %v6010
        %6628 = vmatprep.subr.bf16.mxu0 %v6005
        %6629 = vmatpush2.bf16.msra.mxu0 %v6004
        %6630 = vmatprep.mubr.bf16.mxu0 %v4672
        %6631 = vmatmul.mubr.bf16.gmra.mxu0 %v4671
        %v6632 = vpop.f32.mrf.mxu0
        %v6633 = vadd.f32 %v6592, %v6632
        %v6634 = vpop.f32.mrf.mxu0
        %v6635 = vadd.f32 %v6594, %v6634
        %v6636 = vpop.f32.mrf.mxu0
        %v6637 = vpop.f32.mrf.mxu0
        %6638 = vdwg.mxu0
        %6639 = vmatprep.subr.bf16.mxu0 %v6095
        %6640 = vmatpush1.bf16.msra.mxu0 %v6094
        %6641 = vmatprep.subr.bf16.mxu0 %v6089
        %6642 = vmatpush1.bf16.msra.mxu0 %v6088
        %6643 = vmatprep.subr.bf16.mxu0 %v6083
        %6644 = vmatpush1.bf16.msra.mxu0 %v6082
        %6645 = vmatprep.subr.bf16.mxu0 %v6077
        %6646 = vmatpush1.bf16.msra.mxu0 %v6076
        %6647 = vmatprep.subr.bf16.mxu0 %v6071
        %6648 = vmatpush1.bf16.msra.mxu0 %v6070
        %6649 = vmatprep.subr.bf16.mxu0 %v6065
        %6650 = vmatpush1.bf16.msra.mxu0 %v6064
        %6651 = vmatprep.subr.bf16.mxu0 %v6059
        %6652 = vmatpush1.bf16.msra.mxu0 %v6058
        %6653 = vmatprep.subr.bf16.mxu0 %v6053
        %6654 = vmatpush1.bf16.msra.mxu0 %v6052
        %6655 = vmatprep.subr.bf16.mxu0 %v6143
        %6656 = vmatpush2.bf16.msra.mxu0 %v6142
        %6657 = vmatprep.subr.bf16.mxu0 %v6137
        %6658 = vmatpush2.bf16.msra.mxu0 %v6136
        %6659 = vmatprep.subr.bf16.mxu0 %v6131
        %6660 = vmatpush2.bf16.msra.mxu0 %v6130
        %6661 = vmatprep.subr.bf16.mxu0 %v6125
        %6662 = vmatpush2.bf16.msra.mxu0 %v6124
        %6663 = vmatprep.subr.bf16.mxu0 %v6119
        %6664 = vmatpush2.bf16.msra.mxu0 %v6118
        %6665 = vmatprep.subr.bf16.mxu0 %v6113
        %6666 = vmatpush2.bf16.msra.mxu0 %v6112
        %6667 = vmatprep.subr.bf16.mxu0 %v6107
        %6668 = vmatpush2.bf16.msra.mxu0 %v6106
        %6669 = vmatprep.subr.bf16.mxu0 %v6101
        %6670 = vmatpush2.bf16.msra.mxu0 %v6100
        %6671 = vmatprep.mubr.bf16.mxu0 %v4674
        %6672 = vmatmul.mubr.bf16.gmra.mxu0 %v4673
        %v6673 = vpop.f32.mrf.mxu0
        %v6674 = vadd.f32 %v6633, %v6673
        %v6675 = vpop.f32.mrf.mxu0
        %v6676 = vadd.f32 %v6635, %v6675
        %v6677 = vpop.f32.mrf.mxu0
        %v6678 = vpop.f32.mrf.mxu0
        %6679 = vdwg.mxu0
        %6680 = vmatprep.subr.bf16.mxu0 %v5905
        %6681 = vmatpush1.bf16.msra.mxu0 %v5904
        %6682 = vmatprep.subr.bf16.mxu0 %v5899
        %6683 = vmatpush1.bf16.msra.mxu0 %v5898
        %6684 = vmatprep.subr.bf16.mxu0 %v5893
        %6685 = vmatpush1.bf16.msra.mxu0 %v5892
        %6686 = vmatprep.subr.bf16.mxu0 %v5887
        %6687 = vmatpush1.bf16.msra.mxu0 %v5886
        %6688 = vmatprep.subr.bf16.mxu0 %v5881
        %6689 = vmatpush1.bf16.msra.mxu0 %v5880
        %6690 = vmatprep.subr.bf16.mxu0 %v5875
        %6691 = vmatpush1.bf16.msra.mxu0 %v5874
        %6692 = vmatprep.subr.bf16.mxu0 %v5869
        %6693 = vmatpush1.bf16.msra.mxu0 %v5868
        %6694 = vmatprep.subr.bf16.mxu0 %v5863
        %6695 = vmatpush1.bf16.msra.mxu0 %v5862
        %6696 = vmatprep.subr.bf16.mxu0 %v5953
        %6697 = vmatpush2.bf16.msra.mxu0 %v5952
        %6698 = vmatprep.subr.bf16.mxu0 %v5947
        %6699 = vmatpush2.bf16.msra.mxu0 %v5946
        %6700 = vmatprep.subr.bf16.mxu0 %v5941
        %6701 = vmatpush2.bf16.msra.mxu0 %v5940
        %6702 = vmatprep.subr.bf16.mxu0 %v5935
        %6703 = vmatpush2.bf16.msra.mxu0 %v5934
        %6704 = vmatprep.subr.bf16.mxu0 %v5929
        %6705 = vmatpush2.bf16.msra.mxu0 %v5928
        %6706 = vmatprep.subr.bf16.mxu0 %v5923
        %6707 = vmatpush2.bf16.msra.mxu0 %v5922
        %6708 = vmatprep.subr.bf16.mxu0 %v5917
        %6709 = vmatpush2.bf16.msra.mxu0 %v5916
        %6710 = vmatprep.subr.bf16.mxu0 %v5911
        %6711 = vmatpush2.bf16.msra.mxu0 %v5910
        %6712 = vmatprep.mubr.bf16.mxu0 %v4670
        %6713 = vmatmul.mubr.bf16.gmra.mxu0 %v4669
        %v6714 = vpop.f32.mrf.mxu0
        %v6715 = vadd.f32 %v4983, %v6714
        %v6716 = vpop.f32.mrf.mxu0
        %v6717 = vadd.f32 %v4987, %v6716
        %v6718 = vpop.f32.mrf.mxu0
        %v6719 = vpop.f32.mrf.mxu0
        %6720 = vdwg.mxu0
        %6721 = vmatprep.subr.bf16.mxu0 %v6001
        %6722 = vmatpush1.bf16.msra.mxu0 %v6000
        %6723 = vmatprep.subr.bf16.mxu0 %v5995
        %6724 = vmatpush1.bf16.msra.mxu0 %v5994
        %6725 = vmatprep.subr.bf16.mxu0 %v5989
        %6726 = vmatpush1.bf16.msra.mxu0 %v5988
        %6727 = vmatprep.subr.bf16.mxu0 %v5983
        %6728 = vmatpush1.bf16.msra.mxu0 %v5982
        %6729 = vmatprep.subr.bf16.mxu0 %v5977
        %6730 = vmatpush1.bf16.msra.mxu0 %v5976
        %6731 = vmatprep.subr.bf16.mxu0 %v5971
        %6732 = vmatpush1.bf16.msra.mxu0 %v5970
        %6733 = vmatprep.subr.bf16.mxu0 %v5965
        %6734 = vmatpush1.bf16.msra.mxu0 %v5964
        %6735 = vmatprep.subr.bf16.mxu0 %v5959
        %6736 = vmatpush1.bf16.msra.mxu0 %v5958
        %6737 = vmatprep.subr.bf16.mxu0 %v6049
        %6738 = vmatpush2.bf16.msra.mxu0 %v6048
        %6739 = vmatprep.subr.bf16.mxu0 %v6043
        %6740 = vmatpush2.bf16.msra.mxu0 %v6042
        %6741 = vmatprep.subr.bf16.mxu0 %v6037
        %6742 = vmatpush2.bf16.msra.mxu0 %v6036
        %6743 = vmatprep.subr.bf16.mxu0 %v6031
        %6744 = vmatpush2.bf16.msra.mxu0 %v6030
        %6745 = vmatprep.subr.bf16.mxu0 %v6025
        %6746 = vmatpush2.bf16.msra.mxu0 %v6024
        %6747 = vmatprep.subr.bf16.mxu0 %v6019
        %6748 = vmatpush2.bf16.msra.mxu0 %v6018
        %6749 = vmatprep.subr.bf16.mxu0 %v6013
        %6750 = vmatpush2.bf16.msra.mxu0 %v6012
        %6751 = vmatprep.subr.bf16.mxu0 %v6007
        %6752 = vmatpush2.bf16.msra.mxu0 %v6006
        %6753 = vmatprep.mubr.bf16.mxu0 %v4672
        %6754 = vmatmul.mubr.bf16.gmra.mxu0 %v4671
        %v6755 = vpop.f32.mrf.mxu0
        %v6756 = vadd.f32 %v6715, %v6755
        %v6757 = vpop.f32.mrf.mxu0
        %v6758 = vadd.f32 %v6717, %v6757
        %v6759 = vpop.f32.mrf.mxu0
        %v6760 = vpop.f32.mrf.mxu0
        %6761 = vdwg.mxu0
        %6762 = vmatprep.subr.bf16.mxu0 %v6097
        %6763 = vmatpush1.bf16.msra.mxu0 %v6096
        %6764 = vmatprep.subr.bf16.mxu0 %v6091
        %6765 = vmatpush1.bf16.msra.mxu0 %v6090
        %6766 = vmatprep.subr.bf16.mxu0 %v6085
        %6767 = vmatpush1.bf16.msra.mxu0 %v6084
        %6768 = vmatprep.subr.bf16.mxu0 %v6079
        %6769 = vmatpush1.bf16.msra.mxu0 %v6078
        %6770 = vmatprep.subr.bf16.mxu0 %v6073
        %6771 = vmatpush1.bf16.msra.mxu0 %v6072
        %6772 = vmatprep.subr.bf16.mxu0 %v6067
        %6773 = vmatpush1.bf16.msra.mxu0 %v6066
        %6774 = vmatprep.subr.bf16.mxu0 %v6061
        %6775 = vmatpush1.bf16.msra.mxu0 %v6060
        %6776 = vmatprep.subr.bf16.mxu0 %v6055
        %6777 = vmatpush1.bf16.msra.mxu0 %v6054
        %6778 = vmatprep.subr.bf16.mxu0 %v6145
        %6779 = vmatpush2.bf16.msra.mxu0 %v6144
        %6780 = vmatprep.subr.bf16.mxu0 %v6139
        %6781 = vmatpush2.bf16.msra.mxu0 %v6138
        %6782 = vmatprep.subr.bf16.mxu0 %v6133
        %6783 = vmatpush2.bf16.msra.mxu0 %v6132
        %6784 = vmatprep.subr.bf16.mxu0 %v6127
        %6785 = vmatpush2.bf16.msra.mxu0 %v6126
        %6786 = vmatprep.subr.bf16.mxu0 %v6121
        %6787 = vmatpush2.bf16.msra.mxu0 %v6120
        %6788 = vmatprep.subr.bf16.mxu0 %v6115
        %6789 = vmatpush2.bf16.msra.mxu0 %v6114
        %6790 = vmatprep.subr.bf16.mxu0 %v6109
        %6791 = vmatpush2.bf16.msra.mxu0 %v6108
        %6792 = vmatprep.subr.bf16.mxu0 %v6103
        %6793 = vmatpush2.bf16.msra.mxu0 %v6102
        %6794 = vmatprep.mubr.bf16.mxu0 %v4674
        %6795 = vmatmul.mubr.bf16.gmra.mxu0 %v4673
        %v6796 = vpop.f32.mrf.mxu0
        %v6797 = vadd.f32 %v6756, %v6796
        %v6798 = vpop.f32.mrf.mxu0
        %v6799 = vadd.f32 %v6758, %v6798
        %v6800 = vpop.f32.mrf.mxu0
        %v6801 = vpop.f32.mrf.mxu0
        %6802 = vdwg.mxu0
        %6803 = vst [vmem:[%s387] sm:$0xff] %v6551
        %6804 = vst [vmem:[%s387 + $0x8] sm:$0xff] %v6553
        %6805 = vst [vmem:[%s387 + $0x10] sm:$0xff] %v6674
        %6806 = vst [vmem:[%s387 + $0x18] sm:$0xff] %v6676
        %6807 = vst [vmem:[%s387 + $0x20] sm:$0xff] %v6797
        %6808 = vst [vmem:[%s387 + $0x28] sm:$0xff] %v6799
        %s6809 = sand.u32 %s178, 1
        %s6810 = scalar_lea.sflag [#allocation4], %s6809
        %s6811 = sand.u32 %s178, 1
        %s6812 = smul.addr %s6811, 48
        %s6813 = scalar_lea.vmem [#allocation11], %s6812
        // Predicated region
        $region61: #{tpu_custom_call.1} parent=39 // pred_check
          %p6814 = pneg %p188
        $region62: #{tpu_custom_call.1} parent=39 // pred_check_branch
          %6816 = sbr.rel (%p6814) target = $region64
        $region63: #{tpu_custom_call.1} parent=39 // pred_region
          %s6818 = ssub.s32 768, 768
          %6819 = vsyncadd %s6810, %s6818
          %s6820 = smul.addr %s31, 6
          %s6821 = smul.addr %s30, 6
          %s6822 = sadd.s32 %s6820, %s6821
          %s6823 = smul.addr %s6822, 128
          %s6824 = scalar_lea.hbm %s5, %s6823
          %s6826 = sshll.u32 %s6813, 4
          %s6827 = int_to_ptr.vmem [resolvable:$true] %s6826
          %6829 = dma.vmem_to_hbm [thread:$0]  %s6827, 768, %s6824, %s6810
        $region64: #{tpu_custom_call.1} parent=39 // pred_fallthru
          _
      $region40: #{tpu_custom_call.1} parent=5 // pred_fallthru
        _
      %p6830 = scmp.le.s32.totalorder 2, %s21
      // Predicated region
      $region65: #{tpu_custom_call.1} parent=5 // pred_check
        %p6831 = pneg %p6830
      $region66: #{tpu_custom_call.1} parent=5 // pred_check_branch
        %6833 = sbr.rel (%p6831) target = $region68
      $region67: #{tpu_custom_call.1} parent=5 // pred_region
        %s6834 = ssub.s32 %s21, 2
        // Predicated region
        $region69: #{tpu_custom_call.1} parent=67 // pred_check
          %p6835 = pneg %p194
        $region70: #{tpu_custom_call.1} parent=67 // pred_check_branch
          %6837 = sbr.rel (%p6835) target = $region72
        $region71: #{tpu_custom_call.1} parent=67 // pred_region
          %s6838 = sand.u32 %s179, 1
          %s6839 = scalar_lea.sflag [#allocation4], %s6838
          %s6840 = sand.u32 %s179, 1
          %s6841 = smul.addr %s6840, 48
          %s6842 = scalar_lea.vmem [#allocation11], %s6841
          %6843 = dma.done %s6839, 768
        $region72: #{tpu_custom_call.1} parent=67 // pred_fallthru
          _
      $region68: #{tpu_custom_call.1} parent=5 // pred_fallthru
        _
    $region6: #{tpu_custom_call.1} parent=1 // loop_footer
      %s25 = sadd.s32 1, %s21
    $region7: #{tpu_custom_call.1} parent=1 // loop_footer_branch
      %20 = sbr.rel target = $region3
    $region8: #{tpu_custom_call.1} parent=1 // loop_exit
      _
    %6844 = vsyncpa [#allocation3], 1
    %s6845 = scalar_lea.sflag [#allocation3], 1
    %6846 = vsyncpa %s6845, 1
    %6847 = vsyncpa [#allocation6], 1
    %s6848 = scalar_lea.sflag [#allocation6], 1
    %6849 = vsyncpa %s6848, 1
    %6850 = vsyncpa [#allocation9], 1
    %s6851 = scalar_lea.sflag [#allocation9], 1
    %6852 = vsyncpa %s6851, 1
    %6853 = vsyncpa [#allocation4], 1
    %s6854 = scalar_lea.sflag [#allocation4], 1
    %6855 = vsyncpa %s6854, 1

</llo_original>
